<compile_context>
chip_gen: v5e
topology: v5e:2x2
jax: 0.10.0
libtpu: 0.0.40
codegen_flags: <defaults>
</compile_context>

<pallas_src>
import functools

import jax
import jax.numpy as jnp
import numpy as np
from jax.experimental import pallas as pl
from jax.experimental.pallas import tpu as pltpu

VMEM_SPEC = pl.BlockSpec(memory_space=pltpu.MemorySpace.VMEM)


# ------------------------- host-side weight packing ------------------------ #

def _same_pad_left(k):
    # PyTorch padding='same' (stride=1, dilation=1): left pad = (k - 1) // 2
    return (k - 1) // 2


def _union_shifts(ks, cin):
    """Common tap grid (h-offsets) covering all branch kernels.  Padded with
    extra zero-weight taps so ntaps*cin is a multiple of 8 (keeps all sublane
    slices of the im2col scratch aligned)."""
    smin = min(-_same_pad_left(k) for k in ks)
    smax = max(k - 1 - _same_pad_left(k) for k in ks)
    shifts = list(range(smin, smax + 1))
    while (len(shifts) * cin) % 8 != 0:
        shifts.append(shifts[-1] + 1)          # zero-weight padding taps
    return tuple(shifts)


def _pack_branches(branches, cin, shifts):
    """branches: list of (w (k, cin, O), b (1, O)).
    Returns Wcat (sum_O, ntaps*cin) and bcat (sum_O, 1) so that a single matmul
    Wcat @ Xs reproduces all branch convs stacked along the channel axis."""
    n_taps = len(shifts)
    O_tot = sum(int(w.shape[2]) for w, _ in branches)
    Wcat = np.zeros((O_tot, n_taps * cin), np.float32)
    biases = []
    row = 0
    for (w, b) in branches:
        w = np.asarray(w)
        b = np.asarray(b)
        k, _, O = w.shape
        p = _same_pad_left(k)
        for dk in range(k):
            ti = shifts.index(dk - p)
            Wcat[row:row + O, ti * cin:(ti + 1) * cin] = w[dk].T   # (O, cin)
        biases.append(b.reshape(O, 1))
        row += O
    bcat = np.concatenate(biases, axis=0).astype(np.float32)
    return jnp.asarray(Wcat), jnp.asarray(bcat)


def pack_params(params, num_sensors, seq_length):
    """Pack torch-style per-layer weights into fused-kernel form (runs once)."""
    H, W = seq_length, num_sensors
    hidden = int(params["ms1"]["w1"].shape[2])
    F_N = int(params["conv1"]["w"].shape[2])

    def ms_pack(p, cin):
        ks = (p["w1"].shape[0], p["w2"].shape[0], p["w3"].shape[0])
        shifts = _union_shifts(ks, cin)
        Wcat, bcat = _pack_branches(
            [(p["w1"], p["b1"]), (p["w2"], p["b2"]), (p["w3"], p["b3"])],
            cin, shifts)
        return Wcat, bcat, shifts

    def conv_pack(p, cin):
        shifts = _union_shifts((p["w"].shape[0],), cin)
        Wp, bp = _pack_branches([(p["w"], p["b"])], cin, shifts)
        return Wp, bp, shifts

    packed = {}
    packed["ms1_w"], packed["ms1_b"], ms1_s = ms_pack(params["ms1"], 1)
    packed["ms2_w"], packed["ms2_b"], ms2_s = ms_pack(params["ms2"], hidden)
    packed["ms3_w"], packed["ms3_b"], ms3_s = ms_pack(params["ms3"], hidden)
    packed["c1_w"], packed["c1_b"], c1_s = conv_pack(params["conv1"], hidden)
    packed["c2_w"], packed["c2_b"], c2_s = conv_pack(params["conv2"], F_N)

    # fc (H*W -> 64) -> dropout(identity at inference) -> fc_out (64 -> 1),
    # algebraically fused: out = x @ (w1 @ w2) + (b1 @ w2 + b2).
    # Torch flatten index is d = h*W + w; our token order is m = w*H + h,
    # so permute the fused weight accordingly.
    fc = params["fc"]
    w1 = np.asarray(fc["w1"]); b1 = np.asarray(fc["b1"])
    w2 = np.asarray(fc["w2"]); b2 = np.asarray(fc["b2"])
    w_fused = (w1 @ w2).astype(np.float32)                     # (H*W, 1)
    b_fused = (b1 @ w2 + b2).astype(np.float32)                # (1, 1)
    w_perm = np.transpose(w_fused.reshape(H, W, 1), (1, 0, 2)).reshape(H * W, 1)
    packed["fc_w"] = jnp.asarray(w_perm)
    packed["fc_b"] = jnp.asarray(b_fused)

    meta = dict(H=H, W=W, hidden=hidden, F_N=F_N,
                ms1_shifts=ms1_s, ms2_shifts=ms2_s, ms3_shifts=ms3_s,
                c1_shifts=c1_s, c2_shifts=c2_s)
    return packed, meta


# ------------------------------ fused kernel -------------------------------- #

def _make_fused_kernel(meta, T):
    H = meta["H"]
    hid = meta["hidden"]
    F_N = meta["F_N"]

    def kernel(x0_ref, ms1_w, ms1_b, ms2_w, ms2_b, ms3_w, ms3_b,
               c1_w, c1_b, c2_w, c2_b, fc_w, fc_b,
               o_ref, xs_ref, act_ref):
        # h position of every token lane (token t = (b*W + w)*H + h)
        hpos = jax.lax.broadcasted_iota(jnp.int32, (1, T), 1) % H
        mask_cache = {}

        def tap_mask(s):
            # valid iff 0 <= h + s < H  ('same' zero-padding done via masking)
            if s not in mask_cache:
                mask_cache[s] = jnp.logical_and(hpos + s >= 0, hpos + s < H)
            return mask_cache[s]

        def build_xs(x_val, shifts, cin):
            """im2col: write tap-shifted copies of x (cin, T) into xs_ref."""
            for ti, s in enumerate(shifts):
                if s == 0:
                    xs_ref[ti * cin:(ti + 1) * cin, :] = x_val
                else:
                    # shifted[:, t] = x[:, t + s] (wrap-around lanes masked off)
                    shifted = pltpu.roll(x_val, shift=(-s) % T, axis=1)
                    xs_ref[ti * cin:(ti + 1) * cin, :] = jnp.where(
                        tap_mask(s), shifted, jnp.float32(0.0))
            return len(shifts) * cin

        def conv(K, w_ref, b_ref):
            # single MXU matmul: (O, K) x (K, T) -> (O, T)
            z = jax.lax.dot_general(
                w_ref[...], xs_ref[0:K, :],
                dimension_numbers=(((1,), (0,)), ((), ())),
                preferred_element_type=jnp.float32)
            return z + b_ref[...]

        def msblock(x_val, cin, shifts, w_ref, b_ref):
            K = build_xs(x_val, shifts, cin)
            z = conv(K, w_ref, b_ref)                # (3*hid, T), branches stacked
            branch_sum = (jnp.tanh(z[0:hid, :])
                          + jnp.tanh(z[hid:2 * hid, :])
                          + jnp.tanh(z[2 * hid:3 * hid, :]))
            return jnp.tanh(branch_sum)              # Model's outer tanh

        # three MSBlocks (activations stay in VMEM scratch)
        act_ref[...] = msblock(x0_ref[...], 1, meta["ms1_shifts"], ms1_w, ms1_b)
        act_ref[...] = msblock(act_ref[...], hid, meta["ms2_shifts"], ms2_w, ms2_b)
        act_ref[...] = msblock(act_ref[...], hid, meta["ms3_shifts"], ms3_w, ms3_b)

        # conv_1 + tanh
        K = build_xs(act_ref[...], meta["c1_shifts"], hid)
        h1 = jnp.tanh(conv(K, c1_w, c1_b))           # (F_N, T)

        # conv_2 + tanh
        K = build_xs(h1, meta["c2_shifts"], F_N)
        y = jnp.tanh(conv(K, c2_w, c2_b))            # (1, T)

        # fused fc -> dropout(identity) -> fc_out  (block-diagonal over batch)
        # TODO(synk): nn.Dropout(0.5) treated as identity (inference/eval mode).
        out = jnp.dot(y, fc_w[...], preferred_element_type=jnp.float32) + fc_b[...]
        o_ref[...] = out.astype(o_ref.dtype)

    return kernel


# ------------------------------- wrapper ------------------------------------ #

def model_forward(x_nchw, packed, meta):
    """x_nchw: (B, 1, seq_length, num_sensors) -> (B, 1)"""
    B = x_nchw.shape[0]
    H, W = meta["H"], meta["W"]
    hidden, F_N = meta["hidden"], meta["F_N"]
    T = B * W * H

    # (B, 1, H, W) -> (1, T): channels on sublanes, tokens on lanes,
    # token index t = (b*W + w)*H + h.
    x0 = jnp.transpose(x_nchw[:, 0], (0, 2, 1)).reshape(1, T)

    # block-diagonal fused fc weight: out[b] only sees tokens of batch b
    wbig = jnp.kron(jnp.eye(B, dtype=jnp.float32), packed["fc_w"])   # (T, B)

    k_max = max(len(meta["ms1_shifts"]) * 1,
                len(meta["ms2_shifts"]) * hidden,
                len(meta["ms3_shifts"]) * hidden,
                len(meta["c1_shifts"]) * hidden,
                len(meta["c2_shifts"]) * F_N)

    args = (x0,
            packed["ms1_w"], packed["ms1_b"],
            packed["ms2_w"], packed["ms2_b"],
            packed["ms3_w"], packed["ms3_b"],
            packed["c1_w"], packed["c1_b"],
            packed["c2_w"], packed["c2_b"],
            wbig, packed["fc_b"])

    out = pl.pallas_call(
        _make_fused_kernel(meta, T),
        out_shape=jax.ShapeDtypeStruct((1, B), jnp.float32),
        in_specs=[VMEM_SPEC] * len(args),
        out_specs=VMEM_SPEC,
        scratch_shapes=[
            pltpu.VMEM((k_max, T), jnp.float32),   # im2col tap stack
            pltpu.VMEM((hidden, T), jnp.float32),  # current activation (C, T)
        ],
    )(*args)
    return out.reshape(B, 1)


# --------------------------- pure-JAX reference ------------------------------ #

def reference_forward(x_nchw, params):
    """Direct translation of the PyTorch forward (dropout = identity)."""
    hp = jax.lax.Precision.HIGHEST

    def conv_same(x, w, b):
        # x: (B, Cin, H, W); w: (k, Cin, O); b: (1, O) -> (B, O, H, W)
        k = w.shape[0]
        p = (k - 1) // 2
        Hh = x.shape[2]
        xp = jnp.pad(x, ((0, 0), (0, 0), (p, k - 1 - p), (0, 0)))
        out = None
        for dk in range(k):
            t = jnp.einsum("bchw,co->bohw", xp[:, :, dk:dk + Hh, :], w[dk],
                           precision=hp)
            out = t if out is None else out + t
        return out + b.reshape(1, -1, 1, 1)

    def msblock(x, p):
        return (jnp.tanh(conv_same(x, p["w1"], p["b1"]))
                + jnp.tanh(conv_same(x, p["w2"], p["b2"]))
                + jnp.tanh(conv_same(x, p["w3"], p["b3"])))

    h = jnp.tanh(msblock(x_nchw, params["ms1"]))
    h = jnp.tanh(msblock(h, params["ms2"]))
    h = jnp.tanh(msblock(h, params["ms3"]))
    h = jnp.tanh(conv_same(h, params["conv1"]["w"], params["conv1"]["b"]))
    h = jnp.tanh(conv_same(h, params["conv2"]["w"], params["conv2"]["b"]))
    flat = h.reshape(h.shape[0], -1)
    fc = params["fc"]
    z = jnp.dot(flat, fc["w1"], precision=hp) + fc["b1"]
    # dropout(0.5) -> identity at inference
    return jnp.dot(z, fc["w2"], precision=hp) + fc["b2"]


# ----------------------------- parameter init -------------------------------- #

def _conv_params(key, k, cin, cout):
    kw, kb = jax.random.split(key)
    w = 0.1 * jax.random.normal(kw, (k, cin, cout), jnp.float32)
    b = 0.1 * jax.random.normal(kb, (1, cout), jnp.float32)
    return w, b


def init_params(key, num_sensors, seq_length, k1, k2, k3, hidden, F_N, F_L1, F_L2):
    keys = jax.random.split(key, 16)
    params = {}
    ki = iter(keys)

    def msblock(cin):
        w1, b1 = _conv_params(next(ki), k1, cin, hidden)
        w2, b2 = _conv_params(next(ki), k2, cin, hidden)
        w3, b3 = _conv_params(next(ki), k3, cin, hidden)
        return {"w1": w1, "b1": b1, "w2": w2, "b2": b2, "w3": w3, "b3": b3}

    params["ms1"] = msblock(1)
    params["ms2"] = msblock(hidden)
    params["ms3"] = msblock(hidden)

    w, b = _conv_params(next(ki), F_L1, hidden, F_N)
    params["conv1"] = {"w": w, "b": b}
    w, b = _conv_params(next(ki), F_L2, F_N, 1)
    params["conv2"] = {"w": w, "b": b}

    D = seq_length * num_sensors
    kf1, kf2, kf3, kf4 = jax.random.split(next(ki), 4)
    params["fc"] = {
        "w1": 0.1 * jax.random.normal(kf1, (D, 64), jnp.float32),
        "b1": 0.1 * jax.random.normal(kf2, (1, 64), jnp.float32),
        "w2": 0.1 * jax.random.normal(kf3, (64, 1), jnp.float32),
        "b2": 0.1 * jax.random.normal(kf4, (1, 1), jnp.float32),
    }
    return params


# --------------------------------- main --------------------------------------- #

if __name__ == "__main__":
    num_sensors = 16     # W
    seq_length = 16      # H
    k1, k2, k3 = 3, 5, 7
    hidden = 32
    F_N, F_L1, F_L2 = 8, 3, 3
    batch = 2

    key = jax.random.PRNGKey(0)
    kx, kp = jax.random.split(key)
    x = jax.random.normal(kx, (batch, 1, seq_length, num_sensors), jnp.float32)
    params = init_params(kp, num_sensors, seq_length, k1, k2, k3, hidden,
                         F_N, F_L1, F_L2)

    # one-time host-side weight packing (im2col weights, fused fc)
    packed, meta = pack_params(params, num_sensors, seq_length)

    fwd = jax.jit(functools.partial(model_forward, meta=meta))
    out = jax.block_until_ready(fwd(x, packed))
    assert out.shape == (batch, 1)

    # correctness vs. pure-JAX reference of the torch forward
    ref = jax.block_until_ready(jax.jit(reference_forward)(x, params))
    np.testing.assert_allclose(np.asarray(out), np.asarray(ref),
                               rtol=2e-2, atol=2e-2)

    print("KERNEL_OK")
</pallas_src>

<mosaic_0001>
module attributes {stable_mosaic.version = 11 : i64} {
  func.func @kernel(%arg0: memref<1x512xf32, #tpu.memory_space<vmem>>, %arg1: memref<96x8xf32, #tpu.memory_space<vmem>>, %arg2: memref<96x1xf32, #tpu.memory_space<vmem>>, %arg3: memref<96x224xf32, #tpu.memory_space<vmem>>, %arg4: memref<96x1xf32, #tpu.memory_space<vmem>>, %arg5: memref<96x224xf32, #tpu.memory_space<vmem>>, %arg6: memref<96x1xf32, #tpu.memory_space<vmem>>, %arg7: memref<8x96xf32, #tpu.memory_space<vmem>>, %arg8: memref<8x1xf32, #tpu.memory_space<vmem>>, %arg9: memref<1x24xf32, #tpu.memory_space<vmem>>, %arg10: memref<1x1xf32, #tpu.memory_space<vmem>>, %arg11: memref<512x2xf32, #tpu.memory_space<vmem>>, %arg12: memref<1x1xf32, #tpu.memory_space<vmem>>, %arg13: memref<1x2xf32, #tpu.memory_space<vmem>>, %arg14: memref<224x512xf32, #tpu.memory_space<vmem>>, %arg15: memref<32x512xf32, #tpu.memory_space<vmem>>) attributes {dimension_semantics = [], scalar_prefetch = 0 : i64, scratch_operands = 2 : i64, tpu.core_type = #tpu.core_type<tc>} {
    %0 = tpu.iota {dimensions = array<i32: 1>} : vector<1x512xi32>
    %c16_i32 = arith.constant 16 : i32
    %c0_i32 = arith.constant 0 : i32
    %1 = arith.cmpi eq, %c16_i32, %c0_i32 : i32
    %c1_i32 = arith.constant 1 : i32
    %2 = arith.select %1, %c1_i32, %c16_i32 : i32
    %3 = vector.broadcast %2 : i32 to vector<1x512xi32>
    %4 = arith.remsi %0, %3 : vector<1x512xi32>
    %c0_i32_0 = arith.constant 0 : i32
    %5 = vector.broadcast %c0_i32_0 : i32 to vector<1x512xi32>
    %6 = arith.cmpi ne, %4, %5 : vector<1x512xi32>
    %c0_i32_1 = arith.constant 0 : i32
    %7 = vector.broadcast %c0_i32_1 : i32 to vector<1x512xi32>
    %8 = arith.cmpi slt, %4, %7 : vector<1x512xi32>
    %c0_i32_2 = arith.constant 0 : i32
    %9 = arith.cmpi slt, %2, %c0_i32_2 : i32
    %10 = vector.broadcast %9 : i1 to vector<1x512xi1>
    %11 = vector.broadcast %10 : vector<1x512xi1> to vector<1x512xi1>
    %12 = arith.xori %8, %11 : vector<1x512xi1>
    %13 = arith.andi %12, %6 : vector<1x512xi1>
    %14 = vector.broadcast %2 : i32 to vector<1x512xi32>
    %15 = arith.addi %4, %14 : vector<1x512xi32>
    %16 = arith.select %13, %15, %4 : vector<1x512xi1>, vector<1x512xi32>
    %c0 = arith.constant 0 : index
    %c0_3 = arith.constant 0 : index
    %17 = vector.load %arg0[%c0, %c0_3] : memref<1x512xf32, #tpu.memory_space<vmem>>, vector<1x512xf32>
    %c3_i32 = arith.constant 3 : i32
    %18 = tpu.dynamic_rotate %17 by %c3_i32 dim 1 : vector<1x512xf32>, i32 -> vector<1x512xf32>
    %c-3_i32 = arith.constant -3 : i32
    %19 = vector.broadcast %c-3_i32 : i32 to vector<1x512xi32>
    %20 = arith.addi %16, %19 : vector<1x512xi32>
    %c0_i32_4 = arith.constant 0 : i32
    %21 = vector.broadcast %c0_i32_4 : i32 to vector<1x512xi32>
    %22 = arith.cmpi sge, %20, %21 : vector<1x512xi32>
    %c-3_i32_5 = arith.constant -3 : i32
    %23 = vector.broadcast %c-3_i32_5 : i32 to vector<1x512xi32>
    %24 = arith.addi %16, %23 : vector<1x512xi32>
    %c16_i32_6 = arith.constant 16 : i32
    %25 = vector.broadcast %c16_i32_6 : i32 to vector<1x512xi32>
    %26 = arith.cmpi slt, %24, %25 : vector<1x512xi32>
    %27 = arith.andi %22, %26 : vector<1x512xi1>
    %cst = arith.constant 0.000000e+00 : f32
    %28 = vector.broadcast %cst : f32 to vector<1x512xf32>
    %29 = arith.select %27, %18, %28 : vector<1x512xi1>, vector<1x512xf32>
    %c0_7 = arith.constant 0 : index
    %c0_8 = arith.constant 0 : index
    %30 = vector.load %arg14[%c0_7, %c0_8] : memref<224x512xf32, #tpu.memory_space<vmem>>, vector<1x512xf32>
    tpu.vector_store %arg14[%c0_7, %c0_8], %29 {strides = array<i32>} : memref<224x512xf32, #tpu.memory_space<vmem>>, vector<1x512xf32>,
    %c2_i32 = arith.constant 2 : i32
    %31 = tpu.dynamic_rotate %17 by %c2_i32 dim 1 : vector<1x512xf32>, i32 -> vector<1x512xf32>
    %c-2_i32 = arith.constant -2 : i32
    %32 = vector.broadcast %c-2_i32 : i32 to vector<1x512xi32>
    %33 = arith.addi %16, %32 : vector<1x512xi32>
    %c0_i32_9 = arith.constant 0 : i32
    %34 = vector.broadcast %c0_i32_9 : i32 to vector<1x512xi32>
    %35 = arith.cmpi sge, %33, %34 : vector<1x512xi32>
    %c-2_i32_10 = arith.constant -2 : i32
    %36 = vector.broadcast %c-2_i32_10 : i32 to vector<1x512xi32>
    %37 = arith.addi %16, %36 : vector<1x512xi32>
    %c16_i32_11 = arith.constant 16 : i32
    %38 = vector.broadcast %c16_i32_11 : i32 to vector<1x512xi32>
    %39 = arith.cmpi slt, %37, %38 : vector<1x512xi32>
    %40 = arith.andi %35, %39 : vector<1x512xi1>
    %cst_12 = arith.constant 0.000000e+00 : f32
    %41 = vector.broadcast %cst_12 : f32 to vector<1x512xf32>
    %42 = arith.select %40, %31, %41 : vector<1x512xi1>, vector<1x512xf32>
    %c1 = arith.constant 1 : index
    %c0_13 = arith.constant 0 : index
    %43 = vector.load %arg14[%c1, %c0_13] : memref<224x512xf32, #tpu.memory_space<vmem>>, vector<1x512xf32>
    tpu.vector_store %arg14[%c1, %c0_13], %42 {strides = array<i32>} : memref<224x512xf32, #tpu.memory_space<vmem>>, vector<1x512xf32>,
    %c1_i32_14 = arith.constant 1 : i32
    %44 = tpu.dynamic_rotate %17 by %c1_i32_14 dim 1 : vector<1x512xf32>, i32 -> vector<1x512xf32>
    %c-1_i32 = arith.constant -1 : i32
    %45 = vector.broadcast %c-1_i32 : i32 to vector<1x512xi32>
    %46 = arith.addi %16, %45 : vector<1x512xi32>
    %c0_i32_15 = arith.constant 0 : i32
    %47 = vector.broadcast %c0_i32_15 : i32 to vector<1x512xi32>
    %48 = arith.cmpi sge, %46, %47 : vector<1x512xi32>
    %c-1_i32_16 = arith.constant -1 : i32
    %49 = vector.broadcast %c-1_i32_16 : i32 to vector<1x512xi32>
    %50 = arith.addi %16, %49 : vector<1x512xi32>
    %c16_i32_17 = arith.constant 16 : i32
    %51 = vector.broadcast %c16_i32_17 : i32 to vector<1x512xi32>
    %52 = arith.cmpi slt, %50, %51 : vector<1x512xi32>
    %53 = arith.andi %48, %52 : vector<1x512xi1>
    %cst_18 = arith.constant 0.000000e+00 : f32
    %54 = vector.broadcast %cst_18 : f32 to vector<1x512xf32>
    %55 = arith.select %53, %44, %54 : vector<1x512xi1>, vector<1x512xf32>
    %c2 = arith.constant 2 : index
    %c0_19 = arith.constant 0 : index
    %56 = vector.load %arg14[%c2, %c0_19] : memref<224x512xf32, #tpu.memory_space<vmem>>, vector<1x512xf32>
    tpu.vector_store %arg14[%c2, %c0_19], %55 {strides = array<i32>} : memref<224x512xf32, #tpu.memory_space<vmem>>, vector<1x512xf32>,
    %c3 = arith.constant 3 : index
    %c0_20 = arith.constant 0 : index
    %57 = vector.load %arg14[%c3, %c0_20] : memref<224x512xf32, #tpu.memory_space<vmem>>, vector<1x512xf32>
    tpu.vector_store %arg14[%c3, %c0_20], %17 {strides = array<i32>} : memref<224x512xf32, #tpu.memory_space<vmem>>, vector<1x512xf32>,
    %c511_i32 = arith.constant 511 : i32
    %58 = tpu.dynamic_rotate %17 by %c511_i32 dim 1 : vector<1x512xf32>, i32 -> vector<1x512xf32>
    %c1_i32_21 = arith.constant 1 : i32
    %59 = vector.broadcast %c1_i32_21 : i32 to vector<1x512xi32>
    %60 = arith.addi %16, %59 : vector<1x512xi32>
    %c0_i32_22 = arith.constant 0 : i32
    %61 = vector.broadcast %c0_i32_22 : i32 to vector<1x512xi32>
    %62 = arith.cmpi sge, %60, %61 : vector<1x512xi32>
    %c1_i32_23 = arith.constant 1 : i32
    %63 = vector.broadcast %c1_i32_23 : i32 to vector<1x512xi32>
    %64 = arith.addi %16, %63 : vector<1x512xi32>
    %c16_i32_24 = arith.constant 16 : i32
    %65 = vector.broadcast %c16_i32_24 : i32 to vector<1x512xi32>
    %66 = arith.cmpi slt, %64, %65 : vector<1x512xi32>
    %67 = arith.andi %62, %66 : vector<1x512xi1>
    %cst_25 = arith.constant 0.000000e+00 : f32
    %68 = vector.broadcast %cst_25 : f32 to vector<1x512xf32>
    %69 = arith.select %67, %58, %68 : vector<1x512xi1>, vector<1x512xf32>
    %c4 = arith.constant 4 : index
    %c0_26 = arith.constant 0 : index
    %70 = vector.load %arg14[%c4, %c0_26] : memref<224x512xf32, #tpu.memory_space<vmem>>, vector<1x512xf32>
    tpu.vector_store %arg14[%c4, %c0_26], %69 {strides = array<i32>} : memref<224x512xf32, #tpu.memory_space<vmem>>, vector<1x512xf32>,
    %c510_i32 = arith.constant 510 : i32
    %71 = tpu.dynamic_rotate %17 by %c510_i32 dim 1 : vector<1x512xf32>, i32 -> vector<1x512xf32>
    %c2_i32_27 = arith.constant 2 : i32
    %72 = vector.broadcast %c2_i32_27 : i32 to vector<1x512xi32>
    %73 = arith.addi %16, %72 : vector<1x512xi32>
    %c0_i32_28 = arith.constant 0 : i32
    %74 = vector.broadcast %c0_i32_28 : i32 to vector<1x512xi32>
    %75 = arith.cmpi sge, %73, %74 : vector<1x512xi32>
    %c2_i32_29 = arith.constant 2 : i32
    %76 = vector.broadcast %c2_i32_29 : i32 to vector<1x512xi32>
    %77 = arith.addi %16, %76 : vector<1x512xi32>
    %c16_i32_30 = arith.constant 16 : i32
    %78 = vector.broadcast %c16_i32_30 : i32 to vector<1x512xi32>
    %79 = arith.cmpi slt, %77, %78 : vector<1x512xi32>
    %80 = arith.andi %75, %79 : vector<1x512xi1>
    %cst_31 = arith.constant 0.000000e+00 : f32
    %81 = vector.broadcast %cst_31 : f32 to vector<1x512xf32>
    %82 = arith.select %80, %71, %81 : vector<1x512xi1>, vector<1x512xf32>
    %c5 = arith.constant 5 : index
    %c0_32 = arith.constant 0 : index
    %83 = vector.load %arg14[%c5, %c0_32] : memref<224x512xf32, #tpu.memory_space<vmem>>, vector<1x512xf32>
    tpu.vector_store %arg14[%c5, %c0_32], %82 {strides = array<i32>} : memref<224x512xf32, #tpu.memory_space<vmem>>, vector<1x512xf32>,
    %c509_i32 = arith.constant 509 : i32
    %84 = tpu.dynamic_rotate %17 by %c509_i32 dim 1 : vector<1x512xf32>, i32 -> vector<1x512xf32>
    %c3_i32_33 = arith.constant 3 : i32
    %85 = vector.broadcast %c3_i32_33 : i32 to vector<1x512xi32>
    %86 = arith.addi %16, %85 : vector<1x512xi32>
    %c0_i32_34 = arith.constant 0 : i32
    %87 = vector.broadcast %c0_i32_34 : i32 to vector<1x512xi32>
    %88 = arith.cmpi sge, %86, %87 : vector<1x512xi32>
    %c3_i32_35 = arith.constant 3 : i32
    %89 = vector.broadcast %c3_i32_35 : i32 to vector<1x512xi32>
    %90 = arith.addi %16, %89 : vector<1x512xi32>
    %c16_i32_36 = arith.constant 16 : i32
    %91 = vector.broadcast %c16_i32_36 : i32 to vector<1x512xi32>
    %92 = arith.cmpi slt, %90, %91 : vector<1x512xi32>
    %93 = arith.andi %88, %92 : vector<1x512xi1>
    %cst_37 = arith.constant 0.000000e+00 : f32
    %94 = vector.broadcast %cst_37 : f32 to vector<1x512xf32>
    %95 = arith.select %93, %84, %94 : vector<1x512xi1>, vector<1x512xf32>
    %c6 = arith.constant 6 : index
    %c0_38 = arith.constant 0 : index
    %96 = vector.load %arg14[%c6, %c0_38] : memref<224x512xf32, #tpu.memory_space<vmem>>, vector<1x512xf32>
    tpu.vector_store %arg14[%c6, %c0_38], %95 {strides = array<i32>} : memref<224x512xf32, #tpu.memory_space<vmem>>, vector<1x512xf32>,
    %c508_i32 = arith.constant 508 : i32
    %97 = tpu.dynamic_rotate %17 by %c508_i32 dim 1 : vector<1x512xf32>, i32 -> vector<1x512xf32>
    %c4_i32 = arith.constant 4 : i32
    %98 = vector.broadcast %c4_i32 : i32 to vector<1x512xi32>
    %99 = arith.addi %16, %98 : vector<1x512xi32>
    %c0_i32_39 = arith.constant 0 : i32
    %100 = vector.broadcast %c0_i32_39 : i32 to vector<1x512xi32>
    %101 = arith.cmpi sge, %99, %100 : vector<1x512xi32>
    %c4_i32_40 = arith.constant 4 : i32
    %102 = vector.broadcast %c4_i32_40 : i32 to vector<1x512xi32>
    %103 = arith.addi %16, %102 : vector<1x512xi32>
    %c16_i32_41 = arith.constant 16 : i32
    %104 = vector.broadcast %c16_i32_41 : i32 to vector<1x512xi32>
    %105 = arith.cmpi slt, %103, %104 : vector<1x512xi32>
    %106 = arith.andi %101, %105 : vector<1x512xi1>
    %cst_42 = arith.constant 0.000000e+00 : f32
    %107 = vector.broadcast %cst_42 : f32 to vector<1x512xf32>
    %108 = arith.select %106, %97, %107 : vector<1x512xi1>, vector<1x512xf32>
    %c7 = arith.constant 7 : index
    %c0_43 = arith.constant 0 : index
    %109 = vector.load %arg14[%c7, %c0_43] : memref<224x512xf32, #tpu.memory_space<vmem>>, vector<1x512xf32>
    tpu.vector_store %arg14[%c7, %c0_43], %108 {strides = array<i32>} : memref<224x512xf32, #tpu.memory_space<vmem>>, vector<1x512xf32>,
    %c0_44 = arith.constant 0 : index
    %c0_45 = arith.constant 0 : index
    %110 = vector.load %arg1[%c0_44, %c0_45] : memref<96x8xf32, #tpu.memory_space<vmem>>, vector<96x8xf32>
    %c0_46 = arith.constant 0 : index
    %c0_47 = arith.constant 0 : index
    %111 = vector.load %arg14[%c0_46, %c0_47] : memref<224x512xf32, #tpu.memory_space<vmem>>, vector<8x512xf32>
    %cst_48 = arith.constant dense<0.000000e+00> : vector<96x512xf32>
    %112 = tpu.matmul %110, %111, %cst_48 {dimension_numbers = #tpu.dot_dimension_numbers<[1], [0], [0], [1], [0, 0, 1, 1], [], []>} : vector<96x8xf32>, vector<8x512xf32>, vector<96x512xf32> -> vector<96x512xf32>
    %c0_49 = arith.constant 0 : index
    %c0_50 = arith.constant 0 : index
    %113 = vector.load %arg2[%c0_49, %c0_50] : memref<96x1xf32, #tpu.memory_space<vmem>>, vector<96x1xf32>
    %114 = vector.broadcast %113 : vector<96x1xf32> to vector<96x512xf32>
    %115 = arith.addf %112, %114 : vector<96x512xf32>
    %116 = vector.extract_strided_slice %115 {offsets = [0, 0], sizes = [32, 512], strides = [1, 1]} : vector<96x512xf32> to vector<32x512xf32>
    %117 = math.tanh %116 : vector<32x512xf32>
    %118 = vector.extract_strided_slice %115 {offsets = [32, 0], sizes = [32, 512], strides = [1, 1]} : vector<96x512xf32> to vector<32x512xf32>
    %119 = math.tanh %118 : vector<32x512xf32>
    %120 = arith.addf %117, %119 : vector<32x512xf32>
    %121 = vector.extract_strided_slice %115 {offsets = [64, 0], sizes = [32, 512], strides = [1, 1]} : vector<96x512xf32> to vector<32x512xf32>
    %122 = math.tanh %121 : vector<32x512xf32>
    %123 = arith.addf %120, %122 : vector<32x512xf32>
    %124 = math.tanh %123 : vector<32x512xf32>
    %c0_51 = arith.constant 0 : index
    %c0_52 = arith.constant 0 : index
    %125 = vector.load %arg15[%c0_51, %c0_52] : memref<32x512xf32, #tpu.memory_space<vmem>>, vector<32x512xf32>
    tpu.vector_store %arg15[%c0_51, %c0_52], %124 {strides = array<i32>} : memref<32x512xf32, #tpu.memory_space<vmem>>, vector<32x512xf32>,
    %c0_53 = arith.constant 0 : index
    %c0_54 = arith.constant 0 : index
    %126 = vector.load %arg15[%c0_53, %c0_54] : memref<32x512xf32, #tpu.memory_space<vmem>>, vector<32x512xf32>
    %c3_i32_55 = arith.constant 3 : i32
    %127 = tpu.dynamic_rotate %126 by %c3_i32_55 dim 1 : vector<32x512xf32>, i32 -> vector<32x512xf32>
    %cst_56 = arith.constant 0.000000e+00 : f32
    %128 = vector.shape_cast %27 : vector<1x512xi1> to vector<1x512xi1>
    %129 = vector.broadcast %128 : vector<1x512xi1> to vector<32x512xi1>
    %130 = vector.broadcast %cst_56 : f32 to vector<32x512xf32>
    %131 = arith.select %129, %127, %130 : vector<32x512xi1>, vector<32x512xf32>
    %c0_57 = arith.constant 0 : index
    %c0_58 = arith.constant 0 : index
    %132 = vector.load %arg14[%c0_57, %c0_58] : memref<224x512xf32, #tpu.memory_space<vmem>>, vector<32x512xf32>
    tpu.vector_store %arg14[%c0_57, %c0_58], %131 {strides = array<i32>} : memref<224x512xf32, #tpu.memory_space<vmem>>, vector<32x512xf32>,
    %c2_i32_59 = arith.constant 2 : i32
    %133 = tpu.dynamic_rotate %126 by %c2_i32_59 dim 1 : vector<32x512xf32>, i32 -> vector<32x512xf32>
    %cst_60 = arith.constant 0.000000e+00 : f32
    %134 = vector.shape_cast %40 : vector<1x512xi1> to vector<1x512xi1>
    %135 = vector.broadcast %134 : vector<1x512xi1> to vector<32x512xi1>
    %136 = vector.broadcast %cst_60 : f32 to vector<32x512xf32>
    %137 = arith.select %135, %133, %136 : vector<32x512xi1>, vector<32x512xf32>
    %c32 = arith.constant 32 : index
    %c0_61 = arith.constant 0 : index
    %138 = vector.load %arg14[%c32, %c0_61] : memref<224x512xf32, #tpu.memory_space<vmem>>, vector<32x512xf32>
    tpu.vector_store %arg14[%c32, %c0_61], %137 {strides = array<i32>} : memref<224x512xf32, #tpu.memory_space<vmem>>, vector<32x512xf32>,
    %c1_i32_62 = arith.constant 1 : i32
    %139 = tpu.dynamic_rotate %126 by %c1_i32_62 dim 1 : vector<32x512xf32>, i32 -> vector<32x512xf32>
    %cst_63 = arith.constant 0.000000e+00 : f32
    %140 = vector.shape_cast %53 : vector<1x512xi1> to vector<1x512xi1>
    %141 = vector.broadcast %140 : vector<1x512xi1> to vector<32x512xi1>
    %142 = vector.broadcast %cst_63 : f32 to vector<32x512xf32>
    %143 = arith.select %141, %139, %142 : vector<32x512xi1>, vector<32x512xf32>
    %c64 = arith.constant 64 : index
    %c0_64 = arith.constant 0 : index
    %144 = vector.load %arg14[%c64, %c0_64] : memref<224x512xf32, #tpu.memory_space<vmem>>, vector<32x512xf32>
    tpu.vector_store %arg14[%c64, %c0_64], %143 {strides = array<i32>} : memref<224x512xf32, #tpu.memory_space<vmem>>, vector<32x512xf32>,
    %c96 = arith.constant 96 : index
    %c0_65 = arith.constant 0 : index
    %145 = vector.load %arg14[%c96, %c0_65] : memref<224x512xf32, #tpu.memory_space<vmem>>, vector<32x512xf32>
    tpu.vector_store %arg14[%c96, %c0_65], %126 {strides = array<i32>} : memref<224x512xf32, #tpu.memory_space<vmem>>, vector<32x512xf32>,
    %c511_i32_66 = arith.constant 511 : i32
    %146 = tpu.dynamic_rotate %126 by %c511_i32_66 dim 1 : vector<32x512xf32>, i32 -> vector<32x512xf32>
    %cst_67 = arith.constant 0.000000e+00 : f32
    %147 = vector.shape_cast %67 : vector<1x512xi1> to vector<1x512xi1>
    %148 = vector.broadcast %147 : vector<1x512xi1> to vector<32x512xi1>
    %149 = vector.broadcast %cst_67 : f32 to vector<32x512xf32>
    %150 = arith.select %148, %146, %149 : vector<32x512xi1>, vector<32x512xf32>
    %c128 = arith.constant 128 : index
    %c0_68 = arith.constant 0 : index
    %151 = vector.load %arg14[%c128, %c0_68] : memref<224x512xf32, #tpu.memory_space<vmem>>, vector<32x512xf32>
    tpu.vector_store %arg14[%c128, %c0_68], %150 {strides = array<i32>} : memref<224x512xf32, #tpu.memory_space<vmem>>, vector<32x512xf32>,
    %c510_i32_69 = arith.constant 510 : i32
    %152 = tpu.dynamic_rotate %126 by %c510_i32_69 dim 1 : vector<32x512xf32>, i32 -> vector<32x512xf32>
    %cst_70 = arith.constant 0.000000e+00 : f32
    %153 = vector.shape_cast %80 : vector<1x512xi1> to vector<1x512xi1>
    %154 = vector.broadcast %153 : vector<1x512xi1> to vector<32x512xi1>
    %155 = vector.broadcast %cst_70 : f32 to vector<32x512xf32>
    %156 = arith.select %154, %152, %155 : vector<32x512xi1>, vector<32x512xf32>
    %c160 = arith.constant 160 : index
    %c0_71 = arith.constant 0 : index
    %157 = vector.load %arg14[%c160, %c0_71] : memref<224x512xf32, #tpu.memory_space<vmem>>, vector<32x512xf32>
    tpu.vector_store %arg14[%c160, %c0_71], %156 {strides = array<i32>} : memref<224x512xf32, #tpu.memory_space<vmem>>, vector<32x512xf32>,
    %c509_i32_72 = arith.constant 509 : i32
    %158 = tpu.dynamic_rotate %126 by %c509_i32_72 dim 1 : vector<32x512xf32>, i32 -> vector<32x512xf32>
    %cst_73 = arith.constant 0.000000e+00 : f32
    %159 = vector.shape_cast %93 : vector<1x512xi1> to vector<1x512xi1>
    %160 = vector.broadcast %159 : vector<1x512xi1> to vector<32x512xi1>
    %161 = vector.broadcast %cst_73 : f32 to vector<32x512xf32>
    %162 = arith.select %160, %158, %161 : vector<32x512xi1>, vector<32x512xf32>
    %c192 = arith.constant 192 : index
    %c0_74 = arith.constant 0 : index
    %163 = vector.load %arg14[%c192, %c0_74] : memref<224x512xf32, #tpu.memory_space<vmem>>, vector<32x512xf32>
    tpu.vector_store %arg14[%c192, %c0_74], %162 {strides = array<i32>} : memref<224x512xf32, #tpu.memory_space<vmem>>, vector<32x512xf32>,
    %c0_75 = arith.constant 0 : index
    %c0_76 = arith.constant 0 : index
    %164 = vector.load %arg3[%c0_75, %c0_76] : memref<96x224xf32, #tpu.memory_space<vmem>>, vector<96x224xf32>
    %c0_77 = arith.constant 0 : index
    %c0_78 = arith.constant 0 : index
    %165 = vector.load %arg14[%c0_77, %c0_78] : memref<224x512xf32, #tpu.memory_space<vmem>>, vector<224x512xf32>
    %cst_79 = arith.constant dense<0.000000e+00> : vector<96x512xf32>
    %166 = tpu.matmul %164, %165, %cst_79 {dimension_numbers = #tpu.dot_dimension_numbers<[1], [0], [0], [1], [0, 0, 1, 1], [], []>} : vector<96x224xf32>, vector<224x512xf32>, vector<96x512xf32> -> vector<96x512xf32>
    %c0_80 = arith.constant 0 : index
    %c0_81 = arith.constant 0 : index
    %167 = vector.load %arg4[%c0_80, %c0_81] : memref<96x1xf32, #tpu.memory_space<vmem>>, vector<96x1xf32>
    %168 = vector.broadcast %167 : vector<96x1xf32> to vector<96x512xf32>
    %169 = arith.addf %166, %168 : vector<96x512xf32>
    %170 = vector.extract_strided_slice %169 {offsets = [0, 0], sizes = [32, 512], strides = [1, 1]} : vector<96x512xf32> to vector<32x512xf32>
    %171 = math.tanh %170 : vector<32x512xf32>
    %172 = vector.extract_strided_slice %169 {offsets = [32, 0], sizes = [32, 512], strides = [1, 1]} : vector<96x512xf32> to vector<32x512xf32>
    %173 = math.tanh %172 : vector<32x512xf32>
    %174 = arith.addf %171, %173 : vector<32x512xf32>
    %175 = vector.extract_strided_slice %169 {offsets = [64, 0], sizes = [32, 512], strides = [1, 1]} : vector<96x512xf32> to vector<32x512xf32>
    %176 = math.tanh %175 : vector<32x512xf32>
    %177 = arith.addf %174, %176 : vector<32x512xf32>
    %178 = math.tanh %177 : vector<32x512xf32>
    %c0_82 = arith.constant 0 : index
    %c0_83 = arith.constant 0 : index
    %179 = vector.load %arg15[%c0_82, %c0_83] : memref<32x512xf32, #tpu.memory_space<vmem>>, vector<32x512xf32>
    tpu.vector_store %arg15[%c0_82, %c0_83], %178 {strides = array<i32>} : memref<32x512xf32, #tpu.memory_space<vmem>>, vector<32x512xf32>,
    %c0_84 = arith.constant 0 : index
    %c0_85 = arith.constant 0 : index
    %180 = vector.load %arg15[%c0_84, %c0_85] : memref<32x512xf32, #tpu.memory_space<vmem>>, vector<32x512xf32>
    %c3_i32_86 = arith.constant 3 : i32
    %181 = tpu.dynamic_rotate %180 by %c3_i32_86 dim 1 : vector<32x512xf32>, i32 -> vector<32x512xf32>
    %cst_87 = arith.constant 0.000000e+00 : f32
    %182 = vector.shape_cast %27 : vector<1x512xi1> to vector<1x512xi1>
    %183 = vector.broadcast %182 : vector<1x512xi1> to vector<32x512xi1>
    %184 = vector.broadcast %cst_87 : f32 to vector<32x512xf32>
    %185 = arith.select %183, %181, %184 : vector<32x512xi1>, vector<32x512xf32>
    %c0_88 = arith.constant 0 : index
    %c0_89 = arith.constant 0 : index
    %186 = vector.load %arg14[%c0_88, %c0_89] : memref<224x512xf32, #tpu.memory_space<vmem>>, vector<32x512xf32>
    tpu.vector_store %arg14[%c0_88, %c0_89], %185 {strides = array<i32>} : memref<224x512xf32, #tpu.memory_space<vmem>>, vector<32x512xf32>,
    %c2_i32_90 = arith.constant 2 : i32
    %187 = tpu.dynamic_rotate %180 by %c2_i32_90 dim 1 : vector<32x512xf32>, i32 -> vector<32x512xf32>
    %cst_91 = arith.constant 0.000000e+00 : f32
    %188 = vector.shape_cast %40 : vector<1x512xi1> to vector<1x512xi1>
    %189 = vector.broadcast %188 : vector<1x512xi1> to vector<32x512xi1>
    %190 = vector.broadcast %cst_91 : f32 to vector<32x512xf32>
    %191 = arith.select %189, %187, %190 : vector<32x512xi1>, vector<32x512xf32>
    %c32_92 = arith.constant 32 : index
    %c0_93 = arith.constant 0 : index
    %192 = vector.load %arg14[%c32_92, %c0_93] : memref<224x512xf32, #tpu.memory_space<vmem>>, vector<32x512xf32>
    tpu.vector_store %arg14[%c32_92, %c0_93], %191 {strides = array<i32>} : memref<224x512xf32, #tpu.memory_space<vmem>>, vector<32x512xf32>,
    %c1_i32_94 = arith.constant 1 : i32
    %193 = tpu.dynamic_rotate %180 by %c1_i32_94 dim 1 : vector<32x512xf32>, i32 -> vector<32x512xf32>
    %cst_95 = arith.constant 0.000000e+00 : f32
    %194 = vector.shape_cast %53 : vector<1x512xi1> to vector<1x512xi1>
    %195 = vector.broadcast %194 : vector<1x512xi1> to vector<32x512xi1>
    %196 = vector.broadcast %cst_95 : f32 to vector<32x512xf32>
    %197 = arith.select %195, %193, %196 : vector<32x512xi1>, vector<32x512xf32>
    %c64_96 = arith.constant 64 : index
    %c0_97 = arith.constant 0 : index
    %198 = vector.load %arg14[%c64_96, %c0_97] : memref<224x512xf32, #tpu.memory_space<vmem>>, vector<32x512xf32>
    tpu.vector_store %arg14[%c64_96, %c0_97], %197 {strides = array<i32>} : memref<224x512xf32, #tpu.memory_space<vmem>>, vector<32x512xf32>,
    %c96_98 = arith.constant 96 : index
    %c0_99 = arith.constant 0 : index
    %199 = vector.load %arg14[%c96_98, %c0_99] : memref<224x512xf32, #tpu.memory_space<vmem>>, vector<32x512xf32>
    tpu.vector_store %arg14[%c96_98, %c0_99], %180 {strides = array<i32>} : memref<224x512xf32, #tpu.memory_space<vmem>>, vector<32x512xf32>,
    %c511_i32_100 = arith.constant 511 : i32
    %200 = tpu.dynamic_rotate %180 by %c511_i32_100 dim 1 : vector<32x512xf32>, i32 -> vector<32x512xf32>
    %cst_101 = arith.constant 0.000000e+00 : f32
    %201 = vector.shape_cast %67 : vector<1x512xi1> to vector<1x512xi1>
    %202 = vector.broadcast %201 : vector<1x512xi1> to vector<32x512xi1>
    %203 = vector.broadcast %cst_101 : f32 to vector<32x512xf32>
    %204 = arith.select %202, %200, %203 : vector<32x512xi1>, vector<32x512xf32>
    %c128_102 = arith.constant 128 : index
    %c0_103 = arith.constant 0 : index
    %205 = vector.load %arg14[%c128_102, %c0_103] : memref<224x512xf32, #tpu.memory_space<vmem>>, vector<32x512xf32>
    tpu.vector_store %arg14[%c128_102, %c0_103], %204 {strides = array<i32>} : memref<224x512xf32, #tpu.memory_space<vmem>>, vector<32x512xf32>,
    %c510_i32_104 = arith.constant 510 : i32
    %206 = tpu.dynamic_rotate %180 by %c510_i32_104 dim 1 : vector<32x512xf32>, i32 -> vector<32x512xf32>
    %cst_105 = arith.constant 0.000000e+00 : f32
    %207 = vector.shape_cast %80 : vector<1x512xi1> to vector<1x512xi1>
    %208 = vector.broadcast %207 : vector<1x512xi1> to vector<32x512xi1>
    %209 = vector.broadcast %cst_105 : f32 to vector<32x512xf32>
    %210 = arith.select %208, %206, %209 : vector<32x512xi1>, vector<32x512xf32>
    %c160_106 = arith.constant 160 : index
    %c0_107 = arith.constant 0 : index
    %211 = vector.load %arg14[%c160_106, %c0_107] : memref<224x512xf32, #tpu.memory_space<vmem>>, vector<32x512xf32>
    tpu.vector_store %arg14[%c160_106, %c0_107], %210 {strides = array<i32>} : memref<224x512xf32, #tpu.memory_space<vmem>>, vector<32x512xf32>,
    %c509_i32_108 = arith.constant 509 : i32
    %212 = tpu.dynamic_rotate %180 by %c509_i32_108 dim 1 : vector<32x512xf32>, i32 -> vector<32x512xf32>
    %cst_109 = arith.constant 0.000000e+00 : f32
    %213 = vector.shape_cast %93 : vector<1x512xi1> to vector<1x512xi1>
    %214 = vector.broadcast %213 : vector<1x512xi1> to vector<32x512xi1>
    %215 = vector.broadcast %cst_109 : f32 to vector<32x512xf32>
    %216 = arith.select %214, %212, %215 : vector<32x512xi1>, vector<32x512xf32>
    %c192_110 = arith.constant 192 : index
    %c0_111 = arith.constant 0 : index
    %217 = vector.load %arg14[%c192_110, %c0_111] : memref<224x512xf32, #tpu.memory_space<vmem>>, vector<32x512xf32>
    tpu.vector_store %arg14[%c192_110, %c0_111], %216 {strides = array<i32>} : memref<224x512xf32, #tpu.memory_space<vmem>>, vector<32x512xf32>,
    %c0_112 = arith.constant 0 : index
    %c0_113 = arith.constant 0 : index
    %218 = vector.load %arg5[%c0_112, %c0_113] : memref<96x224xf32, #tpu.memory_space<vmem>>, vector<96x224xf32>
    %c0_114 = arith.constant 0 : index
    %c0_115 = arith.constant 0 : index
    %219 = vector.load %arg14[%c0_114, %c0_115] : memref<224x512xf32, #tpu.memory_space<vmem>>, vector<224x512xf32>
    %cst_116 = arith.constant dense<0.000000e+00> : vector<96x512xf32>
    %220 = tpu.matmul %218, %219, %cst_116 {dimension_numbers = #tpu.dot_dimension_numbers<[1], [0], [0], [1], [0, 0, 1, 1], [], []>} : vector<96x224xf32>, vector<224x512xf32>, vector<96x512xf32> -> vector<96x512xf32>
    %c0_117 = arith.constant 0 : index
    %c0_118 = arith.constant 0 : index
    %221 = vector.load %arg6[%c0_117, %c0_118] : memref<96x1xf32, #tpu.memory_space<vmem>>, vector<96x1xf32>
    %222 = vector.broadcast %221 : vector<96x1xf32> to vector<96x512xf32>
    %223 = arith.addf %220, %222 : vector<96x512xf32>
    %224 = vector.extract_strided_slice %223 {offsets = [0, 0], sizes = [32, 512], strides = [1, 1]} : vector<96x512xf32> to vector<32x512xf32>
    %225 = math.tanh %224 : vector<32x512xf32>
    %226 = vector.extract_strided_slice %223 {offsets = [32, 0], sizes = [32, 512], strides = [1, 1]} : vector<96x512xf32> to vector<32x512xf32>
    %227 = math.tanh %226 : vector<32x512xf32>
    %228 = arith.addf %225, %227 : vector<32x512xf32>
    %229 = vector.extract_strided_slice %223 {offsets = [64, 0], sizes = [32, 512], strides = [1, 1]} : vector<96x512xf32> to vector<32x512xf32>
    %230 = math.tanh %229 : vector<32x512xf32>
    %231 = arith.addf %228, %230 : vector<32x512xf32>
    %232 = math.tanh %231 : vector<32x512xf32>
    %c0_119 = arith.constant 0 : index
    %c0_120 = arith.constant 0 : index
    %233 = vector.load %arg15[%c0_119, %c0_120] : memref<32x512xf32, #tpu.memory_space<vmem>>, vector<32x512xf32>
    tpu.vector_store %arg15[%c0_119, %c0_120], %232 {strides = array<i32>} : memref<32x512xf32, #tpu.memory_space<vmem>>, vector<32x512xf32>,
    %c0_121 = arith.constant 0 : index
    %c0_122 = arith.constant 0 : index
    %234 = vector.load %arg15[%c0_121, %c0_122] : memref<32x512xf32, #tpu.memory_space<vmem>>, vector<32x512xf32>
    %c1_i32_123 = arith.constant 1 : i32
    %235 = tpu.dynamic_rotate %234 by %c1_i32_123 dim 1 : vector<32x512xf32>, i32 -> vector<32x512xf32>
    %cst_124 = arith.constant 0.000000e+00 : f32
    %236 = vector.shape_cast %53 : vector<1x512xi1> to vector<1x512xi1>
    %237 = vector.broadcast %236 : vector<1x512xi1> to vector<32x512xi1>
    %238 = vector.broadcast %cst_124 : f32 to vector<32x512xf32>
    %239 = arith.select %237, %235, %238 : vector<32x512xi1>, vector<32x512xf32>
    %c0_125 = arith.constant 0 : index
    %c0_126 = arith.constant 0 : index
    %240 = vector.load %arg14[%c0_125, %c0_126] : memref<224x512xf32, #tpu.memory_space<vmem>>, vector<32x512xf32>
    tpu.vector_store %arg14[%c0_125, %c0_126], %239 {strides = array<i32>} : memref<224x512xf32, #tpu.memory_space<vmem>>, vector<32x512xf32>,
    %c32_127 = arith.constant 32 : index
    %c0_128 = arith.constant 0 : index
    %241 = vector.load %arg14[%c32_127, %c0_128] : memref<224x512xf32, #tpu.memory_space<vmem>>, vector<32x512xf32>
    tpu.vector_store %arg14[%c32_127, %c0_128], %234 {strides = array<i32>} : memref<224x512xf32, #tpu.memory_space<vmem>>, vector<32x512xf32>,
    %c511_i32_129 = arith.constant 511 : i32
    %242 = tpu.dynamic_rotate %234 by %c511_i32_129 dim 1 : vector<32x512xf32>, i32 -> vector<32x512xf32>
    %cst_130 = arith.constant 0.000000e+00 : f32
    %243 = vector.shape_cast %67 : vector<1x512xi1> to vector<1x512xi1>
    %244 = vector.broadcast %243 : vector<1x512xi1> to vector<32x512xi1>
    %245 = vector.broadcast %cst_130 : f32 to vector<32x512xf32>
    %246 = arith.select %244, %242, %245 : vector<32x512xi1>, vector<32x512xf32>
    %c64_131 = arith.constant 64 : index
    %c0_132 = arith.constant 0 : index
    %247 = vector.load %arg14[%c64_131, %c0_132] : memref<224x512xf32, #tpu.memory_space<vmem>>, vector<32x512xf32>
    tpu.vector_store %arg14[%c64_131, %c0_132], %246 {strides = array<i32>} : memref<224x512xf32, #tpu.memory_space<vmem>>, vector<32x512xf32>,
    %c0_133 = arith.constant 0 : index
    %c0_134 = arith.constant 0 : index
    %248 = vector.load %arg7[%c0_133, %c0_134] : memref<8x96xf32, #tpu.memory_space<vmem>>, vector<8x96xf32>
    %c0_135 = arith.constant 0 : index
    %c0_136 = arith.constant 0 : index
    %249 = vector.load %arg14[%c0_135, %c0_136] : memref<224x512xf32, #tpu.memory_space<vmem>>, vector<96x512xf32>
    %cst_137 = arith.constant dense<0.000000e+00> : vector<8x512xf32>
    %250 = tpu.matmul %248, %249, %cst_137 {dimension_numbers = #tpu.dot_dimension_numbers<[1], [0], [0], [1], [0, 0, 1, 1], [], []>} : vector<8x96xf32>, vector<96x512xf32>, vector<8x512xf32> -> vector<8x512xf32>
    %c0_138 = arith.constant 0 : index
    %c0_139 = arith.constant 0 : index
    %251 = vector.load %arg8[%c0_138, %c0_139] : memref<8x1xf32, #tpu.memory_space<vmem>>, vector<8x1xf32>
    %252 = vector.broadcast %251 : vector<8x1xf32> to vector<8x512xf32>
    %253 = arith.addf %250, %252 : vector<8x512xf32>
    %254 = math.tanh %253 : vector<8x512xf32>
    %c1_i32_140 = arith.constant 1 : i32
    %255 = tpu.dynamic_rotate %254 by %c1_i32_140 dim 1 : vector<8x512xf32>, i32 -> vector<8x512xf32>
    %cst_141 = arith.constant 0.000000e+00 : f32
    %256 = vector.shape_cast %53 : vector<1x512xi1> to vector<1x512xi1>
    %257 = vector.broadcast %256 : vector<1x512xi1> to vector<8x512xi1>
    %258 = vector.broadcast %cst_141 : f32 to vector<8x512xf32>
    %259 = arith.select %257, %255, %258 : vector<8x512xi1>, vector<8x512xf32>
    %c0_142 = arith.constant 0 : index
    %c0_143 = arith.constant 0 : index
    %260 = vector.load %arg14[%c0_142, %c0_143] : memref<224x512xf32, #tpu.memory_space<vmem>>, vector<8x512xf32>
    tpu.vector_store %arg14[%c0_142, %c0_143], %259 {strides = array<i32>} : memref<224x512xf32, #tpu.memory_space<vmem>>, vector<8x512xf32>,
    %c8 = arith.constant 8 : index
    %c0_144 = arith.constant 0 : index
    %261 = vector.load %arg14[%c8, %c0_144] : memref<224x512xf32, #tpu.memory_space<vmem>>, vector<8x512xf32>
    tpu.vector_store %arg14[%c8, %c0_144], %254 {strides = array<i32>} : memref<224x512xf32, #tpu.memory_space<vmem>>, vector<8x512xf32>,
    %c511_i32_145 = arith.constant 511 : i32
    %262 = tpu.dynamic_rotate %254 by %c511_i32_145 dim 1 : vector<8x512xf32>, i32 -> vector<8x512xf32>
    %cst_146 = arith.constant 0.000000e+00 : f32
    %263 = vector.shape_cast %67 : vector<1x512xi1> to vector<1x512xi1>
    %264 = vector.broadcast %263 : vector<1x512xi1> to vector<8x512xi1>
    %265 = vector.broadcast %cst_146 : f32 to vector<8x512xf32>
    %266 = arith.select %264, %262, %265 : vector<8x512xi1>, vector<8x512xf32>
    %c16 = arith.constant 16 : index
    %c0_147 = arith.constant 0 : index
    %267 = vector.load %arg14[%c16, %c0_147] : memref<224x512xf32, #tpu.memory_space<vmem>>, vector<8x512xf32>
    tpu.vector_store %arg14[%c16, %c0_147], %266 {strides = array<i32>} : memref<224x512xf32, #tpu.memory_space<vmem>>, vector<8x512xf32>,
    %c0_148 = arith.constant 0 : index
    %c0_149 = arith.constant 0 : index
    %268 = vector.load %arg9[%c0_148, %c0_149] : memref<1x24xf32, #tpu.memory_space<vmem>>, vector<1x24xf32>
    %c0_150 = arith.constant 0 : index
    %c0_151 = arith.constant 0 : index
    %269 = vector.load %arg14[%c0_150, %c0_151] : memref<224x512xf32, #tpu.memory_space<vmem>>, vector<24x512xf32>
    %cst_152 = arith.constant dense<0.000000e+00> : vector<1x512xf32>
    %270 = tpu.matmul %268, %269, %cst_152 {dimension_numbers = #tpu.dot_dimension_numbers<[1], [0], [0], [1], [0, 0, 1, 1], [], []>} : vector<1x24xf32>, vector<24x512xf32>, vector<1x512xf32> -> vector<1x512xf32>
    %c0_153 = arith.constant 0 : index
    %c0_154 = arith.constant 0 : index
    %271 = vector.load %arg10[%c0_153, %c0_154] : memref<1x1xf32, #tpu.memory_space<vmem>>, vector<1x1xf32>
    %272 = vector.broadcast %271 : vector<1x1xf32> to vector<1x512xf32>
    %273 = arith.addf %270, %272 : vector<1x512xf32>
    %274 = math.tanh %273 : vector<1x512xf32>
    %c0_155 = arith.constant 0 : index
    %c0_156 = arith.constant 0 : index
    %275 = vector.load %arg11[%c0_155, %c0_156] : memref<512x2xf32, #tpu.memory_space<vmem>>, vector<512x2xf32>
    %cst_157 = arith.constant dense<0.000000e+00> : vector<1x2xf32>
    %276 = tpu.matmul %274, %275, %cst_157 {dimension_numbers = #tpu.dot_dimension_numbers<[1], [0], [0], [1], [0, 0, 1, 1], [], []>} : vector<1x512xf32>, vector<512x2xf32>, vector<1x2xf32> -> vector<1x2xf32>
    %c0_158 = arith.constant 0 : index
    %c0_159 = arith.constant 0 : index
    %277 = vector.load %arg12[%c0_158, %c0_159] : memref<1x1xf32, #tpu.memory_space<vmem>>, vector<1x1xf32>
    %278 = vector.broadcast %277 : vector<1x1xf32> to vector<1x2xf32>
    %279 = arith.addf %276, %278 : vector<1x2xf32>
    %c0_160 = arith.constant 0 : index
    %c0_161 = arith.constant 0 : index
    %280 = vector.load %arg13[%c0_160, %c0_161] : memref<1x2xf32, #tpu.memory_space<vmem>>, vector<1x2xf32>
    tpu.vector_store %arg13[%c0_160, %c0_161], %279 {strides = array<i32>} : memref<1x2xf32, #tpu.memory_space<vmem>>, vector<1x2xf32>,
    return
  }
}

</mosaic_0001>

<llo_original>
// kernel: model_forward.1
$region0: #{model_forward.1}
  #allocation0 [shape = 'u32[]', space=smem, size = 0x4, offset = 0x4, fixed_abs, tag = 'smem constant byte address 0x4 - core index']
  #allocation1 [shape = 'u32[72,128]{1,0:T(1,128)}', space=vmem, size = 0x9000, scoped, tag = 'internal scratch']
  #allocation2 [shape = 'f32[224,512]{1,0:T(8,128)}', space=vmem, size = 0x70000, scoped, tag = 'scratch operand']
  #allocation3 [shape = 'f32[32,512]{1,0:T(8,128)}', space=vmem, size = 0x10000, scoped, tag = 'scratch operand']
  #allocation4 [shape = 'f32[1,1]{1,0:T(1,128)S(1)}', space=vmem, size = 0x200, scoped, tag = 'scoped memory for model_forward.1']
  #allocation5 [shape = 'f32[1,1]{1,0:T(1,128)S(1)}', space=vmem, size = 0x200, scoped, tag = 'scoped memory for model_forward.1']
  %s0 = inlined_call_operand.vmem [shape: f32[1,512], index: 0, kind: input, shape index: {}]
  %s1 = inlined_call_operand.vmem [shape: f32[96,8], index: 1, kind: input, shape index: {}]
  %s2 = inlined_call_operand.vmem [shape: f32[96,1], index: 2, kind: input, shape index: {}]
  %s3 = inlined_call_operand.vmem [shape: f32[96,224], index: 3, kind: input, shape index: {}]
  %s4 = inlined_call_operand.vmem [shape: f32[96,1], index: 4, kind: input, shape index: {}]
  %s5 = inlined_call_operand.vmem [shape: f32[96,224], index: 5, kind: input, shape index: {}]
  %s6 = inlined_call_operand.vmem [shape: f32[96,1], index: 6, kind: input, shape index: {}]
  %s7 = inlined_call_operand.vmem [shape: f32[8,96], index: 7, kind: input, shape index: {}]
  %s8 = inlined_call_operand.vmem [shape: f32[8,1], index: 8, kind: input, shape index: {}]
  %s9 = inlined_call_operand.vmem [shape: f32[1,24], index: 9, kind: input, shape index: {}]
  %s10 = inlined_call_operand.<no memory space> [shape: f32[1,1], index: 10, kind: input, shape index: {}]
  %s11 = inlined_call_operand.vmem [shape: f32[512,2], index: 11, kind: input, shape index: {}]
  %s12 = inlined_call_operand.<no memory space> [shape: f32[1,1], index: 12, kind: input, shape index: {}]
  %s13 = inlined_call_operand.hbm [shape: f32[1,2], index: 13, kind: output, shape index: {}]
  %s14 = sld [smem:[#allocation0]]
  $region62: #{model_forward.1} parent=0
    _
  %s16 = ssub.s32 1, %s14
  %s17 = scalar_select 0, %s16, %s14
  %v18 = vstv %s10
  %19 = vst [vmem:[#allocation4] sm:$0x1] %v18
  %v20 = vstv %s12
  %21 = vst [vmem:[#allocation5] sm:$0x1] %v20
  $region1: #{model_forward.1} parent=0
    #allocation6 [shape = 'u8[512]{0}', space=vmem, size = 0x400, scoped, tag = 'output window, operand 0, single buffered']
    #allocation7 [shape = 's32[1]{0}', space=sflag, size = 0x4, scoped, tag = 'scoped memory for model_forward.1']
    %22 = vsyncpa [#allocation7], 0
    // Predicated region
    $region2: #{model_forward.1} parent=1 // pred_check
      _
    $region3: #{model_forward.1} parent=1 // pred_check_branch
      %24 = sbr.rel (0) target = $region5
    $region4: #{model_forward.1} parent=1 // pred_region
      _
    $region5: #{model_forward.1} parent=1 // pred_fallthru
      _
    // Predicated region
    $region6: #{model_forward.1} parent=1 // pred_check
      _
    $region7: #{model_forward.1} parent=1 // pred_check_branch
      %26 = sbr.rel (0) target = $region9
    $region8: #{model_forward.1} parent=1 // pred_region
      _
    $region9: #{model_forward.1} parent=1 // pred_fallthru
      _
    // Predicated region
    $region10: #{model_forward.1} parent=1 // pred_check
      _
    $region11: #{model_forward.1} parent=1 // pred_check_branch
      %28 = sbr.rel (0) target = $region13
    $region12: #{model_forward.1} parent=1 // pred_region
      _
    $region13: #{model_forward.1} parent=1 // pred_fallthru
      _
    // Predicated region
    $region14: #{model_forward.1} parent=1 // pred_check
      _
    $region15: #{model_forward.1} parent=1 // pred_check_branch
      %30 = sbr.rel (0) target = $region17
    $region16: #{model_forward.1} parent=1 // pred_region
      _
    $region17: #{model_forward.1} parent=1 // pred_fallthru
      _
    // Predicated region
    $region18: #{model_forward.1} parent=1 // pred_check
      _
    $region19: #{model_forward.1} parent=1 // pred_check_branch
      %32 = sbr.rel (0) target = $region21
    $region20: #{model_forward.1} parent=1 // pred_region
      _
    $region21: #{model_forward.1} parent=1 // pred_fallthru
      _
    // Predicated region
    $region22: #{model_forward.1} parent=1 // pred_check
      _
    $region23: #{model_forward.1} parent=1 // pred_check_branch
      %34 = sbr.rel (0) target = $region25
    $region24: #{model_forward.1} parent=1 // pred_region
      _
    $region25: #{model_forward.1} parent=1 // pred_fallthru
      _
    // Predicated region
    $region26: #{model_forward.1} parent=1 // pred_check
      _
    $region27: #{model_forward.1} parent=1 // pred_check_branch
      %36 = sbr.rel (0) target = $region29
    $region28: #{model_forward.1} parent=1 // pred_region
      _
    $region29: #{model_forward.1} parent=1 // pred_fallthru
      _
    // Predicated region
    $region30: #{model_forward.1} parent=1 // pred_check
      _
    $region31: #{model_forward.1} parent=1 // pred_check_branch
      %38 = sbr.rel (0) target = $region33
    $region32: #{model_forward.1} parent=1 // pred_region
      _
    $region33: #{model_forward.1} parent=1 // pred_fallthru
      _
    // Predicated region
    $region34: #{model_forward.1} parent=1 // pred_check
      _
    $region35: #{model_forward.1} parent=1 // pred_check_branch
      %40 = sbr.rel (0) target = $region37
    $region36: #{model_forward.1} parent=1 // pred_region
      _
    $region37: #{model_forward.1} parent=1 // pred_fallthru
      _
    // Predicated region
    $region38: #{model_forward.1} parent=1 // pred_check
      _
    $region39: #{model_forward.1} parent=1 // pred_check_branch
      %42 = sbr.rel (0) target = $region41
    $region40: #{model_forward.1} parent=1 // pred_region
      _
    $region41: #{model_forward.1} parent=1 // pred_fallthru
      _
    // Predicated region
    $region42: #{model_forward.1} parent=1 // pred_check
      _
    $region43: #{model_forward.1} parent=1 // pred_check_branch
      %44 = sbr.rel (0) target = $region45
    $region44: #{model_forward.1} parent=1 // pred_region
      _
    $region45: #{model_forward.1} parent=1 // pred_fallthru
      _
    // Predicated region
    $region46: #{model_forward.1} parent=1 // pred_check
      _
    $region47: #{model_forward.1} parent=1 // pred_check_branch
      %46 = sbr.rel (0) target = $region49
    $region48: #{model_forward.1} parent=1 // pred_region
      _
    $region49: #{model_forward.1} parent=1 // pred_fallthru
      _
    // Predicated region
    $region50: #{model_forward.1} parent=1 // pred_check
      _
    $region51: #{model_forward.1} parent=1 // pred_check_branch
      %48 = sbr.rel (0) target = $region53
    $region52: #{model_forward.1} parent=1 // pred_region
      _
    $region53: #{model_forward.1} parent=1 // pred_fallthru
      _
    %v49 = vlaneseq
    %v50 = vand.u32 %v49, 127
    %v51 = vadd.s32 %v50, 128
    %v52 = vadd.s32 %v50, 256
    %v53 = vadd.s32 %v50, 384
    %vm54 = vcmp.lt.s32.totalorder %v50, 0
    %v55 = vsub.s32 0, %v50
    %v56 = vsel %vm54, %v55, %v50
    %v57 = vshrl.u32 %v56, 4
    %v58 = vand.u32 %v56, 15
    %v59 = vsub.s32 0, %v58
    %v60 = vsel %vm54, %v59, %v58
    %vm61 = vcmp.lt.s32.totalorder %v51, 0
    %v62 = vsub.s32 0, %v51
    %v63 = vsel %vm61, %v62, %v51
    %v64 = vshrl.u32 %v63, 4
    %v65 = vand.u32 %v63, 15
    %v66 = vsub.s32 0, %v65
    %v67 = vsel %vm61, %v66, %v65
    %vm68 = vcmp.lt.s32.totalorder %v52, 0
    %v69 = vsub.s32 0, %v52
    %v70 = vsel %vm68, %v69, %v52
    %v71 = vshrl.u32 %v70, 4
    %v72 = vand.u32 %v70, 15
    %v73 = vsub.s32 0, %v72
    %v74 = vsel %vm68, %v73, %v72
    %vm75 = vcmp.lt.s32.totalorder %v53, 0
    %v76 = vsub.s32 0, %v53
    %v77 = vsel %vm75, %v76, %v53
    %v78 = vshrl.u32 %v77, 4
    %v79 = vand.u32 %v77, 15
    %v80 = vsub.s32 0, %v79
    %v81 = vsel %vm75, %v80, %v79
    %vm82 = vcmp.ne.s32.totalorder %v60, 0
    %vm83 = vcmp.ne.s32.totalorder %v67, 0
    %vm84 = vcmp.ne.s32.totalorder %v74, 0
    %vm85 = vcmp.ne.s32.totalorder %v81, 0
    %vm86 = vcmp.lt.s32.totalorder %v60, 0
    %vm87 = vcmp.lt.s32.totalorder %v67, 0
    %vm88 = vcmp.lt.s32.totalorder %v74, 0
    %vm89 = vcmp.lt.s32.totalorder %v81, 0
    %vm90 = vmand %vm86, %vm82
    %vm91 = vmand %vm87, %vm83
    %vm92 = vmand %vm88, %vm84
    %vm93 = vmand %vm89, %vm85
    %v94 = vadd.s32 %v60, 16
    %v95 = vadd.s32 %v67, 16
    %v96 = vadd.s32 %v74, 16
    %v97 = vadd.s32 %v81, 16
    %v98 = vsel %vm90, %v94, %v60
    %v99 = vsel %vm91, %v95, %v67
    %v100 = vsel %vm92, %v96, %v74
    %v101 = vsel %vm93, %v97, %v81
    %v102 = vld [vmem:[%s0] sm:$0xf]
    %v104 = vperm.slane %v102, 0
    %v105 = vperm.slane %v102, 1
    %v106 = vperm.slane %v102, 2
    %v107 = vperm.slane %v102, 3
    %112 = vrot.lane.b32.xlu0 %v104, 3
    %v113 = vpop.permute.xlu0 %112
    %114 = vrot.lane.b32.xlu0 %v105, 3
    %v115 = vpop.permute.xlu0 %114
    %116 = vrot.lane.b32.xlu0 %v106, 3
    %v117 = vpop.permute.xlu0 %116
    %118 = vrot.lane.b32.xlu0 %v107, 3
    %v119 = vpop.permute.xlu0 %118
    %vm120 = vcmp.lt.s32.totalorder %v50, 3
    %v121 = vsel %vm120, %v117, %v119
    %v122 = vsel %vm120, %v115, %v117
    %v123 = vsel %vm120, %v113, %v115
    %v124 = vsel %vm120, %v119, %v113
    %v125 = vadd.s32 %v98, 4294967293
    %v126 = vadd.s32 %v99, 4294967293
    %v127 = vadd.s32 %v100, 4294967293
    %v128 = vadd.s32 %v101, 4294967293
    %vm129 = vcmp.ge.s32.totalorder %v125, 0
    %vm130 = vcmp.ge.s32.totalorder %v126, 0
    %vm131 = vcmp.ge.s32.totalorder %v127, 0
    %vm132 = vcmp.ge.s32.totalorder %v128, 0
    %vm133 = vcmp.lt.s32.totalorder %v125, 16
    %vm134 = vcmp.lt.s32.totalorder %v126, 16
    %vm135 = vcmp.lt.s32.totalorder %v127, 16
    %vm136 = vcmp.lt.s32.totalorder %v128, 16
    %vm137 = vmand %vm129, %vm133
    %vm138 = vmand %vm130, %vm134
    %vm139 = vmand %vm131, %vm135
    %vm140 = vmand %vm132, %vm136
    %v141 = vsel %vm137, %v124, 0.0
    %v142 = vsel %vm138, %v123, 0.0
    %v143 = vsel %vm139, %v122, 0.0
    %v144 = vsel %vm140, %v121, 0.0
    %v149 = vrot.slane %v142, 7
    %v150 = vrot.slane %v143, 6
    %v151 = vrot.slane %v144, 5
    %vm152 = vcmask 1040384
    %v153 = vsel %vm152, %v141, %v149
    %vm154 = vcmask 1042434
    %v155 = vsel %vm154, %v150, %v151
    %vm156 = vcmask 1041408
    %v157 = vsel %vm156, %v153, %v155
    %v159 = vlaneseq
    %vm160 = vcmp.ge.s32.totalorder %v159, 0
    %vm161 = vcmp.lt.s32.totalorder %v159, 512
    %vm162 = vmand %vm160, %vm161
    %163 = vst.msk [vmem:[#allocation2] ss:$8 sm:$0xf] %vm162, %v157
    %164 = vst.msk [vmem:[#allocation2] ss:$8 sm:$0x0] %vm162, %v157
    %165 = vrot.lane.b32.xlu0 %v104, 2
    %v166 = vpop.permute.xlu0 %165
    %167 = vrot.lane.b32.xlu0 %v105, 2
    %v168 = vpop.permute.xlu0 %167
    %169 = vrot.lane.b32.xlu0 %v106, 2
    %v170 = vpop.permute.xlu0 %169
    %171 = vrot.lane.b32.xlu0 %v107, 2
    %v172 = vpop.permute.xlu0 %171
    %vm173 = vcmp.lt.s32.totalorder %v50, 2
    %v174 = vsel %vm173, %v170, %v172
    %v175 = vsel %vm173, %v168, %v170
    %v176 = vsel %vm173, %v166, %v168
    %v177 = vsel %vm173, %v172, %v166
    %v178 = vadd.s32 %v98, 4294967294
    %v179 = vadd.s32 %v99, 4294967294
    %v180 = vadd.s32 %v100, 4294967294
    %v181 = vadd.s32 %v101, 4294967294
    %vm182 = vcmp.ge.s32.totalorder %v178, 0
    %vm183 = vcmp.ge.s32.totalorder %v179, 0
    %vm184 = vcmp.ge.s32.totalorder %v180, 0
    %vm185 = vcmp.ge.s32.totalorder %v181, 0
    %vm186 = vcmp.lt.s32.totalorder %v178, 16
    %vm187 = vcmp.lt.s32.totalorder %v179, 16
    %vm188 = vcmp.lt.s32.totalorder %v180, 16
    %vm189 = vcmp.lt.s32.totalorder %v181, 16
    %vm190 = vmand %vm182, %vm186
    %vm191 = vmand %vm183, %vm187
    %vm192 = vmand %vm184, %vm188
    %vm193 = vmand %vm185, %vm189
    %v194 = vsel %vm190, %v177, 0.0
    %v195 = vsel %vm191, %v176, 0.0
    %v196 = vsel %vm192, %v175, 0.0
    %v197 = vsel %vm193, %v174, 0.0
    %v202 = vrot.slane %v195, 7
    %v203 = vrot.slane %v196, 6
    %v204 = vrot.slane %v197, 5
    %v205 = vsel %vm152, %v194, %v202
    %v206 = vsel %vm154, %v203, %v204
    %v207 = vsel %vm156, %v205, %v206
    %s209 = scalar_lea.vmem [#allocation2], 1
    %210 = vst.msk [vmem:[%s209] ss:$8 sm:$0xf] %vm162, %v207
    %211 = vst.msk [vmem:[%s209] ss:$8 sm:$0x0] %vm162, %v207
    %212 = vrot.lane.b32.xlu0 %v104, 1
    %v213 = vpop.permute.xlu0 %212
    %214 = vrot.lane.b32.xlu0 %v105, 1
    %v215 = vpop.permute.xlu0 %214
    %216 = vrot.lane.b32.xlu0 %v106, 1
    %v217 = vpop.permute.xlu0 %216
    %218 = vrot.lane.b32.xlu0 %v107, 1
    %v219 = vpop.permute.xlu0 %218
    %vm220 = vcmp.lt.s32.totalorder %v50, 1
    %v221 = vsel %vm220, %v217, %v219
    %v222 = vsel %vm220, %v215, %v217
    %v223 = vsel %vm220, %v213, %v215
    %v224 = vsel %vm220, %v219, %v213
    %v225 = vadd.s32 %v98, 4294967295
    %v226 = vadd.s32 %v99, 4294967295
    %v227 = vadd.s32 %v100, 4294967295
    %v228 = vadd.s32 %v101, 4294967295
    %vm229 = vcmp.ge.s32.totalorder %v225, 0
    %vm230 = vcmp.ge.s32.totalorder %v226, 0
    %vm231 = vcmp.ge.s32.totalorder %v227, 0
    %vm232 = vcmp.ge.s32.totalorder %v228, 0
    %vm233 = vcmp.lt.s32.totalorder %v225, 16
    %vm234 = vcmp.lt.s32.totalorder %v226, 16
    %vm235 = vcmp.lt.s32.totalorder %v227, 16
    %vm236 = vcmp.lt.s32.totalorder %v228, 16
    %vm237 = vmand %vm229, %vm233
    %vm238 = vmand %vm230, %vm234
    %vm239 = vmand %vm231, %vm235
    %vm240 = vmand %vm232, %vm236
    %v241 = vsel %vm237, %v224, 0.0
    %v242 = vsel %vm238, %v223, 0.0
    %v243 = vsel %vm239, %v222, 0.0
    %v244 = vsel %vm240, %v221, 0.0
    %v249 = vrot.slane %v242, 7
    %v250 = vrot.slane %v243, 6
    %v251 = vrot.slane %v244, 5
    %v252 = vsel %vm152, %v241, %v249
    %v253 = vsel %vm154, %v250, %v251
    %v254 = vsel %vm156, %v252, %v253
    %s256 = scalar_lea.vmem [#allocation2], 2
    %257 = vst.msk [vmem:[%s256] ss:$8 sm:$0xf] %vm162, %v254
    %258 = vst.msk [vmem:[%s256] ss:$8 sm:$0x0] %vm162, %v254
    %s259 = scalar_lea.vmem [#allocation2], 3
    %260 = vst.msk [vmem:[%s259] ss:$8 sm:$0xf] %vm162, %v102
    %261 = vst.msk [vmem:[%s259] ss:$8 sm:$0x0] %vm162, %v102
    %262 = vrot.lane.b32.xlu0 %v104, 127
    %v263 = vpop.permute.xlu0 %262
    %264 = vrot.lane.b32.xlu0 %v105, 127
    %v265 = vpop.permute.xlu0 %264
    %266 = vrot.lane.b32.xlu0 %v106, 127
    %v267 = vpop.permute.xlu0 %266
    %268 = vrot.lane.b32.xlu0 %v107, 127
    %v269 = vpop.permute.xlu0 %268
    %vm270 = vcmp.lt.s32.totalorder %v50, 127
    %v271 = vsel %vm270, %v267, %v269
    %v272 = vsel %vm270, %v265, %v267
    %v273 = vsel %vm270, %v263, %v265
    %v274 = vsel %vm270, %v269, %v263
    %v275 = vadd.s32 %v98, 1
    %v276 = vadd.s32 %v99, 1
    %v277 = vadd.s32 %v100, 1
    %v278 = vadd.s32 %v101, 1
    %vm279 = vcmp.ge.s32.totalorder %v275, 0
    %vm280 = vcmp.ge.s32.totalorder %v276, 0
    %vm281 = vcmp.ge.s32.totalorder %v277, 0
    %vm282 = vcmp.ge.s32.totalorder %v278, 0
    %vm283 = vcmp.lt.s32.totalorder %v275, 16
    %vm284 = vcmp.lt.s32.totalorder %v276, 16
    %vm285 = vcmp.lt.s32.totalorder %v277, 16
    %vm286 = vcmp.lt.s32.totalorder %v278, 16
    %vm287 = vmand %vm279, %vm283
    %vm288 = vmand %vm280, %vm284
    %vm289 = vmand %vm281, %vm285
    %vm290 = vmand %vm282, %vm286
    %v291 = vsel %vm287, %v273, 0.0
    %v292 = vsel %vm288, %v272, 0.0
    %v293 = vsel %vm289, %v271, 0.0
    %v294 = vsel %vm290, %v274, 0.0
    %v299 = vrot.slane %v292, 7
    %v300 = vrot.slane %v293, 6
    %v301 = vrot.slane %v294, 5
    %v302 = vsel %vm152, %v291, %v299
    %v303 = vsel %vm154, %v300, %v301
    %v304 = vsel %vm156, %v302, %v303
    %s306 = scalar_lea.vmem [#allocation2], 4
    %307 = vst.msk [vmem:[%s306] ss:$8 sm:$0xf] %vm162, %v304
    %308 = vst.msk [vmem:[%s306] ss:$8 sm:$0x0] %vm162, %v304
    %309 = vrot.lane.b32.xlu0 %v104, 126
    %v310 = vpop.permute.xlu0 %309
    %311 = vrot.lane.b32.xlu0 %v105, 126
    %v312 = vpop.permute.xlu0 %311
    %313 = vrot.lane.b32.xlu0 %v106, 126
    %v314 = vpop.permute.xlu0 %313
    %315 = vrot.lane.b32.xlu0 %v107, 126
    %v316 = vpop.permute.xlu0 %315
    %vm317 = vcmp.lt.s32.totalorder %v50, 126
    %v318 = vsel %vm317, %v314, %v316
    %v319 = vsel %vm317, %v312, %v314
    %v320 = vsel %vm317, %v310, %v312
    %v321 = vsel %vm317, %v316, %v310
    %v322 = vadd.s32 %v98, 2
    %v323 = vadd.s32 %v99, 2
    %v324 = vadd.s32 %v100, 2
    %v325 = vadd.s32 %v101, 2
    %vm326 = vcmp.ge.s32.totalorder %v322, 0
    %vm327 = vcmp.ge.s32.totalorder %v323, 0
    %vm328 = vcmp.ge.s32.totalorder %v324, 0
    %vm329 = vcmp.ge.s32.totalorder %v325, 0
    %vm330 = vcmp.lt.s32.totalorder %v322, 16
    %vm331 = vcmp.lt.s32.totalorder %v323, 16
    %vm332 = vcmp.lt.s32.totalorder %v324, 16
    %vm333 = vcmp.lt.s32.totalorder %v325, 16
    %vm334 = vmand %vm326, %vm330
    %vm335 = vmand %vm327, %vm331
    %vm336 = vmand %vm328, %vm332
    %vm337 = vmand %vm329, %vm333
    %v338 = vsel %vm334, %v320, 0.0
    %v339 = vsel %vm335, %v319, 0.0
    %v340 = vsel %vm336, %v318, 0.0
    %v341 = vsel %vm337, %v321, 0.0
    %v346 = vrot.slane %v339, 7
    %v347 = vrot.slane %v340, 6
    %v348 = vrot.slane %v341, 5
    %v349 = vsel %vm152, %v338, %v346
    %v350 = vsel %vm154, %v347, %v348
    %v351 = vsel %vm156, %v349, %v350
    %s353 = scalar_lea.vmem [#allocation2], 5
    %354 = vst.msk [vmem:[%s353] ss:$8 sm:$0xf] %vm162, %v351
    %355 = vst.msk [vmem:[%s353] ss:$8 sm:$0x0] %vm162, %v351
    %356 = vrot.lane.b32.xlu0 %v104, 125
    %v357 = vpop.permute.xlu0 %356
    %358 = vrot.lane.b32.xlu0 %v105, 125
    %v359 = vpop.permute.xlu0 %358
    %360 = vrot.lane.b32.xlu0 %v106, 125
    %v361 = vpop.permute.xlu0 %360
    %362 = vrot.lane.b32.xlu0 %v107, 125
    %v363 = vpop.permute.xlu0 %362
    %vm364 = vcmp.lt.s32.totalorder %v50, 125
    %v365 = vsel %vm364, %v361, %v363
    %v366 = vsel %vm364, %v359, %v361
    %v367 = vsel %vm364, %v357, %v359
    %v368 = vsel %vm364, %v363, %v357
    %v369 = vadd.s32 %v98, 3
    %v370 = vadd.s32 %v99, 3
    %v371 = vadd.s32 %v100, 3
    %v372 = vadd.s32 %v101, 3
    %vm373 = vcmp.ge.s32.totalorder %v369, 0
    %vm374 = vcmp.ge.s32.totalorder %v370, 0
    %vm375 = vcmp.ge.s32.totalorder %v371, 0
    %vm376 = vcmp.ge.s32.totalorder %v372, 0
    %vm377 = vcmp.lt.s32.totalorder %v369, 16
    %vm378 = vcmp.lt.s32.totalorder %v370, 16
    %vm379 = vcmp.lt.s32.totalorder %v371, 16
    %vm380 = vcmp.lt.s32.totalorder %v372, 16
    %vm381 = vmand %vm373, %vm377
    %vm382 = vmand %vm374, %vm378
    %vm383 = vmand %vm375, %vm379
    %vm384 = vmand %vm376, %vm380
    %v385 = vsel %vm381, %v367, 0.0
    %v386 = vsel %vm382, %v366, 0.0
    %v387 = vsel %vm383, %v365, 0.0
    %v388 = vsel %vm384, %v368, 0.0
    %v393 = vrot.slane %v386, 7
    %v394 = vrot.slane %v387, 6
    %v395 = vrot.slane %v388, 5
    %v396 = vsel %vm152, %v385, %v393
    %v397 = vsel %vm154, %v394, %v395
    %v398 = vsel %vm156, %v396, %v397
    %s400 = scalar_lea.vmem [#allocation2], 6
    %401 = vst.msk [vmem:[%s400] ss:$8 sm:$0xf] %vm162, %v398
    %402 = vst.msk [vmem:[%s400] ss:$8 sm:$0x0] %vm162, %v398
    %403 = vrot.lane.b32.xlu0 %v104, 124
    %v404 = vpop.permute.xlu0 %403
    %405 = vrot.lane.b32.xlu0 %v105, 124
    %v406 = vpop.permute.xlu0 %405
    %407 = vrot.lane.b32.xlu0 %v106, 124
    %v408 = vpop.permute.xlu0 %407
    %409 = vrot.lane.b32.xlu0 %v107, 124
    %v410 = vpop.permute.xlu0 %409
    %vm411 = vcmp.lt.s32.totalorder %v50, 124
    %v412 = vsel %vm411, %v408, %v410
    %v413 = vsel %vm411, %v406, %v408
    %v414 = vsel %vm411, %v404, %v406
    %v415 = vsel %vm411, %v410, %v404
    %v416 = vadd.s32 %v98, 4
    %v417 = vadd.s32 %v99, 4
    %v418 = vadd.s32 %v100, 4
    %v419 = vadd.s32 %v101, 4
    %vm420 = vcmp.ge.s32.totalorder %v416, 0
    %vm421 = vcmp.ge.s32.totalorder %v417, 0
    %vm422 = vcmp.ge.s32.totalorder %v418, 0
    %vm423 = vcmp.ge.s32.totalorder %v419, 0
    %vm424 = vcmp.lt.s32.totalorder %v416, 16
    %vm425 = vcmp.lt.s32.totalorder %v417, 16
    %vm426 = vcmp.lt.s32.totalorder %v418, 16
    %vm427 = vcmp.lt.s32.totalorder %v419, 16
    %vm428 = vmand %vm420, %vm424
    %vm429 = vmand %vm421, %vm425
    %vm430 = vmand %vm422, %vm426
    %vm431 = vmand %vm423, %vm427
    %v432 = vsel %vm428, %v414, 0.0
    %v433 = vsel %vm429, %v413, 0.0
    %v434 = vsel %vm430, %v412, 0.0
    %v435 = vsel %vm431, %v415, 0.0
    %v440 = vrot.slane %v433, 7
    %v441 = vrot.slane %v434, 6
    %v442 = vrot.slane %v435, 5
    %v443 = vsel %vm152, %v432, %v440
    %v444 = vsel %vm154, %v441, %v442
    %v445 = vsel %vm156, %v443, %v444
    %s447 = scalar_lea.vmem [#allocation2], 7
    %448 = vst.msk [vmem:[%s447] ss:$8 sm:$0xf] %vm162, %v445
    %449 = vst.msk [vmem:[%s447] ss:$8 sm:$0x0] %vm162, %v445
    %v450 = vld [vmem:[%s1] sm:$0xff]
    %v451 = vld [vmem:[%s1 + $0x8] sm:$0xff]
    %v452 = vld [vmem:[%s1 + $0x10] sm:$0xff]
    %v453 = vld [vmem:[%s1 + $0x18] sm:$0xff]
    %v454 = vld [vmem:[%s1 + $0x20] sm:$0xff]
    %v455 = vld [vmem:[%s1 + $0x28] sm:$0xff]
    %v456 = vld [vmem:[%s1 + $0x30] sm:$0xff]
    %v457 = vld [vmem:[%s1 + $0x38] sm:$0xff]
    %v458 = vld [vmem:[%s1 + $0x40] sm:$0xff]
    %v459 = vld [vmem:[%s1 + $0x48] sm:$0xff]
    %v460 = vld [vmem:[%s1 + $0x50] sm:$0xff]
    %v461 = vld [vmem:[%s1 + $0x58] sm:$0xff]
    %v462 = vld [vmem:[#allocation2] sm:$0xff]
    %v463 = vld [vmem:[#allocation2 + $0x8] sm:$0xff]
    %v464 = vld [vmem:[#allocation2 + $0x10] sm:$0xff]
    %v465 = vld [vmem:[#allocation2 + $0x18] sm:$0xff]
    %v466 = vld [vmem:[%s2] sm:$0xff]
    %v467 = vld [vmem:[%s2 + $0x8] sm:$0xff]
    %v468 = vld [vmem:[%s2 + $0x10] sm:$0xff]
    %v469 = vld [vmem:[%s2 + $0x18] sm:$0xff]
    %v470 = vld [vmem:[%s2 + $0x20] sm:$0xff]
    %v471 = vld [vmem:[%s2 + $0x28] sm:$0xff]
    %v472 = vld [vmem:[%s2 + $0x30] sm:$0xff]
    %v473 = vld [vmem:[%s2 + $0x38] sm:$0xff]
    %v474 = vld [vmem:[%s2 + $0x40] sm:$0xff]
    %v475 = vld [vmem:[%s2 + $0x48] sm:$0xff]
    %v476 = vld [vmem:[%s2 + $0x50] sm:$0xff]
    %v477 = vld [vmem:[%s2 + $0x58] sm:$0xff]
    %479 = vset.pattern.permute.xlu0 0
    %480 = vperm.xlu0 %479, %v466
    %v481 = vpop.permute.xlu0 %480
    %484 = vset.pattern.permute.xlu0 0
    %485 = vperm.xlu0 %484, %v467
    %v486 = vpop.permute.xlu0 %485
    %489 = vset.pattern.permute.xlu0 0
    %490 = vperm.xlu0 %489, %v468
    %v491 = vpop.permute.xlu0 %490
    %494 = vset.pattern.permute.xlu0 0
    %495 = vperm.xlu0 %494, %v469
    %v496 = vpop.permute.xlu0 %495
    %499 = vset.pattern.permute.xlu0 0
    %500 = vperm.xlu0 %499, %v470
    %v501 = vpop.permute.xlu0 %500
    %504 = vset.pattern.permute.xlu0 0
    %505 = vperm.xlu0 %504, %v471
    %v506 = vpop.permute.xlu0 %505
    %509 = vset.pattern.permute.xlu0 0
    %510 = vperm.xlu0 %509, %v472
    %v511 = vpop.permute.xlu0 %510
    %514 = vset.pattern.permute.xlu0 0
    %515 = vperm.xlu0 %514, %v473
    %v516 = vpop.permute.xlu0 %515
    %519 = vset.pattern.permute.xlu0 0
    %520 = vperm.xlu0 %519, %v474
    %v521 = vpop.permute.xlu0 %520
    %524 = vset.pattern.permute.xlu0 0
    %525 = vperm.xlu0 %524, %v475
    %v526 = vpop.permute.xlu0 %525
    %529 = vset.pattern.permute.xlu0 0
    %530 = vperm.xlu0 %529, %v476
    %v531 = vpop.permute.xlu0 %530
    %534 = vset.pattern.permute.xlu0 0
    %535 = vperm.xlu0 %534, %v477
    %v536 = vpop.permute.xlu0 %535
    %vm538 = vcmask 64512
    %v540 = vsel %vm538, %v450, 0
    %v543 = vsel %vm538, %v451, 0
    %v546 = vsel %vm538, %v452, 0
    %v549 = vsel %vm538, %v453, 0
    %v552 = vsel %vm538, %v454, 0
    %v555 = vsel %vm538, %v455, 0
    %v558 = vsel %vm538, %v456, 0
    %v561 = vsel %vm538, %v457, 0
    %v564 = vsel %vm538, %v458, 0
    %v567 = vsel %vm538, %v459, 0
    %v570 = vsel %vm538, %v460, 0
    %v573 = vsel %vm538, %v461, 0
    %575 = vmatpush.msra.mxu0 0.0
    %576 = vmatpush.msra.mxu0 0.0
    %577 = vmatpush.msra.mxu0 0.0
    %578 = vmatpush.msra.mxu0 0.0
    %579 = vmatpush.msra.mxu0 0.0
    %580 = vmatpush.msra.mxu0 0.0
    %581 = vmatpush.msra.mxu0 0.0
    %582 = vmatpush.msra.mxu0 0.0
    %583 = vmatpush.msra.mxu0 0.0
    %584 = vmatpush.msra.mxu0 0.0
    %585 = vmatpush.msra.mxu0 0.0
    %586 = vmatpush.msra.mxu0 0.0
    %587 = vmatpush.msra.mxu0 0.0
    %588 = vmatpush.msra.mxu0 0.0
    %589 = vmatpush.msra.mxu0 0.0
    %590 = vmatpush.msra.mxu0 %v462
    %591 = vmatmul.f32.gmra.mxu0 %v540
    %v592 = vpop.f32.mrf.mxu0
    %v593 = vadd.f32 %v481, %v592
    %594 = vmatmul.f32.gmra.mxu0 %v543
    %v595 = vpop.f32.mrf.mxu0
    %v596 = vadd.f32 %v486, %v595
    %597 = vmatmul.f32.gmra.mxu0 %v546
    %v598 = vpop.f32.mrf.mxu0
    %v599 = vadd.f32 %v491, %v598
    %600 = vmatmul.f32.gmra.mxu0 %v549
    %v601 = vpop.f32.mrf.mxu0
    %v602 = vadd.f32 %v496, %v601
    %603 = vmatmul.f32.gmra.mxu0 %v552
    %v604 = vpop.f32.mrf.mxu0
    %v605 = vadd.f32 %v501, %v604
    %606 = vmatmul.f32.gmra.mxu0 %v555
    %v607 = vpop.f32.mrf.mxu0
    %v608 = vadd.f32 %v506, %v607
    %609 = vmatmul.f32.gmra.mxu0 %v558
    %v610 = vpop.f32.mrf.mxu0
    %v611 = vadd.f32 %v511, %v610
    %612 = vmatmul.f32.gmra.mxu0 %v561
    %v613 = vpop.f32.mrf.mxu0
    %v614 = vadd.f32 %v516, %v613
    %615 = vmatmul.f32.gmra.mxu0 %v564
    %v616 = vpop.f32.mrf.mxu0
    %v617 = vadd.f32 %v521, %v616
    %618 = vmatmul.f32.gmra.mxu0 %v567
    %v619 = vpop.f32.mrf.mxu0
    %v620 = vadd.f32 %v526, %v619
    %621 = vmatmul.f32.gmra.mxu0 %v570
    %v622 = vpop.f32.mrf.mxu0
    %v623 = vadd.f32 %v531, %v622
    %624 = vmatmul.f32.gmra.mxu0 %v573
    %v625 = vpop.f32.mrf.mxu0
    %v626 = vadd.f32 %v536, %v625
    %627 = vdwg.mxu0
    %628 = vmatpush.msra.mxu0 0.0
    %629 = vmatpush.msra.mxu0 0.0
    %630 = vmatpush.msra.mxu0 0.0
    %631 = vmatpush.msra.mxu0 0.0
    %632 = vmatpush.msra.mxu0 0.0
    %633 = vmatpush.msra.mxu0 0.0
    %634 = vmatpush.msra.mxu0 0.0
    %635 = vmatpush.msra.mxu0 0.0
    %636 = vmatpush.msra.mxu0 0.0
    %637 = vmatpush.msra.mxu0 0.0
    %638 = vmatpush.msra.mxu0 0.0
    %639 = vmatpush.msra.mxu0 0.0
    %640 = vmatpush.msra.mxu0 0.0
    %641 = vmatpush.msra.mxu0 0.0
    %642 = vmatpush.msra.mxu0 0.0
    %643 = vmatpush.msra.mxu0 %v463
    %644 = vmatmul.f32.gmra.mxu0 %v540
    %v645 = vpop.f32.mrf.mxu0
    %v646 = vadd.f32 %v481, %v645
    %647 = vmatmul.f32.gmra.mxu0 %v543
    %v648 = vpop.f32.mrf.mxu0
    %v649 = vadd.f32 %v486, %v648
    %650 = vmatmul.f32.gmra.mxu0 %v546
    %v651 = vpop.f32.mrf.mxu0
    %v652 = vadd.f32 %v491, %v651
    %653 = vmatmul.f32.gmra.mxu0 %v549
    %v654 = vpop.f32.mrf.mxu0
    %v655 = vadd.f32 %v496, %v654
    %656 = vmatmul.f32.gmra.mxu0 %v552
    %v657 = vpop.f32.mrf.mxu0
    %v658 = vadd.f32 %v501, %v657
    %659 = vmatmul.f32.gmra.mxu0 %v555
    %v660 = vpop.f32.mrf.mxu0
    %v661 = vadd.f32 %v506, %v660
    %662 = vmatmul.f32.gmra.mxu0 %v558
    %v663 = vpop.f32.mrf.mxu0
    %v664 = vadd.f32 %v511, %v663
    %665 = vmatmul.f32.gmra.mxu0 %v561
    %v666 = vpop.f32.mrf.mxu0
    %v667 = vadd.f32 %v516, %v666
    %668 = vmatmul.f32.gmra.mxu0 %v564
    %v669 = vpop.f32.mrf.mxu0
    %v670 = vadd.f32 %v521, %v669
    %671 = vmatmul.f32.gmra.mxu0 %v567
    %v672 = vpop.f32.mrf.mxu0
    %v673 = vadd.f32 %v526, %v672
    %674 = vmatmul.f32.gmra.mxu0 %v570
    %v675 = vpop.f32.mrf.mxu0
    %v676 = vadd.f32 %v531, %v675
    %677 = vmatmul.f32.gmra.mxu0 %v573
    %v678 = vpop.f32.mrf.mxu0
    %v679 = vadd.f32 %v536, %v678
    %680 = vdwg.mxu0
    %681 = vmatpush.msra.mxu0 0.0
    %682 = vmatpush.msra.mxu0 0.0
    %683 = vmatpush.msra.mxu0 0.0
    %684 = vmatpush.msra.mxu0 0.0
    %685 = vmatpush.msra.mxu0 0.0
    %686 = vmatpush.msra.mxu0 0.0
    %687 = vmatpush.msra.mxu0 0.0
    %688 = vmatpush.msra.mxu0 0.0
    %689 = vmatpush.msra.mxu0 0.0
    %690 = vmatpush.msra.mxu0 0.0
    %691 = vmatpush.msra.mxu0 0.0
    %692 = vmatpush.msra.mxu0 0.0
    %693 = vmatpush.msra.mxu0 0.0
    %694 = vmatpush.msra.mxu0 0.0
    %695 = vmatpush.msra.mxu0 0.0
    %696 = vmatpush.msra.mxu0 %v464
    %697 = vmatmul.f32.gmra.mxu0 %v540
    %v698 = vpop.f32.mrf.mxu0
    %v699 = vadd.f32 %v481, %v698
    %700 = vmatmul.f32.gmra.mxu0 %v543
    %v701 = vpop.f32.mrf.mxu0
    %v702 = vadd.f32 %v486, %v701
    %703 = vmatmul.f32.gmra.mxu0 %v546
    %v704 = vpop.f32.mrf.mxu0
    %v705 = vadd.f32 %v491, %v704
    %706 = vmatmul.f32.gmra.mxu0 %v549
    %v707 = vpop.f32.mrf.mxu0
    %v708 = vadd.f32 %v496, %v707
    %709 = vmatmul.f32.gmra.mxu0 %v552
    %v710 = vpop.f32.mrf.mxu0
    %v711 = vadd.f32 %v501, %v710
    %712 = vmatmul.f32.gmra.mxu0 %v555
    %v713 = vpop.f32.mrf.mxu0
    %v714 = vadd.f32 %v506, %v713
    %715 = vmatmul.f32.gmra.mxu0 %v558
    %v716 = vpop.f32.mrf.mxu0
    %v717 = vadd.f32 %v511, %v716
    %718 = vmatmul.f32.gmra.mxu0 %v561
    %v719 = vpop.f32.mrf.mxu0
    %v720 = vadd.f32 %v516, %v719
    %721 = vmatmul.f32.gmra.mxu0 %v564
    %v722 = vpop.f32.mrf.mxu0
    %v723 = vadd.f32 %v521, %v722
    %724 = vmatmul.f32.gmra.mxu0 %v567
    %v725 = vpop.f32.mrf.mxu0
    %v726 = vadd.f32 %v526, %v725
    %727 = vmatmul.f32.gmra.mxu0 %v570
    %v728 = vpop.f32.mrf.mxu0
    %v729 = vadd.f32 %v531, %v728
    %730 = vmatmul.f32.gmra.mxu0 %v573
    %v731 = vpop.f32.mrf.mxu0
    %v732 = vadd.f32 %v536, %v731
    %733 = vdwg.mxu0
    %734 = vmatpush.msra.mxu0 0.0
    %735 = vmatpush.msra.mxu0 0.0
    %736 = vmatpush.msra.mxu0 0.0
    %737 = vmatpush.msra.mxu0 0.0
    %738 = vmatpush.msra.mxu0 0.0
    %739 = vmatpush.msra.mxu0 0.0
    %740 = vmatpush.msra.mxu0 0.0
    %741 = vmatpush.msra.mxu0 0.0
    %742 = vmatpush.msra.mxu0 0.0
    %743 = vmatpush.msra.mxu0 0.0
    %744 = vmatpush.msra.mxu0 0.0
    %745 = vmatpush.msra.mxu0 0.0
    %746 = vmatpush.msra.mxu0 0.0
    %747 = vmatpush.msra.mxu0 0.0
    %748 = vmatpush.msra.mxu0 0.0
    %749 = vmatpush.msra.mxu0 %v465
    %750 = vmatmul.f32.gmra.mxu0 %v540
    %v751 = vpop.f32.mrf.mxu0
    %v752 = vadd.f32 %v481, %v751
    %753 = vmatmul.f32.gmra.mxu0 %v543
    %v754 = vpop.f32.mrf.mxu0
    %v755 = vadd.f32 %v486, %v754
    %756 = vmatmul.f32.gmra.mxu0 %v546
    %v757 = vpop.f32.mrf.mxu0
    %v758 = vadd.f32 %v491, %v757
    %759 = vmatmul.f32.gmra.mxu0 %v549
    %v760 = vpop.f32.mrf.mxu0
    %v761 = vadd.f32 %v496, %v760
    %762 = vmatmul.f32.gmra.mxu0 %v552
    %v763 = vpop.f32.mrf.mxu0
    %v764 = vadd.f32 %v501, %v763
    %765 = vmatmul.f32.gmra.mxu0 %v555
    %v766 = vpop.f32.mrf.mxu0
    %v767 = vadd.f32 %v506, %v766
    %768 = vmatmul.f32.gmra.mxu0 %v558
    %v769 = vpop.f32.mrf.mxu0
    %v770 = vadd.f32 %v511, %v769
    %771 = vmatmul.f32.gmra.mxu0 %v561
    %v772 = vpop.f32.mrf.mxu0
    %v773 = vadd.f32 %v516, %v772
    %774 = vmatmul.f32.gmra.mxu0 %v564
    %v775 = vpop.f32.mrf.mxu0
    %v776 = vadd.f32 %v521, %v775
    %777 = vmatmul.f32.gmra.mxu0 %v567
    %v778 = vpop.f32.mrf.mxu0
    %v779 = vadd.f32 %v526, %v778
    %780 = vmatmul.f32.gmra.mxu0 %v570
    %v781 = vpop.f32.mrf.mxu0
    %v782 = vadd.f32 %v531, %v781
    %783 = vmatmul.f32.gmra.mxu0 %v573
    %v784 = vpop.f32.mrf.mxu0
    %v785 = vadd.f32 %v536, %v784
    %786 = vdwg.mxu0
    %v787 = vtanh.pop %v593
    %v788 = vtanh.pop %v646
    %v789 = vtanh.pop %v699
    %v790 = vtanh.pop %v752
    %v791 = vtanh.pop %v596
    %v792 = vtanh.pop %v649
    %v793 = vtanh.pop %v702
    %v794 = vtanh.pop %v755
    %v795 = vtanh.pop %v599
    %v796 = vtanh.pop %v652
    %v797 = vtanh.pop %v705
    %v798 = vtanh.pop %v758
    %v799 = vtanh.pop %v602
    %v800 = vtanh.pop %v655
    %v801 = vtanh.pop %v708
    %v802 = vtanh.pop %v761
    %v803 = vtanh.pop %v605
    %v804 = vtanh.pop %v658
    %v805 = vtanh.pop %v711
    %v806 = vtanh.pop %v764
    %v807 = vtanh.pop %v608
    %v808 = vtanh.pop %v661
    %v809 = vtanh.pop %v714
    %v810 = vtanh.pop %v767
    %v811 = vtanh.pop %v611
    %v812 = vtanh.pop %v664
    %v813 = vtanh.pop %v717
    %v814 = vtanh.pop %v770
    %v815 = vtanh.pop %v614
    %v816 = vtanh.pop %v667
    %v817 = vtanh.pop %v720
    %v818 = vtanh.pop %v773
    %v819 = vadd.f32 %v787, %v803
    %v820 = vadd.f32 %v788, %v804
    %v821 = vadd.f32 %v789, %v805
    %v822 = vadd.f32 %v790, %v806
    %v823 = vadd.f32 %v791, %v807
    %v824 = vadd.f32 %v792, %v808
    %v825 = vadd.f32 %v793, %v809
    %v826 = vadd.f32 %v794, %v810
    %v827 = vadd.f32 %v795, %v811
    %v828 = vadd.f32 %v796, %v812
    %v829 = vadd.f32 %v797, %v813
    %v830 = vadd.f32 %v798, %v814
    %v831 = vadd.f32 %v799, %v815
    %v832 = vadd.f32 %v800, %v816
    %v833 = vadd.f32 %v801, %v817
    %v834 = vadd.f32 %v802, %v818
    %v835 = vtanh.pop %v617
    %v836 = vtanh.pop %v670
    %v837 = vtanh.pop %v723
    %v838 = vtanh.pop %v776
    %v839 = vtanh.pop %v620
    %v840 = vtanh.pop %v673
    %v841 = vtanh.pop %v726
    %v842 = vtanh.pop %v779
    %v843 = vtanh.pop %v623
    %v844 = vtanh.pop %v676
    %v845 = vtanh.pop %v729
    %v846 = vtanh.pop %v782
    %v847 = vtanh.pop %v626
    %v848 = vtanh.pop %v679
    %v849 = vtanh.pop %v732
    %v850 = vtanh.pop %v785
    %v851 = vadd.f32 %v819, %v835
    %v852 = vadd.f32 %v820, %v836
    %v853 = vadd.f32 %v821, %v837
    %v854 = vadd.f32 %v822, %v838
    %v855 = vadd.f32 %v823, %v839
    %v856 = vadd.f32 %v824, %v840
    %v857 = vadd.f32 %v825, %v841
    %v858 = vadd.f32 %v826, %v842
    %v859 = vadd.f32 %v827, %v843
    %v860 = vadd.f32 %v828, %v844
    %v861 = vadd.f32 %v829, %v845
    %v862 = vadd.f32 %v830, %v846
    %v863 = vadd.f32 %v831, %v847
    %v864 = vadd.f32 %v832, %v848
    %v865 = vadd.f32 %v833, %v849
    %v866 = vadd.f32 %v834, %v850
    %v867 = vtanh.pop %v851
    %v868 = vtanh.pop %v852
    %v869 = vtanh.pop %v853
    %v870 = vtanh.pop %v854
    %v871 = vtanh.pop %v855
    %v872 = vtanh.pop %v856
    %v873 = vtanh.pop %v857
    %v874 = vtanh.pop %v858
    %v875 = vtanh.pop %v859
    %v876 = vtanh.pop %v860
    %v877 = vtanh.pop %v861
    %v878 = vtanh.pop %v862
    %v879 = vtanh.pop %v863
    %v880 = vtanh.pop %v864
    %v881 = vtanh.pop %v865
    %v882 = vtanh.pop %v866
    %883 = vst [vmem:[#allocation3] sm:$0xff] %v867
    %884 = vst [vmem:[#allocation3 + $0x8] sm:$0xff] %v868
    %885 = vst [vmem:[#allocation3 + $0x10] sm:$0xff] %v869
    %886 = vst [vmem:[#allocation3 + $0x18] sm:$0xff] %v870
    %887 = vst [vmem:[#allocation3 + $0x20] sm:$0xff] %v871
    %888 = vst [vmem:[#allocation3 + $0x28] sm:$0xff] %v872
    %889 = vst [vmem:[#allocation3 + $0x30] sm:$0xff] %v873
    %890 = vst [vmem:[#allocation3 + $0x38] sm:$0xff] %v874
    %891 = vst [vmem:[#allocation3 + $0x40] sm:$0xff] %v875
    %892 = vst [vmem:[#allocation3 + $0x48] sm:$0xff] %v876
    %893 = vst [vmem:[#allocation3 + $0x50] sm:$0xff] %v877
    %894 = vst [vmem:[#allocation3 + $0x58] sm:$0xff] %v878
    %895 = vst [vmem:[#allocation3 + $0x60] sm:$0xff] %v879
    %896 = vst [vmem:[#allocation3 + $0x68] sm:$0xff] %v880
    %897 = vst [vmem:[#allocation3 + $0x70] sm:$0xff] %v881
    %898 = vst [vmem:[#allocation3 + $0x78] sm:$0xff] %v882
    %v899 = vld [vmem:[#allocation3] sm:$0xff]
    %v900 = vld [vmem:[#allocation3 + $0x8] sm:$0xff]
    %v901 = vld [vmem:[#allocation3 + $0x10] sm:$0xff]
    %v902 = vld [vmem:[#allocation3 + $0x18] sm:$0xff]
    %v903 = vld [vmem:[#allocation3 + $0x20] sm:$0xff]
    %v904 = vld [vmem:[#allocation3 + $0x28] sm:$0xff]
    %v905 = vld [vmem:[#allocation3 + $0x30] sm:$0xff]
    %v906 = vld [vmem:[#allocation3 + $0x38] sm:$0xff]
    %v907 = vld [vmem:[#allocation3 + $0x40] sm:$0xff]
    %v908 = vld [vmem:[#allocation3 + $0x48] sm:$0xff]
    %v909 = vld [vmem:[#allocation3 + $0x50] sm:$0xff]
    %v910 = vld [vmem:[#allocation3 + $0x58] sm:$0xff]
    %v911 = vld [vmem:[#allocation3 + $0x60] sm:$0xff]
    %v912 = vld [vmem:[#allocation3 + $0x68] sm:$0xff]
    %v913 = vld [vmem:[#allocation3 + $0x70] sm:$0xff]
    %v914 = vld [vmem:[#allocation3 + $0x78] sm:$0xff]
    %915 = vrot.lane.b32.xlu0 %v899, 3
    %v916 = vpop.permute.xlu0 %915
    %917 = vrot.lane.b32.xlu0 %v903, 3
    %v918 = vpop.permute.xlu0 %917
    %919 = vrot.lane.b32.xlu0 %v907, 3
    %v920 = vpop.permute.xlu0 %919
    %921 = vrot.lane.b32.xlu0 %v911, 3
    %v922 = vpop.permute.xlu0 %921
    %923 = vrot.lane.b32.xlu0 %v900, 3
    %v924 = vpop.permute.xlu0 %923
    %925 = vrot.lane.b32.xlu0 %v904, 3
    %v926 = vpop.permute.xlu0 %925
    %927 = vrot.lane.b32.xlu0 %v908, 3
    %v928 = vpop.permute.xlu0 %927
    %929 = vrot.lane.b32.xlu0 %v912, 3
    %v930 = vpop.permute.xlu0 %929
    %931 = vrot.lane.b32.xlu0 %v901, 3
    %v932 = vpop.permute.xlu0 %931
    %933 = vrot.lane.b32.xlu0 %v905, 3
    %v934 = vpop.permute.xlu0 %933
    %935 = vrot.lane.b32.xlu0 %v909, 3
    %v936 = vpop.permute.xlu0 %935
    %937 = vrot.lane.b32.xlu0 %v913, 3
    %v938 = vpop.permute.xlu0 %937
    %939 = vrot.lane.b32.xlu0 %v902, 3
    %v940 = vpop.permute.xlu0 %939
    %941 = vrot.lane.b32.xlu0 %v906, 3
    %v942 = vpop.permute.xlu0 %941
    %943 = vrot.lane.b32.xlu0 %v910, 3
    %v944 = vpop.permute.xlu0 %943
    %945 = vrot.lane.b32.xlu0 %v914, 3
    %v946 = vpop.permute.xlu0 %945
    %v947 = vsel %vm120, %v932, %v940
    %v948 = vsel %vm120, %v934, %v942
    %v949 = vsel %vm120, %v936, %v944
    %v950 = vsel %vm120, %v938, %v946
    %v951 = vsel %vm120, %v924, %v932
    %v952 = vsel %vm120, %v926, %v934
    %v953 = vsel %vm120, %v928, %v936
    %v954 = vsel %vm120, %v930, %v938
    %v955 = vsel %vm120, %v916, %v924
    %v956 = vsel %vm120, %v918, %v926
    %v957 = vsel %vm120, %v920, %v928
    %v958 = vsel %vm120, %v922, %v930
    %v959 = vsel %vm120, %v940, %v916
    %v960 = vsel %vm120, %v942, %v918
    %v961 = vsel %vm120, %v944, %v920
    %v962 = vsel %vm120, %v946, %v922
    %v963 = vsel %vm137, 1, 0
    %v964 = vsel %vm138, 1, 0
    %v965 = vsel %vm139, 1, 0
    %v966 = vsel %vm140, 1, 0
    %vm967 = vcmp.eq.s32.totalorder %v963, 1
    %vm968 = vcmp.eq.s32.totalorder %v964, 1
    %vm969 = vcmp.eq.s32.totalorder %v965, 1
    %vm970 = vcmp.eq.s32.totalorder %v966, 1
    %v971 = vsel %vm967, %v959, 0.0
    %v972 = vsel %vm968, %v955, 0.0
    %v973 = vsel %vm969, %v951, 0.0
    %v974 = vsel %vm970, %v947, 0.0
    %v975 = vsel %vm967, %v960, 0.0
    %v976 = vsel %vm968, %v956, 0.0
    %v977 = vsel %vm969, %v952, 0.0
    %v978 = vsel %vm970, %v948, 0.0
    %v979 = vsel %vm967, %v961, 0.0
    %v980 = vsel %vm968, %v957, 0.0
    %v981 = vsel %vm969, %v953, 0.0
    %v982 = vsel %vm970, %v949, 0.0
    %v983 = vsel %vm967, %v962, 0.0
    %v984 = vsel %vm968, %v958, 0.0
    %v985 = vsel %vm969, %v954, 0.0
    %v986 = vsel %vm970, %v950, 0.0
    %987 = vst [vmem:[#allocation2] sm:$0xff] %v971
    %988 = vst [vmem:[#allocation2 + $0x8] sm:$0xff] %v972
    %989 = vst [vmem:[#allocation2 + $0x10] sm:$0xff] %v973
    %990 = vst [vmem:[#allocation2 + $0x18] sm:$0xff] %v974
    %991 = vst [vmem:[#allocation2 + $0x20] sm:$0xff] %v975
    %992 = vst [vmem:[#allocation2 + $0x28] sm:$0xff] %v976
    %993 = vst [vmem:[#allocation2 + $0x30] sm:$0xff] %v977
    %994 = vst [vmem:[#allocation2 + $0x38] sm:$0xff] %v978
    %995 = vst [vmem:[#allocation2 + $0x40] sm:$0xff] %v979
    %996 = vst [vmem:[#allocation2 + $0x48] sm:$0xff] %v980
    %997 = vst [vmem:[#allocation2 + $0x50] sm:$0xff] %v981
    %998 = vst [vmem:[#allocation2 + $0x58] sm:$0xff] %v982
    %999 = vst [vmem:[#allocation2 + $0x60] sm:$0xff] %v983
    %1000 = vst [vmem:[#allocation2 + $0x68] sm:$0xff] %v984
    %1001 = vst [vmem:[#allocation2 + $0x70] sm:$0xff] %v985
    %1002 = vst [vmem:[#allocation2 + $0x78] sm:$0xff] %v986
    %1003 = vrot.lane.b32.xlu0 %v899, 2
    %v1004 = vpop.permute.xlu0 %1003
    %1005 = vrot.lane.b32.xlu0 %v903, 2
    %v1006 = vpop.permute.xlu0 %1005
    %1007 = vrot.lane.b32.xlu0 %v907, 2
    %v1008 = vpop.permute.xlu0 %1007
    %1009 = vrot.lane.b32.xlu0 %v911, 2
    %v1010 = vpop.permute.xlu0 %1009
    %1011 = vrot.lane.b32.xlu0 %v900, 2
    %v1012 = vpop.permute.xlu0 %1011
    %1013 = vrot.lane.b32.xlu0 %v904, 2
    %v1014 = vpop.permute.xlu0 %1013
    %1015 = vrot.lane.b32.xlu0 %v908, 2
    %v1016 = vpop.permute.xlu0 %1015
    %1017 = vrot.lane.b32.xlu0 %v912, 2
    %v1018 = vpop.permute.xlu0 %1017
    %1019 = vrot.lane.b32.xlu0 %v901, 2
    %v1020 = vpop.permute.xlu0 %1019
    %1021 = vrot.lane.b32.xlu0 %v905, 2
    %v1022 = vpop.permute.xlu0 %1021
    %1023 = vrot.lane.b32.xlu0 %v909, 2
    %v1024 = vpop.permute.xlu0 %1023
    %1025 = vrot.lane.b32.xlu0 %v913, 2
    %v1026 = vpop.permute.xlu0 %1025
    %1027 = vrot.lane.b32.xlu0 %v902, 2
    %v1028 = vpop.permute.xlu0 %1027
    %1029 = vrot.lane.b32.xlu0 %v906, 2
    %v1030 = vpop.permute.xlu0 %1029
    %1031 = vrot.lane.b32.xlu0 %v910, 2
    %v1032 = vpop.permute.xlu0 %1031
    %1033 = vrot.lane.b32.xlu0 %v914, 2
    %v1034 = vpop.permute.xlu0 %1033
    %v1035 = vsel %vm173, %v1020, %v1028
    %v1036 = vsel %vm173, %v1022, %v1030
    %v1037 = vsel %vm173, %v1024, %v1032
    %v1038 = vsel %vm173, %v1026, %v1034
    %v1039 = vsel %vm173, %v1012, %v1020
    %v1040 = vsel %vm173, %v1014, %v1022
    %v1041 = vsel %vm173, %v1016, %v1024
    %v1042 = vsel %vm173, %v1018, %v1026
    %v1043 = vsel %vm173, %v1004, %v1012
    %v1044 = vsel %vm173, %v1006, %v1014
    %v1045 = vsel %vm173, %v1008, %v1016
    %v1046 = vsel %vm173, %v1010, %v1018
    %v1047 = vsel %vm173, %v1028, %v1004
    %v1048 = vsel %vm173, %v1030, %v1006
    %v1049 = vsel %vm173, %v1032, %v1008
    %v1050 = vsel %vm173, %v1034, %v1010
    %v1051 = vsel %vm190, 1, 0
    %v1052 = vsel %vm191, 1, 0
    %v1053 = vsel %vm192, 1, 0
    %v1054 = vsel %vm193, 1, 0
    %vm1055 = vcmp.eq.s32.totalorder %v1051, 1
    %vm1056 = vcmp.eq.s32.totalorder %v1052, 1
    %vm1057 = vcmp.eq.s32.totalorder %v1053, 1
    %vm1058 = vcmp.eq.s32.totalorder %v1054, 1
    %v1059 = vsel %vm1055, %v1047, 0.0
    %v1060 = vsel %vm1056, %v1043, 0.0
    %v1061 = vsel %vm1057, %v1039, 0.0
    %v1062 = vsel %vm1058, %v1035, 0.0
    %v1063 = vsel %vm1055, %v1048, 0.0
    %v1064 = vsel %vm1056, %v1044, 0.0
    %v1065 = vsel %vm1057, %v1040, 0.0
    %v1066 = vsel %vm1058, %v1036, 0.0
    %v1067 = vsel %vm1055, %v1049, 0.0
    %v1068 = vsel %vm1056, %v1045, 0.0
    %v1069 = vsel %vm1057, %v1041, 0.0
    %v1070 = vsel %vm1058, %v1037, 0.0
    %v1071 = vsel %vm1055, %v1050, 0.0
    %v1072 = vsel %vm1056, %v1046, 0.0
    %v1073 = vsel %vm1057, %v1042, 0.0
    %v1074 = vsel %vm1058, %v1038, 0.0
    %1075 = vst [vmem:[#allocation2 + $0x80] sm:$0xff] %v1059
    %1076 = vst [vmem:[#allocation2 + $0x88] sm:$0xff] %v1060
    %1077 = vst [vmem:[#allocation2 + $0x90] sm:$0xff] %v1061
    %1078 = vst [vmem:[#allocation2 + $0x98] sm:$0xff] %v1062
    %1079 = vst [vmem:[#allocation2 + $0xa0] sm:$0xff] %v1063
    %1080 = vst [vmem:[#allocation2 + $0xa8] sm:$0xff] %v1064
    %1081 = vst [vmem:[#allocation2 + $0xb0] sm:$0xff] %v1065
    %1082 = vst [vmem:[#allocation2 + $0xb8] sm:$0xff] %v1066
    %1083 = vst [vmem:[#allocation2 + $0xc0] sm:$0xff] %v1067
    %1084 = vst [vmem:[#allocation2 + $0xc8] sm:$0xff] %v1068
    %1085 = vst [vmem:[#allocation2 + $0xd0] sm:$0xff] %v1069
    %1086 = vst [vmem:[#allocation2 + $0xd8] sm:$0xff] %v1070
    %1087 = vst [vmem:[#allocation2 + $0xe0] sm:$0xff] %v1071
    %1088 = vst [vmem:[#allocation2 + $0xe8] sm:$0xff] %v1072
    %1089 = vst [vmem:[#allocation2 + $0xf0] sm:$0xff] %v1073
    %1090 = vst [vmem:[#allocation2 + $0xf8] sm:$0xff] %v1074
    %1091 = vrot.lane.b32.xlu0 %v899, 1
    %v1092 = vpop.permute.xlu0 %1091
    %1093 = vrot.lane.b32.xlu0 %v903, 1
    %v1094 = vpop.permute.xlu0 %1093
    %1095 = vrot.lane.b32.xlu0 %v907, 1
    %v1096 = vpop.permute.xlu0 %1095
    %1097 = vrot.lane.b32.xlu0 %v911, 1
    %v1098 = vpop.permute.xlu0 %1097
    %1099 = vrot.lane.b32.xlu0 %v900, 1
    %v1100 = vpop.permute.xlu0 %1099
    %1101 = vrot.lane.b32.xlu0 %v904, 1
    %v1102 = vpop.permute.xlu0 %1101
    %1103 = vrot.lane.b32.xlu0 %v908, 1
    %v1104 = vpop.permute.xlu0 %1103
    %1105 = vrot.lane.b32.xlu0 %v912, 1
    %v1106 = vpop.permute.xlu0 %1105
    %1107 = vrot.lane.b32.xlu0 %v901, 1
    %v1108 = vpop.permute.xlu0 %1107
    %1109 = vrot.lane.b32.xlu0 %v905, 1
    %v1110 = vpop.permute.xlu0 %1109
    %1111 = vrot.lane.b32.xlu0 %v909, 1
    %v1112 = vpop.permute.xlu0 %1111
    %1113 = vrot.lane.b32.xlu0 %v913, 1
    %v1114 = vpop.permute.xlu0 %1113
    %1115 = vrot.lane.b32.xlu0 %v902, 1
    %v1116 = vpop.permute.xlu0 %1115
    %1117 = vrot.lane.b32.xlu0 %v906, 1
    %v1118 = vpop.permute.xlu0 %1117
    %1119 = vrot.lane.b32.xlu0 %v910, 1
    %v1120 = vpop.permute.xlu0 %1119
    %1121 = vrot.lane.b32.xlu0 %v914, 1
    %v1122 = vpop.permute.xlu0 %1121
    %v1123 = vsel %vm220, %v1108, %v1116
    %v1124 = vsel %vm220, %v1110, %v1118
    %v1125 = vsel %vm220, %v1112, %v1120
    %v1126 = vsel %vm220, %v1114, %v1122
    %v1127 = vsel %vm220, %v1100, %v1108
    %v1128 = vsel %vm220, %v1102, %v1110
    %v1129 = vsel %vm220, %v1104, %v1112
    %v1130 = vsel %vm220, %v1106, %v1114
    %v1131 = vsel %vm220, %v1092, %v1100
    %v1132 = vsel %vm220, %v1094, %v1102
    %v1133 = vsel %vm220, %v1096, %v1104
    %v1134 = vsel %vm220, %v1098, %v1106
    %v1135 = vsel %vm220, %v1116, %v1092
    %v1136 = vsel %vm220, %v1118, %v1094
    %v1137 = vsel %vm220, %v1120, %v1096
    %v1138 = vsel %vm220, %v1122, %v1098
    %v1139 = vsel %vm237, 1, 0
    %v1140 = vsel %vm238, 1, 0
    %v1141 = vsel %vm239, 1, 0
    %v1142 = vsel %vm240, 1, 0
    %vm1143 = vcmp.eq.s32.totalorder %v1139, 1
    %vm1144 = vcmp.eq.s32.totalorder %v1140, 1
    %vm1145 = vcmp.eq.s32.totalorder %v1141, 1
    %vm1146 = vcmp.eq.s32.totalorder %v1142, 1
    %v1147 = vsel %vm1143, %v1135, 0.0
    %v1148 = vsel %vm1144, %v1131, 0.0
    %v1149 = vsel %vm1145, %v1127, 0.0
    %v1150 = vsel %vm1146, %v1123, 0.0
    %v1151 = vsel %vm1143, %v1136, 0.0
    %v1152 = vsel %vm1144, %v1132, 0.0
    %v1153 = vsel %vm1145, %v1128, 0.0
    %v1154 = vsel %vm1146, %v1124, 0.0
    %v1155 = vsel %vm1143, %v1137, 0.0
    %v1156 = vsel %vm1144, %v1133, 0.0
    %v1157 = vsel %vm1145, %v1129, 0.0
    %v1158 = vsel %vm1146, %v1125, 0.0
    %v1159 = vsel %vm1143, %v1138, 0.0
    %v1160 = vsel %vm1144, %v1134, 0.0
    %v1161 = vsel %vm1145, %v1130, 0.0
    %v1162 = vsel %vm1146, %v1126, 0.0
    %1163 = vst [vmem:[#allocation2 + $0x100] sm:$0xff] %v1147
    %1164 = vst [vmem:[#allocation2 + $0x108] sm:$0xff] %v1148
    %1165 = vst [vmem:[#allocation2 + $0x110] sm:$0xff] %v1149
    %1166 = vst [vmem:[#allocation2 + $0x118] sm:$0xff] %v1150
    %1167 = vst [vmem:[#allocation2 + $0x120] sm:$0xff] %v1151
    %1168 = vst [vmem:[#allocation2 + $0x128] sm:$0xff] %v1152
    %1169 = vst [vmem:[#allocation2 + $0x130] sm:$0xff] %v1153
    %1170 = vst [vmem:[#allocation2 + $0x138] sm:$0xff] %v1154
    %1171 = vst [vmem:[#allocation2 + $0x140] sm:$0xff] %v1155
    %1172 = vst [vmem:[#allocation2 + $0x148] sm:$0xff] %v1156
    %1173 = vst [vmem:[#allocation2 + $0x150] sm:$0xff] %v1157
    %1174 = vst [vmem:[#allocation2 + $0x158] sm:$0xff] %v1158
    %1175 = vst [vmem:[#allocation2 + $0x160] sm:$0xff] %v1159
    %1176 = vst [vmem:[#allocation2 + $0x168] sm:$0xff] %v1160
    %1177 = vst [vmem:[#allocation2 + $0x170] sm:$0xff] %v1161
    %1178 = vst [vmem:[#allocation2 + $0x178] sm:$0xff] %v1162
    %1179 = vst [vmem:[#allocation2 + $0x180] sm:$0xff] %v899
    %1180 = vst [vmem:[#allocation2 + $0x188] sm:$0xff] %v900
    %1181 = vst [vmem:[#allocation2 + $0x190] sm:$0xff] %v901
    %1182 = vst [vmem:[#allocation2 + $0x198] sm:$0xff] %v902
    %1183 = vst [vmem:[#allocation2 + $0x1a0] sm:$0xff] %v903
    %1184 = vst [vmem:[#allocation2 + $0x1a8] sm:$0xff] %v904
    %1185 = vst [vmem:[#allocation2 + $0x1b0] sm:$0xff] %v905
    %1186 = vst [vmem:[#allocation2 + $0x1b8] sm:$0xff] %v906
    %1187 = vst [vmem:[#allocation2 + $0x1c0] sm:$0xff] %v907
    %1188 = vst [vmem:[#allocation2 + $0x1c8] sm:$0xff] %v908
    %1189 = vst [vmem:[#allocation2 + $0x1d0] sm:$0xff] %v909
    %1190 = vst [vmem:[#allocation2 + $0x1d8] sm:$0xff] %v910
    %1191 = vst [vmem:[#allocation2 + $0x1e0] sm:$0xff] %v911
    %1192 = vst [vmem:[#allocation2 + $0x1e8] sm:$0xff] %v912
    %1193 = vst [vmem:[#allocation2 + $0x1f0] sm:$0xff] %v913
    %1194 = vst [vmem:[#allocation2 + $0x1f8] sm:$0xff] %v914
    %1195 = vrot.lane.b32.xlu0 %v899, 127
    %v1196 = vpop.permute.xlu0 %1195
    %1197 = vrot.lane.b32.xlu0 %v903, 127
    %v1198 = vpop.permute.xlu0 %1197
    %1199 = vrot.lane.b32.xlu0 %v907, 127
    %v1200 = vpop.permute.xlu0 %1199
    %1201 = vrot.lane.b32.xlu0 %v911, 127
    %v1202 = vpop.permute.xlu0 %1201
    %1203 = vrot.lane.b32.xlu0 %v900, 127
    %v1204 = vpop.permute.xlu0 %1203
    %1205 = vrot.lane.b32.xlu0 %v904, 127
    %v1206 = vpop.permute.xlu0 %1205
    %1207 = vrot.lane.b32.xlu0 %v908, 127
    %v1208 = vpop.permute.xlu0 %1207
    %1209 = vrot.lane.b32.xlu0 %v912, 127
    %v1210 = vpop.permute.xlu0 %1209
    %1211 = vrot.lane.b32.xlu0 %v901, 127
    %v1212 = vpop.permute.xlu0 %1211
    %1213 = vrot.lane.b32.xlu0 %v905, 127
    %v1214 = vpop.permute.xlu0 %1213
    %1215 = vrot.lane.b32.xlu0 %v909, 127
    %v1216 = vpop.permute.xlu0 %1215
    %1217 = vrot.lane.b32.xlu0 %v913, 127
    %v1218 = vpop.permute.xlu0 %1217
    %1219 = vrot.lane.b32.xlu0 %v902, 127
    %v1220 = vpop.permute.xlu0 %1219
    %1221 = vrot.lane.b32.xlu0 %v906, 127
    %v1222 = vpop.permute.xlu0 %1221
    %1223 = vrot.lane.b32.xlu0 %v910, 127
    %v1224 = vpop.permute.xlu0 %1223
    %1225 = vrot.lane.b32.xlu0 %v914, 127
    %v1226 = vpop.permute.xlu0 %1225
    %v1227 = vsel %vm270, %v1212, %v1220
    %v1228 = vsel %vm270, %v1214, %v1222
    %v1229 = vsel %vm270, %v1216, %v1224
    %v1230 = vsel %vm270, %v1218, %v1226
    %v1231 = vsel %vm270, %v1204, %v1212
    %v1232 = vsel %vm270, %v1206, %v1214
    %v1233 = vsel %vm270, %v1208, %v1216
    %v1234 = vsel %vm270, %v1210, %v1218
    %v1235 = vsel %vm270, %v1196, %v1204
    %v1236 = vsel %vm270, %v1198, %v1206
    %v1237 = vsel %vm270, %v1200, %v1208
    %v1238 = vsel %vm270, %v1202, %v1210
    %v1239 = vsel %vm270, %v1220, %v1196
    %v1240 = vsel %vm270, %v1222, %v1198
    %v1241 = vsel %vm270, %v1224, %v1200
    %v1242 = vsel %vm270, %v1226, %v1202
    %v1243 = vsel %vm287, 1, 0
    %v1244 = vsel %vm288, 1, 0
    %v1245 = vsel %vm289, 1, 0
    %v1246 = vsel %vm290, 1, 0
    %vm1247 = vcmp.eq.s32.totalorder %v1243, 1
    %vm1248 = vcmp.eq.s32.totalorder %v1244, 1
    %vm1249 = vcmp.eq.s32.totalorder %v1245, 1
    %vm1250 = vcmp.eq.s32.totalorder %v1246, 1
    %v1251 = vsel %vm1247, %v1235, 0.0
    %v1252 = vsel %vm1248, %v1231, 0.0
    %v1253 = vsel %vm1249, %v1227, 0.0
    %v1254 = vsel %vm1250, %v1239, 0.0
    %v1255 = vsel %vm1247, %v1236, 0.0
    %v1256 = vsel %vm1248, %v1232, 0.0
    %v1257 = vsel %vm1249, %v1228, 0.0
    %v1258 = vsel %vm1250, %v1240, 0.0
    %v1259 = vsel %vm1247, %v1237, 0.0
    %v1260 = vsel %vm1248, %v1233, 0.0
    %v1261 = vsel %vm1249, %v1229, 0.0
    %v1262 = vsel %vm1250, %v1241, 0.0
    %v1263 = vsel %vm1247, %v1238, 0.0
    %v1264 = vsel %vm1248, %v1234, 0.0
    %v1265 = vsel %vm1249, %v1230, 0.0
    %v1266 = vsel %vm1250, %v1242, 0.0
    %1267 = vst [vmem:[#allocation2 + $0x200] sm:$0xff] %v1251
    %1268 = vst [vmem:[#allocation2 + $0x208] sm:$0xff] %v1252
    %1269 = vst [vmem:[#allocation2 + $0x210] sm:$0xff] %v1253
    %1270 = vst [vmem:[#allocation2 + $0x218] sm:$0xff] %v1254
    %1271 = vst [vmem:[#allocation2 + $0x220] sm:$0xff] %v1255
    %1272 = vst [vmem:[#allocation2 + $0x228] sm:$0xff] %v1256
    %1273 = vst [vmem:[#allocation2 + $0x230] sm:$0xff] %v1257
    %1274 = vst [vmem:[#allocation2 + $0x238] sm:$0xff] %v1258
    %1275 = vst [vmem:[#allocation2 + $0x240] sm:$0xff] %v1259
    %1276 = vst [vmem:[#allocation2 + $0x248] sm:$0xff] %v1260
    %1277 = vst [vmem:[#allocation2 + $0x250] sm:$0xff] %v1261
    %1278 = vst [vmem:[#allocation2 + $0x258] sm:$0xff] %v1262
    %1279 = vst [vmem:[#allocation2 + $0x260] sm:$0xff] %v1263
    %1280 = vst [vmem:[#allocation2 + $0x268] sm:$0xff] %v1264
    %1281 = vst [vmem:[#allocation2 + $0x270] sm:$0xff] %v1265
    %1282 = vst [vmem:[#allocation2 + $0x278] sm:$0xff] %v1266
    %1283 = vrot.lane.b32.xlu0 %v899, 126
    %v1284 = vpop.permute.xlu0 %1283
    %1285 = vrot.lane.b32.xlu0 %v903, 126
    %v1286 = vpop.permute.xlu0 %1285
    %1287 = vrot.lane.b32.xlu0 %v907, 126
    %v1288 = vpop.permute.xlu0 %1287
    %1289 = vrot.lane.b32.xlu0 %v911, 126
    %v1290 = vpop.permute.xlu0 %1289
    %1291 = vrot.lane.b32.xlu0 %v900, 126
    %v1292 = vpop.permute.xlu0 %1291
    %1293 = vrot.lane.b32.xlu0 %v904, 126
    %v1294 = vpop.permute.xlu0 %1293
    %1295 = vrot.lane.b32.xlu0 %v908, 126
    %v1296 = vpop.permute.xlu0 %1295
    %1297 = vrot.lane.b32.xlu0 %v912, 126
    %v1298 = vpop.permute.xlu0 %1297
    %1299 = vrot.lane.b32.xlu0 %v901, 126
    %v1300 = vpop.permute.xlu0 %1299
    %1301 = vrot.lane.b32.xlu0 %v905, 126
    %v1302 = vpop.permute.xlu0 %1301
    %1303 = vrot.lane.b32.xlu0 %v909, 126
    %v1304 = vpop.permute.xlu0 %1303
    %1305 = vrot.lane.b32.xlu0 %v913, 126
    %v1306 = vpop.permute.xlu0 %1305
    %1307 = vrot.lane.b32.xlu0 %v902, 126
    %v1308 = vpop.permute.xlu0 %1307
    %1309 = vrot.lane.b32.xlu0 %v906, 126
    %v1310 = vpop.permute.xlu0 %1309
    %1311 = vrot.lane.b32.xlu0 %v910, 126
    %v1312 = vpop.permute.xlu0 %1311
    %1313 = vrot.lane.b32.xlu0 %v914, 126
    %v1314 = vpop.permute.xlu0 %1313
    %v1315 = vsel %vm317, %v1300, %v1308
    %v1316 = vsel %vm317, %v1302, %v1310
    %v1317 = vsel %vm317, %v1304, %v1312
    %v1318 = vsel %vm317, %v1306, %v1314
    %v1319 = vsel %vm317, %v1292, %v1300
    %v1320 = vsel %vm317, %v1294, %v1302
    %v1321 = vsel %vm317, %v1296, %v1304
    %v1322 = vsel %vm317, %v1298, %v1306
    %v1323 = vsel %vm317, %v1284, %v1292
    %v1324 = vsel %vm317, %v1286, %v1294
    %v1325 = vsel %vm317, %v1288, %v1296
    %v1326 = vsel %vm317, %v1290, %v1298
    %v1327 = vsel %vm317, %v1308, %v1284
    %v1328 = vsel %vm317, %v1310, %v1286
    %v1329 = vsel %vm317, %v1312, %v1288
    %v1330 = vsel %vm317, %v1314, %v1290
    %v1331 = vsel %vm334, 1, 0
    %v1332 = vsel %vm335, 1, 0
    %v1333 = vsel %vm336, 1, 0
    %v1334 = vsel %vm337, 1, 0
    %vm1335 = vcmp.eq.s32.totalorder %v1331, 1
    %vm1336 = vcmp.eq.s32.totalorder %v1332, 1
    %vm1337 = vcmp.eq.s32.totalorder %v1333, 1
    %vm1338 = vcmp.eq.s32.totalorder %v1334, 1
    %v1339 = vsel %vm1335, %v1323, 0.0
    %v1340 = vsel %vm1336, %v1319, 0.0
    %v1341 = vsel %vm1337, %v1315, 0.0
    %v1342 = vsel %vm1338, %v1327, 0.0
    %v1343 = vsel %vm1335, %v1324, 0.0
    %v1344 = vsel %vm1336, %v1320, 0.0
    %v1345 = vsel %vm1337, %v1316, 0.0
    %v1346 = vsel %vm1338, %v1328, 0.0
    %v1347 = vsel %vm1335, %v1325, 0.0
    %v1348 = vsel %vm1336, %v1321, 0.0
    %v1349 = vsel %vm1337, %v1317, 0.0
    %v1350 = vsel %vm1338, %v1329, 0.0
    %v1351 = vsel %vm1335, %v1326, 0.0
    %v1352 = vsel %vm1336, %v1322, 0.0
    %v1353 = vsel %vm1337, %v1318, 0.0
    %v1354 = vsel %vm1338, %v1330, 0.0
    %1355 = vst [vmem:[#allocation2 + $0x280] sm:$0xff] %v1339
    %1356 = vst [vmem:[#allocation2 + $0x288] sm:$0xff] %v1340
    %1357 = vst [vmem:[#allocation2 + $0x290] sm:$0xff] %v1341
    %1358 = vst [vmem:[#allocation2 + $0x298] sm:$0xff] %v1342
    %1359 = vst [vmem:[#allocation2 + $0x2a0] sm:$0xff] %v1343
    %1360 = vst [vmem:[#allocation2 + $0x2a8] sm:$0xff] %v1344
    %1361 = vst [vmem:[#allocation2 + $0x2b0] sm:$0xff] %v1345
    %1362 = vst [vmem:[#allocation2 + $0x2b8] sm:$0xff] %v1346
    %1363 = vst [vmem:[#allocation2 + $0x2c0] sm:$0xff] %v1347
    %1364 = vst [vmem:[#allocation2 + $0x2c8] sm:$0xff] %v1348
    %1365 = vst [vmem:[#allocation2 + $0x2d0] sm:$0xff] %v1349
    %1366 = vst [vmem:[#allocation2 + $0x2d8] sm:$0xff] %v1350
    %1367 = vst [vmem:[#allocation2 + $0x2e0] sm:$0xff] %v1351
    %1368 = vst [vmem:[#allocation2 + $0x2e8] sm:$0xff] %v1352
    %1369 = vst [vmem:[#allocation2 + $0x2f0] sm:$0xff] %v1353
    %1370 = vst [vmem:[#allocation2 + $0x2f8] sm:$0xff] %v1354
    %1371 = vrot.lane.b32.xlu0 %v899, 125
    %v1372 = vpop.permute.xlu0 %1371
    %1373 = vrot.lane.b32.xlu0 %v903, 125
    %v1374 = vpop.permute.xlu0 %1373
    %1375 = vrot.lane.b32.xlu0 %v907, 125
    %v1376 = vpop.permute.xlu0 %1375
    %1377 = vrot.lane.b32.xlu0 %v911, 125
    %v1378 = vpop.permute.xlu0 %1377
    %1379 = vrot.lane.b32.xlu0 %v900, 125
    %v1380 = vpop.permute.xlu0 %1379
    %1381 = vrot.lane.b32.xlu0 %v904, 125
    %v1382 = vpop.permute.xlu0 %1381
    %1383 = vrot.lane.b32.xlu0 %v908, 125
    %v1384 = vpop.permute.xlu0 %1383
    %1385 = vrot.lane.b32.xlu0 %v912, 125
    %v1386 = vpop.permute.xlu0 %1385
    %1387 = vrot.lane.b32.xlu0 %v901, 125
    %v1388 = vpop.permute.xlu0 %1387
    %1389 = vrot.lane.b32.xlu0 %v905, 125
    %v1390 = vpop.permute.xlu0 %1389
    %1391 = vrot.lane.b32.xlu0 %v909, 125
    %v1392 = vpop.permute.xlu0 %1391
    %1393 = vrot.lane.b32.xlu0 %v913, 125
    %v1394 = vpop.permute.xlu0 %1393
    %1395 = vrot.lane.b32.xlu0 %v902, 125
    %v1396 = vpop.permute.xlu0 %1395
    %1397 = vrot.lane.b32.xlu0 %v906, 125
    %v1398 = vpop.permute.xlu0 %1397
    %1399 = vrot.lane.b32.xlu0 %v910, 125
    %v1400 = vpop.permute.xlu0 %1399
    %1401 = vrot.lane.b32.xlu0 %v914, 125
    %v1402 = vpop.permute.xlu0 %1401
    %v1403 = vsel %vm364, %v1388, %v1396
    %v1404 = vsel %vm364, %v1390, %v1398
    %v1405 = vsel %vm364, %v1392, %v1400
    %v1406 = vsel %vm364, %v1394, %v1402
    %v1407 = vsel %vm364, %v1380, %v1388
    %v1408 = vsel %vm364, %v1382, %v1390
    %v1409 = vsel %vm364, %v1384, %v1392
    %v1410 = vsel %vm364, %v1386, %v1394
    %v1411 = vsel %vm364, %v1372, %v1380
    %v1412 = vsel %vm364, %v1374, %v1382
    %v1413 = vsel %vm364, %v1376, %v1384
    %v1414 = vsel %vm364, %v1378, %v1386
    %v1415 = vsel %vm364, %v1396, %v1372
    %v1416 = vsel %vm364, %v1398, %v1374
    %v1417 = vsel %vm364, %v1400, %v1376
    %v1418 = vsel %vm364, %v1402, %v1378
    %v1419 = vsel %vm381, 1, 0
    %v1420 = vsel %vm382, 1, 0
    %v1421 = vsel %vm383, 1, 0
    %v1422 = vsel %vm384, 1, 0
    %vm1423 = vcmp.eq.s32.totalorder %v1419, 1
    %vm1424 = vcmp.eq.s32.totalorder %v1420, 1
    %vm1425 = vcmp.eq.s32.totalorder %v1421, 1
    %vm1426 = vcmp.eq.s32.totalorder %v1422, 1
    %v1427 = vsel %vm1423, %v1411, 0.0
    %v1428 = vsel %vm1424, %v1407, 0.0
    %v1429 = vsel %vm1425, %v1403, 0.0
    %v1430 = vsel %vm1426, %v1415, 0.0
    %v1431 = vsel %vm1423, %v1412, 0.0
    %v1432 = vsel %vm1424, %v1408, 0.0
    %v1433 = vsel %vm1425, %v1404, 0.0
    %v1434 = vsel %vm1426, %v1416, 0.0
    %v1435 = vsel %vm1423, %v1413, 0.0
    %v1436 = vsel %vm1424, %v1409, 0.0
    %v1437 = vsel %vm1425, %v1405, 0.0
    %v1438 = vsel %vm1426, %v1417, 0.0
    %v1439 = vsel %vm1423, %v1414, 0.0
    %v1440 = vsel %vm1424, %v1410, 0.0
    %v1441 = vsel %vm1425, %v1406, 0.0
    %v1442 = vsel %vm1426, %v1418, 0.0
    %1443 = vst [vmem:[#allocation2 + $0x300] sm:$0xff] %v1427
    %1444 = vst [vmem:[#allocation2 + $0x308] sm:$0xff] %v1428
    %1445 = vst [vmem:[#allocation2 + $0x310] sm:$0xff] %v1429
    %1446 = vst [vmem:[#allocation2 + $0x318] sm:$0xff] %v1430
    %1447 = vst [vmem:[#allocation2 + $0x320] sm:$0xff] %v1431
    %1448 = vst [vmem:[#allocation2 + $0x328] sm:$0xff] %v1432
    %1449 = vst [vmem:[#allocation2 + $0x330] sm:$0xff] %v1433
    %1450 = vst [vmem:[#allocation2 + $0x338] sm:$0xff] %v1434
    %1451 = vst [vmem:[#allocation2 + $0x340] sm:$0xff] %v1435
    %1452 = vst [vmem:[#allocation2 + $0x348] sm:$0xff] %v1436
    %1453 = vst [vmem:[#allocation2 + $0x350] sm:$0xff] %v1437
    %1454 = vst [vmem:[#allocation2 + $0x358] sm:$0xff] %v1438
    %1455 = vst [vmem:[#allocation2 + $0x360] sm:$0xff] %v1439
    %1456 = vst [vmem:[#allocation2 + $0x368] sm:$0xff] %v1440
    %1457 = vst [vmem:[#allocation2 + $0x370] sm:$0xff] %v1441
    %1458 = vst [vmem:[#allocation2 + $0x378] sm:$0xff] %v1442
    %v1459 = vld [vmem:[%s3] sm:$0xff]
    %v1460 = vld [vmem:[%s3 + $0x8] sm:$0xff]
    %v1461 = vld [vmem:[%s3 + $0x10] sm:$0xff]
    %v1462 = vld [vmem:[%s3 + $0x18] sm:$0xff]
    %v1463 = vld [vmem:[%s3 + $0x20] sm:$0xff]
    %v1464 = vld [vmem:[%s3 + $0x28] sm:$0xff]
    %v1465 = vld [vmem:[%s3 + $0x30] sm:$0xff]
    %v1466 = vld [vmem:[%s3 + $0x38] sm:$0xff]
    %v1467 = vld [vmem:[%s3 + $0x40] sm:$0xff]
    %v1468 = vld [vmem:[%s3 + $0x48] sm:$0xff]
    %v1469 = vld [vmem:[%s3 + $0x50] sm:$0xff]
    %v1470 = vld [vmem:[%s3 + $0x58] sm:$0xff]
    %v1471 = vld [vmem:[%s3 + $0x60] sm:$0xff]
    %v1472 = vld [vmem:[%s3 + $0x68] sm:$0xff]
    %v1473 = vld [vmem:[%s3 + $0x70] sm:$0xff]
    %v1474 = vld [vmem:[%s3 + $0x78] sm:$0xff]
    %v1475 = vld [vmem:[%s3 + $0x80] sm:$0xff]
    %v1476 = vld [vmem:[%s3 + $0x88] sm:$0xff]
    %v1477 = vld [vmem:[%s3 + $0x90] sm:$0xff]
    %v1478 = vld [vmem:[%s3 + $0x98] sm:$0xff]
    %v1479 = vld [vmem:[%s3 + $0xa0] sm:$0xff]
    %v1480 = vld [vmem:[%s3 + $0xa8] sm:$0xff]
    %v1481 = vld [vmem:[%s3 + $0xb0] sm:$0xff]
    %v1482 = vld [vmem:[%s3 + $0xb8] sm:$0xff]
    %v1483 = vld [vmem:[#allocation2] sm:$0xff]
    %v1484 = vld [vmem:[#allocation2 + $0x8] sm:$0xff]
    %v1485 = vld [vmem:[#allocation2 + $0x10] sm:$0xff]
    %v1486 = vld [vmem:[#allocation2 + $0x18] sm:$0xff]
    %v1487 = vld [vmem:[#allocation2 + $0x20] sm:$0xff]
    %v1488 = vld [vmem:[#allocation2 + $0x28] sm:$0xff]
    %v1489 = vld [vmem:[#allocation2 + $0x30] sm:$0xff]
    %v1490 = vld [vmem:[#allocation2 + $0x38] sm:$0xff]
    %v1491 = vld [vmem:[#allocation2 + $0x40] sm:$0xff]
    %v1492 = vld [vmem:[#allocation2 + $0x48] sm:$0xff]
    %v1493 = vld [vmem:[#allocation2 + $0x50] sm:$0xff]
    %v1494 = vld [vmem:[#allocation2 + $0x58] sm:$0xff]
    %v1495 = vld [vmem:[#allocation2 + $0x60] sm:$0xff]
    %v1496 = vld [vmem:[#allocation2 + $0x68] sm:$0xff]
    %v1497 = vld [vmem:[#allocation2 + $0x70] sm:$0xff]
    %v1498 = vld [vmem:[#allocation2 + $0x78] sm:$0xff]
    %v1499 = vld [vmem:[#allocation2 + $0x80] sm:$0xff]
    %v1500 = vld [vmem:[#allocation2 + $0x88] sm:$0xff]
    %v1501 = vld [vmem:[#allocation2 + $0x90] sm:$0xff]
    %v1502 = vld [vmem:[#allocation2 + $0x98] sm:$0xff]
    %v1503 = vld [vmem:[#allocation2 + $0xa0] sm:$0xff]
    %v1504 = vld [vmem:[#allocation2 + $0xa8] sm:$0xff]
    %v1505 = vld [vmem:[#allocation2 + $0xb0] sm:$0xff]
    %v1506 = vld [vmem:[#allocation2 + $0xb8] sm:$0xff]
    %v1507 = vld [vmem:[#allocation2 + $0xc0] sm:$0xff]
    %v1508 = vld [vmem:[#allocation2 + $0xc8] sm:$0xff]
    %v1509 = vld [vmem:[#allocation2 + $0xd0] sm:$0xff]
    %v1510 = vld [vmem:[#allocation2 + $0xd8] sm:$0xff]
    %v1511 = vld [vmem:[#allocation2 + $0xe0] sm:$0xff]
    %v1512 = vld [vmem:[#allocation2 + $0xe8] sm:$0xff]
    %v1513 = vld [vmem:[#allocation2 + $0xf0] sm:$0xff]
    %v1514 = vld [vmem:[#allocation2 + $0xf8] sm:$0xff]
    %v1515 = vld [vmem:[#allocation2 + $0x100] sm:$0xff]
    %v1516 = vld [vmem:[#allocation2 + $0x108] sm:$0xff]
    %v1517 = vld [vmem:[#allocation2 + $0x110] sm:$0xff]
    %v1518 = vld [vmem:[#allocation2 + $0x118] sm:$0xff]
    %v1519 = vld [vmem:[#allocation2 + $0x120] sm:$0xff]
    %v1520 = vld [vmem:[#allocation2 + $0x128] sm:$0xff]
    %v1521 = vld [vmem:[#allocation2 + $0x130] sm:$0xff]
    %v1522 = vld [vmem:[#allocation2 + $0x138] sm:$0xff]
    %v1523 = vld [vmem:[#allocation2 + $0x140] sm:$0xff]
    %v1524 = vld [vmem:[#allocation2 + $0x148] sm:$0xff]
    %v1525 = vld [vmem:[#allocation2 + $0x150] sm:$0xff]
    %v1526 = vld [vmem:[#allocation2 + $0x158] sm:$0xff]
    %v1527 = vld [vmem:[#allocation2 + $0x160] sm:$0xff]
    %v1528 = vld [vmem:[#allocation2 + $0x168] sm:$0xff]
    %v1529 = vld [vmem:[#allocation2 + $0x170] sm:$0xff]
    %v1530 = vld [vmem:[#allocation2 + $0x178] sm:$0xff]
    %v1531 = vld [vmem:[#allocation2 + $0x180] sm:$0xff]
    %v1532 = vld [vmem:[#allocation2 + $0x188] sm:$0xff]
    %v1533 = vld [vmem:[#allocation2 + $0x190] sm:$0xff]
    %v1534 = vld [vmem:[#allocation2 + $0x198] sm:$0xff]
    %v1535 = vld [vmem:[#allocation2 + $0x1a0] sm:$0xff]
    %v1536 = vld [vmem:[#allocation2 + $0x1a8] sm:$0xff]
    %v1537 = vld [vmem:[#allocation2 + $0x1b0] sm:$0xff]
    %v1538 = vld [vmem:[#allocation2 + $0x1b8] sm:$0xff]
    %v1539 = vld [vmem:[#allocation2 + $0x1c0] sm:$0xff]
    %v1540 = vld [vmem:[#allocation2 + $0x1c8] sm:$0xff]
    %v1541 = vld [vmem:[#allocation2 + $0x1d0] sm:$0xff]
    %v1542 = vld [vmem:[#allocation2 + $0x1d8] sm:$0xff]
    %v1543 = vld [vmem:[#allocation2 + $0x1e0] sm:$0xff]
    %v1544 = vld [vmem:[#allocation2 + $0x1e8] sm:$0xff]
    %v1545 = vld [vmem:[#allocation2 + $0x1f0] sm:$0xff]
    %v1546 = vld [vmem:[#allocation2 + $0x1f8] sm:$0xff]
    %v1547 = vld [vmem:[#allocation2 + $0x200] sm:$0xff]
    %v1548 = vld [vmem:[#allocation2 + $0x208] sm:$0xff]
    %v1549 = vld [vmem:[#allocation2 + $0x210] sm:$0xff]
    %v1550 = vld [vmem:[#allocation2 + $0x218] sm:$0xff]
    %v1551 = vld [vmem:[#allocation2 + $0x220] sm:$0xff]
    %v1552 = vld [vmem:[#allocation2 + $0x228] sm:$0xff]
    %v1553 = vld [vmem:[#allocation2 + $0x230] sm:$0xff]
    %v1554 = vld [vmem:[#allocation2 + $0x238] sm:$0xff]
    %v1555 = vld [vmem:[#allocation2 + $0x240] sm:$0xff]
    %v1556 = vld [vmem:[#allocation2 + $0x248] sm:$0xff]
    %v1557 = vld [vmem:[#allocation2 + $0x250] sm:$0xff]
    %v1558 = vld [vmem:[#allocation2 + $0x258] sm:$0xff]
    %v1559 = vld [vmem:[#allocation2 + $0x260] sm:$0xff]
    %v1560 = vld [vmem:[#allocation2 + $0x268] sm:$0xff]
    %v1561 = vld [vmem:[#allocation2 + $0x270] sm:$0xff]
    %v1562 = vld [vmem:[#allocation2 + $0x278] sm:$0xff]
    %v1563 = vld [vmem:[#allocation2 + $0x280] sm:$0xff]
    %v1564 = vld [vmem:[#allocation2 + $0x288] sm:$0xff]
    %v1565 = vld [vmem:[#allocation2 + $0x290] sm:$0xff]
    %v1566 = vld [vmem:[#allocation2 + $0x298] sm:$0xff]
    %v1567 = vld [vmem:[#allocation2 + $0x2a0] sm:$0xff]
    %v1568 = vld [vmem:[#allocation2 + $0x2a8] sm:$0xff]
    %v1569 = vld [vmem:[#allocation2 + $0x2b0] sm:$0xff]
    %v1570 = vld [vmem:[#allocation2 + $0x2b8] sm:$0xff]
    %v1571 = vld [vmem:[#allocation2 + $0x2c0] sm:$0xff]
    %v1572 = vld [vmem:[#allocation2 + $0x2c8] sm:$0xff]
    %v1573 = vld [vmem:[#allocation2 + $0x2d0] sm:$0xff]
    %v1574 = vld [vmem:[#allocation2 + $0x2d8] sm:$0xff]
    %v1575 = vld [vmem:[#allocation2 + $0x2e0] sm:$0xff]
    %v1576 = vld [vmem:[#allocation2 + $0x2e8] sm:$0xff]
    %v1577 = vld [vmem:[#allocation2 + $0x2f0] sm:$0xff]
    %v1578 = vld [vmem:[#allocation2 + $0x2f8] sm:$0xff]
    %v1579 = vld [vmem:[#allocation2 + $0x300] sm:$0xff]
    %v1580 = vld [vmem:[#allocation2 + $0x308] sm:$0xff]
    %v1581 = vld [vmem:[#allocation2 + $0x310] sm:$0xff]
    %v1582 = vld [vmem:[#allocation2 + $0x318] sm:$0xff]
    %v1583 = vld [vmem:[#allocation2 + $0x320] sm:$0xff]
    %v1584 = vld [vmem:[#allocation2 + $0x328] sm:$0xff]
    %v1585 = vld [vmem:[#allocation2 + $0x330] sm:$0xff]
    %v1586 = vld [vmem:[#allocation2 + $0x338] sm:$0xff]
    %v1587 = vld [vmem:[#allocation2 + $0x340] sm:$0xff]
    %v1588 = vld [vmem:[#allocation2 + $0x348] sm:$0xff]
    %v1589 = vld [vmem:[#allocation2 + $0x350] sm:$0xff]
    %v1590 = vld [vmem:[#allocation2 + $0x358] sm:$0xff]
    %v1591 = vld [vmem:[#allocation2 + $0x360] sm:$0xff]
    %v1592 = vld [vmem:[#allocation2 + $0x368] sm:$0xff]
    %v1593 = vld [vmem:[#allocation2 + $0x370] sm:$0xff]
    %v1594 = vld [vmem:[#allocation2 + $0x378] sm:$0xff]
    %v1595 = vld [vmem:[%s4] sm:$0xff]
    %v1596 = vld [vmem:[%s4 + $0x8] sm:$0xff]
    %v1597 = vld [vmem:[%s4 + $0x10] sm:$0xff]
    %v1598 = vld [vmem:[%s4 + $0x18] sm:$0xff]
    %v1599 = vld [vmem:[%s4 + $0x20] sm:$0xff]
    %v1600 = vld [vmem:[%s4 + $0x28] sm:$0xff]
    %v1601 = vld [vmem:[%s4 + $0x30] sm:$0xff]
    %v1602 = vld [vmem:[%s4 + $0x38] sm:$0xff]
    %v1603 = vld [vmem:[%s4 + $0x40] sm:$0xff]
    %v1604 = vld [vmem:[%s4 + $0x48] sm:$0xff]
    %v1605 = vld [vmem:[%s4 + $0x50] sm:$0xff]
    %v1606 = vld [vmem:[%s4 + $0x58] sm:$0xff]
    %1608 = vset.pattern.permute.xlu0 0
    %1609 = vperm.xlu0 %1608, %v1595
    %v1610 = vpop.permute.xlu0 %1609
    %1613 = vset.pattern.permute.xlu0 0
    %1614 = vperm.xlu0 %1613, %v1596
    %v1615 = vpop.permute.xlu0 %1614
    %1618 = vset.pattern.permute.xlu0 0
    %1619 = vperm.xlu0 %1618, %v1597
    %v1620 = vpop.permute.xlu0 %1619
    %1623 = vset.pattern.permute.xlu0 0
    %1624 = vperm.xlu0 %1623, %v1598
    %v1625 = vpop.permute.xlu0 %1624
    %1628 = vset.pattern.permute.xlu0 0
    %1629 = vperm.xlu0 %1628, %v1599
    %v1630 = vpop.permute.xlu0 %1629
    %1633 = vset.pattern.permute.xlu0 0
    %1634 = vperm.xlu0 %1633, %v1600
    %v1635 = vpop.permute.xlu0 %1634
    %1638 = vset.pattern.permute.xlu0 0
    %1639 = vperm.xlu0 %1638, %v1601
    %v1640 = vpop.permute.xlu0 %1639
    %1643 = vset.pattern.permute.xlu0 0
    %1644 = vperm.xlu0 %1643, %v1602
    %v1645 = vpop.permute.xlu0 %1644
    %1648 = vset.pattern.permute.xlu0 0
    %1649 = vperm.xlu0 %1648, %v1603
    %v1650 = vpop.permute.xlu0 %1649
    %1653 = vset.pattern.permute.xlu0 0
    %1654 = vperm.xlu0 %1653, %v1604
    %v1655 = vpop.permute.xlu0 %1654
    %1658 = vset.pattern.permute.xlu0 0
    %1659 = vperm.xlu0 %1658, %v1605
    %v1660 = vpop.permute.xlu0 %1659
    %1663 = vset.pattern.permute.xlu0 0
    %1664 = vperm.xlu0 %1663, %v1606
    %v1665 = vpop.permute.xlu0 %1664
    %vm1667 = vcmask 785408
    %v1669 = vsel %vm1667, %v1460, 0
    %v1672 = vsel %vm1667, %v1462, 0
    %v1675 = vsel %vm1667, %v1464, 0
    %v1678 = vsel %vm1667, %v1466, 0
    %v1681 = vsel %vm1667, %v1468, 0
    %v1684 = vsel %vm1667, %v1470, 0
    %v1687 = vsel %vm1667, %v1472, 0
    %v1690 = vsel %vm1667, %v1474, 0
    %v1693 = vsel %vm1667, %v1476, 0
    %v1696 = vsel %vm1667, %v1478, 0
    %v1699 = vsel %vm1667, %v1480, 0
    %v1702 = vsel %vm1667, %v1482, 0
    %1704 = vmatpush.msra.mxu0 %v1543
    %1705 = vmatpush.msra.mxu0 %v1539
    %1706 = vmatpush.msra.mxu0 %v1535
    %1707 = vmatpush.msra.mxu0 %v1531
    %1708 = vmatpush.msra.mxu0 %v1527
    %1709 = vmatpush.msra.mxu0 %v1523
    %1710 = vmatpush.msra.mxu0 %v1519
    %1711 = vmatpush.msra.mxu0 %v1515
    %1712 = vmatpush.msra.mxu0 %v1511
    %1713 = vmatpush.msra.mxu0 %v1507
    %1714 = vmatpush.msra.mxu0 %v1503
    %1715 = vmatpush.msra.mxu0 %v1499
    %1716 = vmatpush.msra.mxu0 %v1495
    %1717 = vmatpush.msra.mxu0 %v1491
    %1718 = vmatpush.msra.mxu0 %v1487
    %1719 = vmatpush.msra.mxu0 %v1483
    %1720 = vmatmul.f32.gmra.mxu0 %v1459
    %v1721 = vpop.f32.mrf.mxu0
    %v1722 = vadd.f32 %v1610, %v1721
    %1723 = vmatmul.f32.gmra.mxu0 %v1461
    %v1724 = vpop.f32.mrf.mxu0
    %v1725 = vadd.f32 %v1615, %v1724
    %1726 = vmatmul.f32.gmra.mxu0 %v1463
    %v1727 = vpop.f32.mrf.mxu0
    %v1728 = vadd.f32 %v1620, %v1727
    %1729 = vmatmul.f32.gmra.mxu0 %v1465
    %v1730 = vpop.f32.mrf.mxu0
    %v1731 = vadd.f32 %v1625, %v1730
    %1732 = vmatmul.f32.gmra.mxu0 %v1467
    %v1733 = vpop.f32.mrf.mxu0
    %v1734 = vadd.f32 %v1630, %v1733
    %1735 = vmatmul.f32.gmra.mxu0 %v1469
    %v1736 = vpop.f32.mrf.mxu0
    %v1737 = vadd.f32 %v1635, %v1736
    %1738 = vmatmul.f32.gmra.mxu0 %v1471
    %v1739 = vpop.f32.mrf.mxu0
    %v1740 = vadd.f32 %v1640, %v1739
    %1741 = vmatmul.f32.gmra.mxu0 %v1473
    %v1742 = vpop.f32.mrf.mxu0
    %v1743 = vadd.f32 %v1645, %v1742
    %1744 = vmatmul.f32.gmra.mxu0 %v1475
    %v1745 = vpop.f32.mrf.mxu0
    %v1746 = vadd.f32 %v1650, %v1745
    %1747 = vmatmul.f32.gmra.mxu0 %v1477
    %v1748 = vpop.f32.mrf.mxu0
    %v1749 = vadd.f32 %v1655, %v1748
    %1750 = vmatmul.f32.gmra.mxu0 %v1479
    %v1751 = vpop.f32.mrf.mxu0
    %v1752 = vadd.f32 %v1660, %v1751
    %1753 = vmatmul.f32.gmra.mxu0 %v1481
    %v1754 = vpop.f32.mrf.mxu0
    %v1755 = vadd.f32 %v1665, %v1754
    %1756 = vdwg.mxu0
    %1757 = vmatpush.msra.mxu0 0.0
    %1758 = vmatpush.msra.mxu0 0.0
    %1759 = vmatpush.msra.mxu0 0.0
    %1760 = vmatpush.msra.mxu0 0.0
    %1761 = vmatpush.msra.mxu0 %v1591
    %1762 = vmatpush.msra.mxu0 %v1587
    %1763 = vmatpush.msra.mxu0 %v1583
    %1764 = vmatpush.msra.mxu0 %v1579
    %1765 = vmatpush.msra.mxu0 %v1575
    %1766 = vmatpush.msra.mxu0 %v1571
    %1767 = vmatpush.msra.mxu0 %v1567
    %1768 = vmatpush.msra.mxu0 %v1563
    %1769 = vmatpush.msra.mxu0 %v1559
    %1770 = vmatpush.msra.mxu0 %v1555
    %1771 = vmatpush.msra.mxu0 %v1551
    %1772 = vmatpush.msra.mxu0 %v1547
    %1773 = vmatmul.f32.gmra.mxu0 %v1669
    %v1774 = vpop.f32.mrf.mxu0
    %v1775 = vadd.f32 %v1722, %v1774
    %1776 = vmatmul.f32.gmra.mxu0 %v1672
    %v1777 = vpop.f32.mrf.mxu0
    %v1778 = vadd.f32 %v1725, %v1777
    %1779 = vmatmul.f32.gmra.mxu0 %v1675
    %v1780 = vpop.f32.mrf.mxu0
    %v1781 = vadd.f32 %v1728, %v1780
    %1782 = vmatmul.f32.gmra.mxu0 %v1678
    %v1783 = vpop.f32.mrf.mxu0
    %v1784 = vadd.f32 %v1731, %v1783
    %1785 = vmatmul.f32.gmra.mxu0 %v1681
    %v1786 = vpop.f32.mrf.mxu0
    %v1787 = vadd.f32 %v1734, %v1786
    %1788 = vmatmul.f32.gmra.mxu0 %v1684
    %v1789 = vpop.f32.mrf.mxu0
    %v1790 = vadd.f32 %v1737, %v1789
    %1791 = vmatmul.f32.gmra.mxu0 %v1687
    %v1792 = vpop.f32.mrf.mxu0
    %v1793 = vadd.f32 %v1740, %v1792
    %1794 = vmatmul.f32.gmra.mxu0 %v1690
    %v1795 = vpop.f32.mrf.mxu0
    %v1796 = vadd.f32 %v1743, %v1795
    %1797 = vmatmul.f32.gmra.mxu0 %v1693
    %v1798 = vpop.f32.mrf.mxu0
    %v1799 = vadd.f32 %v1746, %v1798
    %1800 = vmatmul.f32.gmra.mxu0 %v1696
    %v1801 = vpop.f32.mrf.mxu0
    %v1802 = vadd.f32 %v1749, %v1801
    %1803 = vmatmul.f32.gmra.mxu0 %v1699
    %v1804 = vpop.f32.mrf.mxu0
    %v1805 = vadd.f32 %v1752, %v1804
    %1806 = vmatmul.f32.gmra.mxu0 %v1702
    %v1807 = vpop.f32.mrf.mxu0
    %v1808 = vadd.f32 %v1755, %v1807
    %1809 = vdwg.mxu0
    %1810 = vmatpush.msra.mxu0 %v1544
    %1811 = vmatpush.msra.mxu0 %v1540
    %1812 = vmatpush.msra.mxu0 %v1536
    %1813 = vmatpush.msra.mxu0 %v1532
    %1814 = vmatpush.msra.mxu0 %v1528
    %1815 = vmatpush.msra.mxu0 %v1524
    %1816 = vmatpush.msra.mxu0 %v1520
    %1817 = vmatpush.msra.mxu0 %v1516
    %1818 = vmatpush.msra.mxu0 %v1512
    %1819 = vmatpush.msra.mxu0 %v1508
    %1820 = vmatpush.msra.mxu0 %v1504
    %1821 = vmatpush.msra.mxu0 %v1500
    %1822 = vmatpush.msra.mxu0 %v1496
    %1823 = vmatpush.msra.mxu0 %v1492
    %1824 = vmatpush.msra.mxu0 %v1488
    %1825 = vmatpush.msra.mxu0 %v1484
    %1826 = vmatmul.f32.gmra.mxu0 %v1459
    %v1827 = vpop.f32.mrf.mxu0
    %v1828 = vadd.f32 %v1610, %v1827
    %1829 = vmatmul.f32.gmra.mxu0 %v1461
    %v1830 = vpop.f32.mrf.mxu0
    %v1831 = vadd.f32 %v1615, %v1830
    %1832 = vmatmul.f32.gmra.mxu0 %v1463
    %v1833 = vpop.f32.mrf.mxu0
    %v1834 = vadd.f32 %v1620, %v1833
    %1835 = vmatmul.f32.gmra.mxu0 %v1465
    %v1836 = vpop.f32.mrf.mxu0
    %v1837 = vadd.f32 %v1625, %v1836
    %1838 = vmatmul.f32.gmra.mxu0 %v1467
    %v1839 = vpop.f32.mrf.mxu0
    %v1840 = vadd.f32 %v1630, %v1839
    %1841 = vmatmul.f32.gmra.mxu0 %v1469
    %v1842 = vpop.f32.mrf.mxu0
    %v1843 = vadd.f32 %v1635, %v1842
    %1844 = vmatmul.f32.gmra.mxu0 %v1471
    %v1845 = vpop.f32.mrf.mxu0
    %v1846 = vadd.f32 %v1640, %v1845
    %1847 = vmatmul.f32.gmra.mxu0 %v1473
    %v1848 = vpop.f32.mrf.mxu0
    %v1849 = vadd.f32 %v1645, %v1848
    %1850 = vmatmul.f32.gmra.mxu0 %v1475
    %v1851 = vpop.f32.mrf.mxu0
    %v1852 = vadd.f32 %v1650, %v1851
    %1853 = vmatmul.f32.gmra.mxu0 %v1477
    %v1854 = vpop.f32.mrf.mxu0
    %v1855 = vadd.f32 %v1655, %v1854
    %1856 = vmatmul.f32.gmra.mxu0 %v1479
    %v1857 = vpop.f32.mrf.mxu0
    %v1858 = vadd.f32 %v1660, %v1857
    %1859 = vmatmul.f32.gmra.mxu0 %v1481
    %v1860 = vpop.f32.mrf.mxu0
    %v1861 = vadd.f32 %v1665, %v1860
    %1862 = vdwg.mxu0
    %1863 = vmatpush.msra.mxu0 0.0
    %1864 = vmatpush.msra.mxu0 0.0
    %1865 = vmatpush.msra.mxu0 0.0
    %1866 = vmatpush.msra.mxu0 0.0
    %1867 = vmatpush.msra.mxu0 %v1592
    %1868 = vmatpush.msra.mxu0 %v1588
    %1869 = vmatpush.msra.mxu0 %v1584
    %1870 = vmatpush.msra.mxu0 %v1580
    %1871 = vmatpush.msra.mxu0 %v1576
    %1872 = vmatpush.msra.mxu0 %v1572
    %1873 = vmatpush.msra.mxu0 %v1568
    %1874 = vmatpush.msra.mxu0 %v1564
    %1875 = vmatpush.msra.mxu0 %v1560
    %1876 = vmatpush.msra.mxu0 %v1556
    %1877 = vmatpush.msra.mxu0 %v1552
    %1878 = vmatpush.msra.mxu0 %v1548
    %1879 = vmatmul.f32.gmra.mxu0 %v1669
    %v1880 = vpop.f32.mrf.mxu0
    %v1881 = vadd.f32 %v1828, %v1880
    %1882 = vmatmul.f32.gmra.mxu0 %v1672
    %v1883 = vpop.f32.mrf.mxu0
    %v1884 = vadd.f32 %v1831, %v1883
    %1885 = vmatmul.f32.gmra.mxu0 %v1675
    %v1886 = vpop.f32.mrf.mxu0
    %v1887 = vadd.f32 %v1834, %v1886
    %1888 = vmatmul.f32.gmra.mxu0 %v1678
    %v1889 = vpop.f32.mrf.mxu0
    %v1890 = vadd.f32 %v1837, %v1889
    %1891 = vmatmul.f32.gmra.mxu0 %v1681
    %v1892 = vpop.f32.mrf.mxu0
    %v1893 = vadd.f32 %v1840, %v1892
    %1894 = vmatmul.f32.gmra.mxu0 %v1684
    %v1895 = vpop.f32.mrf.mxu0
    %v1896 = vadd.f32 %v1843, %v1895
    %1897 = vmatmul.f32.gmra.mxu0 %v1687
    %v1898 = vpop.f32.mrf.mxu0
    %v1899 = vadd.f32 %v1846, %v1898
    %1900 = vmatmul.f32.gmra.mxu0 %v1690
    %v1901 = vpop.f32.mrf.mxu0
    %v1902 = vadd.f32 %v1849, %v1901
    %1903 = vmatmul.f32.gmra.mxu0 %v1693
    %v1904 = vpop.f32.mrf.mxu0
    %v1905 = vadd.f32 %v1852, %v1904
    %1906 = vmatmul.f32.gmra.mxu0 %v1696
    %v1907 = vpop.f32.mrf.mxu0
    %v1908 = vadd.f32 %v1855, %v1907
    %1909 = vmatmul.f32.gmra.mxu0 %v1699
    %v1910 = vpop.f32.mrf.mxu0
    %v1911 = vadd.f32 %v1858, %v1910
    %1912 = vmatmul.f32.gmra.mxu0 %v1702
    %v1913 = vpop.f32.mrf.mxu0
    %v1914 = vadd.f32 %v1861, %v1913
    %1915 = vdwg.mxu0
    %1916 = vmatpush.msra.mxu0 %v1545
    %1917 = vmatpush.msra.mxu0 %v1541
    %1918 = vmatpush.msra.mxu0 %v1537
    %1919 = vmatpush.msra.mxu0 %v1533
    %1920 = vmatpush.msra.mxu0 %v1529
    %1921 = vmatpush.msra.mxu0 %v1525
    %1922 = vmatpush.msra.mxu0 %v1521
    %1923 = vmatpush.msra.mxu0 %v1517
    %1924 = vmatpush.msra.mxu0 %v1513
    %1925 = vmatpush.msra.mxu0 %v1509
    %1926 = vmatpush.msra.mxu0 %v1505
    %1927 = vmatpush.msra.mxu0 %v1501
    %1928 = vmatpush.msra.mxu0 %v1497
    %1929 = vmatpush.msra.mxu0 %v1493
    %1930 = vmatpush.msra.mxu0 %v1489
    %1931 = vmatpush.msra.mxu0 %v1485
    %1932 = vmatmul.f32.gmra.mxu0 %v1459
    %v1933 = vpop.f32.mrf.mxu0
    %v1934 = vadd.f32 %v1610, %v1933
    %1935 = vmatmul.f32.gmra.mxu0 %v1461
    %v1936 = vpop.f32.mrf.mxu0
    %v1937 = vadd.f32 %v1615, %v1936
    %1938 = vmatmul.f32.gmra.mxu0 %v1463
    %v1939 = vpop.f32.mrf.mxu0
    %v1940 = vadd.f32 %v1620, %v1939
    %1941 = vmatmul.f32.gmra.mxu0 %v1465
    %v1942 = vpop.f32.mrf.mxu0
    %v1943 = vadd.f32 %v1625, %v1942
    %1944 = vmatmul.f32.gmra.mxu0 %v1467
    %v1945 = vpop.f32.mrf.mxu0
    %v1946 = vadd.f32 %v1630, %v1945
    %1947 = vmatmul.f32.gmra.mxu0 %v1469
    %v1948 = vpop.f32.mrf.mxu0
    %v1949 = vadd.f32 %v1635, %v1948
    %1950 = vmatmul.f32.gmra.mxu0 %v1471
    %v1951 = vpop.f32.mrf.mxu0
    %v1952 = vadd.f32 %v1640, %v1951
    %1953 = vmatmul.f32.gmra.mxu0 %v1473
    %v1954 = vpop.f32.mrf.mxu0
    %v1955 = vadd.f32 %v1645, %v1954
    %1956 = vmatmul.f32.gmra.mxu0 %v1475
    %v1957 = vpop.f32.mrf.mxu0
    %v1958 = vadd.f32 %v1650, %v1957
    %1959 = vmatmul.f32.gmra.mxu0 %v1477
    %v1960 = vpop.f32.mrf.mxu0
    %v1961 = vadd.f32 %v1655, %v1960
    %1962 = vmatmul.f32.gmra.mxu0 %v1479
    %v1963 = vpop.f32.mrf.mxu0
    %v1964 = vadd.f32 %v1660, %v1963
    %1965 = vmatmul.f32.gmra.mxu0 %v1481
    %v1966 = vpop.f32.mrf.mxu0
    %v1967 = vadd.f32 %v1665, %v1966
    %1968 = vdwg.mxu0
    %1969 = vmatpush.msra.mxu0 0.0
    %1970 = vmatpush.msra.mxu0 0.0
    %1971 = vmatpush.msra.mxu0 0.0
    %1972 = vmatpush.msra.mxu0 0.0
    %1973 = vmatpush.msra.mxu0 %v1593
    %1974 = vmatpush.msra.mxu0 %v1589
    %1975 = vmatpush.msra.mxu0 %v1585
    %1976 = vmatpush.msra.mxu0 %v1581
    %1977 = vmatpush.msra.mxu0 %v1577
    %1978 = vmatpush.msra.mxu0 %v1573
    %1979 = vmatpush.msra.mxu0 %v1569
    %1980 = vmatpush.msra.mxu0 %v1565
    %1981 = vmatpush.msra.mxu0 %v1561
    %1982 = vmatpush.msra.mxu0 %v1557
    %1983 = vmatpush.msra.mxu0 %v1553
    %1984 = vmatpush.msra.mxu0 %v1549
    %1985 = vmatmul.f32.gmra.mxu0 %v1669
    %v1986 = vpop.f32.mrf.mxu0
    %v1987 = vadd.f32 %v1934, %v1986
    %1988 = vmatmul.f32.gmra.mxu0 %v1672
    %v1989 = vpop.f32.mrf.mxu0
    %v1990 = vadd.f32 %v1937, %v1989
    %1991 = vmatmul.f32.gmra.mxu0 %v1675
    %v1992 = vpop.f32.mrf.mxu0
    %v1993 = vadd.f32 %v1940, %v1992
    %1994 = vmatmul.f32.gmra.mxu0 %v1678
    %v1995 = vpop.f32.mrf.mxu0
    %v1996 = vadd.f32 %v1943, %v1995
    %1997 = vmatmul.f32.gmra.mxu0 %v1681
    %v1998 = vpop.f32.mrf.mxu0
    %v1999 = vadd.f32 %v1946, %v1998
    %2000 = vmatmul.f32.gmra.mxu0 %v1684
    %v2001 = vpop.f32.mrf.mxu0
    %v2002 = vadd.f32 %v1949, %v2001
    %2003 = vmatmul.f32.gmra.mxu0 %v1687
    %v2004 = vpop.f32.mrf.mxu0
    %v2005 = vadd.f32 %v1952, %v2004
    %2006 = vmatmul.f32.gmra.mxu0 %v1690
    %v2007 = vpop.f32.mrf.mxu0
    %v2008 = vadd.f32 %v1955, %v2007
    %2009 = vmatmul.f32.gmra.mxu0 %v1693
    %v2010 = vpop.f32.mrf.mxu0
    %v2011 = vadd.f32 %v1958, %v2010
    %2012 = vmatmul.f32.gmra.mxu0 %v1696
    %v2013 = vpop.f32.mrf.mxu0
    %v2014 = vadd.f32 %v1961, %v2013
    %2015 = vmatmul.f32.gmra.mxu0 %v1699
    %v2016 = vpop.f32.mrf.mxu0
    %v2017 = vadd.f32 %v1964, %v2016
    %2018 = vmatmul.f32.gmra.mxu0 %v1702
    %v2019 = vpop.f32.mrf.mxu0
    %v2020 = vadd.f32 %v1967, %v2019
    %2021 = vdwg.mxu0
    %2022 = vmatpush.msra.mxu0 %v1546
    %2023 = vmatpush.msra.mxu0 %v1542
    %2024 = vmatpush.msra.mxu0 %v1538
    %2025 = vmatpush.msra.mxu0 %v1534
    %2026 = vmatpush.msra.mxu0 %v1530
    %2027 = vmatpush.msra.mxu0 %v1526
    %2028 = vmatpush.msra.mxu0 %v1522
    %2029 = vmatpush.msra.mxu0 %v1518
    %2030 = vmatpush.msra.mxu0 %v1514
    %2031 = vmatpush.msra.mxu0 %v1510
    %2032 = vmatpush.msra.mxu0 %v1506
    %2033 = vmatpush.msra.mxu0 %v1502
    %2034 = vmatpush.msra.mxu0 %v1498
    %2035 = vmatpush.msra.mxu0 %v1494
    %2036 = vmatpush.msra.mxu0 %v1490
    %2037 = vmatpush.msra.mxu0 %v1486
    %2038 = vmatmul.f32.gmra.mxu0 %v1459
    %v2039 = vpop.f32.mrf.mxu0
    %v2040 = vadd.f32 %v1610, %v2039
    %2041 = vmatmul.f32.gmra.mxu0 %v1461
    %v2042 = vpop.f32.mrf.mxu0
    %v2043 = vadd.f32 %v1615, %v2042
    %2044 = vmatmul.f32.gmra.mxu0 %v1463
    %v2045 = vpop.f32.mrf.mxu0
    %v2046 = vadd.f32 %v1620, %v2045
    %2047 = vmatmul.f32.gmra.mxu0 %v1465
    %v2048 = vpop.f32.mrf.mxu0
    %v2049 = vadd.f32 %v1625, %v2048
    %2050 = vmatmul.f32.gmra.mxu0 %v1467
    %v2051 = vpop.f32.mrf.mxu0
    %v2052 = vadd.f32 %v1630, %v2051
    %2053 = vmatmul.f32.gmra.mxu0 %v1469
    %v2054 = vpop.f32.mrf.mxu0
    %v2055 = vadd.f32 %v1635, %v2054
    %2056 = vmatmul.f32.gmra.mxu0 %v1471
    %v2057 = vpop.f32.mrf.mxu0
    %v2058 = vadd.f32 %v1640, %v2057
    %2059 = vmatmul.f32.gmra.mxu0 %v1473
    %v2060 = vpop.f32.mrf.mxu0
    %v2061 = vadd.f32 %v1645, %v2060
    %2062 = vmatmul.f32.gmra.mxu0 %v1475
    %v2063 = vpop.f32.mrf.mxu0
    %v2064 = vadd.f32 %v1650, %v2063
    %2065 = vmatmul.f32.gmra.mxu0 %v1477
    %v2066 = vpop.f32.mrf.mxu0
    %v2067 = vadd.f32 %v1655, %v2066
    %2068 = vmatmul.f32.gmra.mxu0 %v1479
    %v2069 = vpop.f32.mrf.mxu0
    %v2070 = vadd.f32 %v1660, %v2069
    %2071 = vmatmul.f32.gmra.mxu0 %v1481
    %v2072 = vpop.f32.mrf.mxu0
    %v2073 = vadd.f32 %v1665, %v2072
    %2074 = vdwg.mxu0
    %2075 = vmatpush.msra.mxu0 0.0
    %2076 = vmatpush.msra.mxu0 0.0
    %2077 = vmatpush.msra.mxu0 0.0
    %2078 = vmatpush.msra.mxu0 0.0
    %2079 = vmatpush.msra.mxu0 %v1594
    %2080 = vmatpush.msra.mxu0 %v1590
    %2081 = vmatpush.msra.mxu0 %v1586
    %2082 = vmatpush.msra.mxu0 %v1582
    %2083 = vmatpush.msra.mxu0 %v1578
    %2084 = vmatpush.msra.mxu0 %v1574
    %2085 = vmatpush.msra.mxu0 %v1570
    %2086 = vmatpush.msra.mxu0 %v1566
    %2087 = vmatpush.msra.mxu0 %v1562
    %2088 = vmatpush.msra.mxu0 %v1558
    %2089 = vmatpush.msra.mxu0 %v1554
    %2090 = vmatpush.msra.mxu0 %v1550
    %2091 = vmatmul.f32.gmra.mxu0 %v1669
    %v2092 = vpop.f32.mrf.mxu0
    %v2093 = vadd.f32 %v2040, %v2092
    %2094 = vmatmul.f32.gmra.mxu0 %v1672
    %v2095 = vpop.f32.mrf.mxu0
    %v2096 = vadd.f32 %v2043, %v2095
    %2097 = vmatmul.f32.gmra.mxu0 %v1675
    %v2098 = vpop.f32.mrf.mxu0
    %v2099 = vadd.f32 %v2046, %v2098
    %2100 = vmatmul.f32.gmra.mxu0 %v1678
    %v2101 = vpop.f32.mrf.mxu0
    %v2102 = vadd.f32 %v2049, %v2101
    %2103 = vmatmul.f32.gmra.mxu0 %v1681
    %v2104 = vpop.f32.mrf.mxu0
    %v2105 = vadd.f32 %v2052, %v2104
    %2106 = vmatmul.f32.gmra.mxu0 %v1684
    %v2107 = vpop.f32.mrf.mxu0
    %v2108 = vadd.f32 %v2055, %v2107
    %2109 = vmatmul.f32.gmra.mxu0 %v1687
    %v2110 = vpop.f32.mrf.mxu0
    %v2111 = vadd.f32 %v2058, %v2110
    %2112 = vmatmul.f32.gmra.mxu0 %v1690
    %v2113 = vpop.f32.mrf.mxu0
    %v2114 = vadd.f32 %v2061, %v2113
    %2115 = vmatmul.f32.gmra.mxu0 %v1693
    %v2116 = vpop.f32.mrf.mxu0
    %v2117 = vadd.f32 %v2064, %v2116
    %2118 = vmatmul.f32.gmra.mxu0 %v1696
    %v2119 = vpop.f32.mrf.mxu0
    %v2120 = vadd.f32 %v2067, %v2119
    %2121 = vmatmul.f32.gmra.mxu0 %v1699
    %v2122 = vpop.f32.mrf.mxu0
    %v2123 = vadd.f32 %v2070, %v2122
    %2124 = vmatmul.f32.gmra.mxu0 %v1702
    %v2125 = vpop.f32.mrf.mxu0
    %v2126 = vadd.f32 %v2073, %v2125
    %2127 = vdwg.mxu0
    %v2128 = vtanh.pop %v1775
    %v2129 = vtanh.pop %v1881
    %v2130 = vtanh.pop %v1987
    %v2131 = vtanh.pop %v2093
    %v2132 = vtanh.pop %v1778
    %v2133 = vtanh.pop %v1884
    %v2134 = vtanh.pop %v1990
    %v2135 = vtanh.pop %v2096
    %v2136 = vtanh.pop %v1781
    %v2137 = vtanh.pop %v1887
    %v2138 = vtanh.pop %v1993
    %v2139 = vtanh.pop %v2099
    %v2140 = vtanh.pop %v1784
    %v2141 = vtanh.pop %v1890
    %v2142 = vtanh.pop %v1996
    %v2143 = vtanh.pop %v2102
    %v2144 = vtanh.pop %v1787
    %v2145 = vtanh.pop %v1893
    %v2146 = vtanh.pop %v1999
    %v2147 = vtanh.pop %v2105
    %v2148 = vtanh.pop %v1790
    %v2149 = vtanh.pop %v1896
    %v2150 = vtanh.pop %v2002
    %v2151 = vtanh.pop %v2108
    %v2152 = vtanh.pop %v1793
    %v2153 = vtanh.pop %v1899
    %v2154 = vtanh.pop %v2005
    %v2155 = vtanh.pop %v2111
    %v2156 = vtanh.pop %v1796
    %v2157 = vtanh.pop %v1902
    %v2158 = vtanh.pop %v2008
    %v2159 = vtanh.pop %v2114
    %v2160 = vadd.f32 %v2128, %v2144
    %v2161 = vadd.f32 %v2129, %v2145
    %v2162 = vadd.f32 %v2130, %v2146
    %v2163 = vadd.f32 %v2131, %v2147
    %v2164 = vadd.f32 %v2132, %v2148
    %v2165 = vadd.f32 %v2133, %v2149
    %v2166 = vadd.f32 %v2134, %v2150
    %v2167 = vadd.f32 %v2135, %v2151
    %v2168 = vadd.f32 %v2136, %v2152
    %v2169 = vadd.f32 %v2137, %v2153
    %v2170 = vadd.f32 %v2138, %v2154
    %v2171 = vadd.f32 %v2139, %v2155
    %v2172 = vadd.f32 %v2140, %v2156
    %v2173 = vadd.f32 %v2141, %v2157
    %v2174 = vadd.f32 %v2142, %v2158
    %v2175 = vadd.f32 %v2143, %v2159
    %v2176 = vtanh.pop %v1799
    %v2177 = vtanh.pop %v1905
    %v2178 = vtanh.pop %v2011
    %v2179 = vtanh.pop %v2117
    %v2180 = vtanh.pop %v1802
    %v2181 = vtanh.pop %v1908
    %v2182 = vtanh.pop %v2014
    %v2183 = vtanh.pop %v2120
    %v2184 = vtanh.pop %v1805
    %v2185 = vtanh.pop %v1911
    %v2186 = vtanh.pop %v2017
    %v2187 = vtanh.pop %v2123
    %v2188 = vtanh.pop %v1808
    %v2189 = vtanh.pop %v1914
    %v2190 = vtanh.pop %v2020
    %v2191 = vtanh.pop %v2126
    %v2192 = vadd.f32 %v2160, %v2176
    %v2193 = vadd.f32 %v2161, %v2177
    %v2194 = vadd.f32 %v2162, %v2178
    %v2195 = vadd.f32 %v2163, %v2179
    %v2196 = vadd.f32 %v2164, %v2180
    %v2197 = vadd.f32 %v2165, %v2181
    %v2198 = vadd.f32 %v2166, %v2182
    %v2199 = vadd.f32 %v2167, %v2183
    %v2200 = vadd.f32 %v2168, %v2184
    %v2201 = vadd.f32 %v2169, %v2185
    %v2202 = vadd.f32 %v2170, %v2186
    %v2203 = vadd.f32 %v2171, %v2187
    %v2204 = vadd.f32 %v2172, %v2188
    %v2205 = vadd.f32 %v2173, %v2189
    %v2206 = vadd.f32 %v2174, %v2190
    %v2207 = vadd.f32 %v2175, %v2191
    %v2208 = vtanh.pop %v2192
    %v2209 = vtanh.pop %v2193
    %v2210 = vtanh.pop %v2194
    %v2211 = vtanh.pop %v2195
    %v2212 = vtanh.pop %v2196
    %v2213 = vtanh.pop %v2197
    %v2214 = vtanh.pop %v2198
    %v2215 = vtanh.pop %v2199
    %v2216 = vtanh.pop %v2200
    %v2217 = vtanh.pop %v2201
    %v2218 = vtanh.pop %v2202
    %v2219 = vtanh.pop %v2203
    %v2220 = vtanh.pop %v2204
    %v2221 = vtanh.pop %v2205
    %v2222 = vtanh.pop %v2206
    %v2223 = vtanh.pop %v2207
    %2224 = vst [vmem:[#allocation3] sm:$0xff] %v2208
    %2225 = vst [vmem:[#allocation3 + $0x8] sm:$0xff] %v2209
    %2226 = vst [vmem:[#allocation3 + $0x10] sm:$0xff] %v2210
    %2227 = vst [vmem:[#allocation3 + $0x18] sm:$0xff] %v2211
    %2228 = vst [vmem:[#allocation3 + $0x20] sm:$0xff] %v2212
    %2229 = vst [vmem:[#allocation3 + $0x28] sm:$0xff] %v2213
    %2230 = vst [vmem:[#allocation3 + $0x30] sm:$0xff] %v2214
    %2231 = vst [vmem:[#allocation3 + $0x38] sm:$0xff] %v2215
    %2232 = vst [vmem:[#allocation3 + $0x40] sm:$0xff] %v2216
    %2233 = vst [vmem:[#allocation3 + $0x48] sm:$0xff] %v2217
    %2234 = vst [vmem:[#allocation3 + $0x50] sm:$0xff] %v2218
    %2235 = vst [vmem:[#allocation3 + $0x58] sm:$0xff] %v2219
    %2236 = vst [vmem:[#allocation3 + $0x60] sm:$0xff] %v2220
    %2237 = vst [vmem:[#allocation3 + $0x68] sm:$0xff] %v2221
    %2238 = vst [vmem:[#allocation3 + $0x70] sm:$0xff] %v2222
    %2239 = vst [vmem:[#allocation3 + $0x78] sm:$0xff] %v2223
    %v2240 = vld [vmem:[#allocation3] sm:$0xff]
    %v2241 = vld [vmem:[#allocation3 + $0x8] sm:$0xff]
    %v2242 = vld [vmem:[#allocation3 + $0x10] sm:$0xff]
    %v2243 = vld [vmem:[#allocation3 + $0x18] sm:$0xff]
    %v2244 = vld [vmem:[#allocation3 + $0x20] sm:$0xff]
    %v2245 = vld [vmem:[#allocation3 + $0x28] sm:$0xff]
    %v2246 = vld [vmem:[#allocation3 + $0x30] sm:$0xff]
    %v2247 = vld [vmem:[#allocation3 + $0x38] sm:$0xff]
    %v2248 = vld [vmem:[#allocation3 + $0x40] sm:$0xff]
    %v2249 = vld [vmem:[#allocation3 + $0x48] sm:$0xff]
    %v2250 = vld [vmem:[#allocation3 + $0x50] sm:$0xff]
    %v2251 = vld [vmem:[#allocation3 + $0x58] sm:$0xff]
    %v2252 = vld [vmem:[#allocation3 + $0x60] sm:$0xff]
    %v2253 = vld [vmem:[#allocation3 + $0x68] sm:$0xff]
    %v2254 = vld [vmem:[#allocation3 + $0x70] sm:$0xff]
    %v2255 = vld [vmem:[#allocation3 + $0x78] sm:$0xff]
    %2256 = vrot.lane.b32.xlu0 %v2240, 3
    %v2257 = vpop.permute.xlu0 %2256
    %2258 = vrot.lane.b32.xlu0 %v2244, 3
    %v2259 = vpop.permute.xlu0 %2258
    %2260 = vrot.lane.b32.xlu0 %v2248, 3
    %v2261 = vpop.permute.xlu0 %2260
    %2262 = vrot.lane.b32.xlu0 %v2252, 3
    %v2263 = vpop.permute.xlu0 %2262
    %2264 = vrot.lane.b32.xlu0 %v2241, 3
    %v2265 = vpop.permute.xlu0 %2264
    %2266 = vrot.lane.b32.xlu0 %v2245, 3
    %v2267 = vpop.permute.xlu0 %2266
    %2268 = vrot.lane.b32.xlu0 %v2249, 3
    %v2269 = vpop.permute.xlu0 %2268
    %2270 = vrot.lane.b32.xlu0 %v2253, 3
    %v2271 = vpop.permute.xlu0 %2270
    %2272 = vrot.lane.b32.xlu0 %v2242, 3
    %v2273 = vpop.permute.xlu0 %2272
    %2274 = vrot.lane.b32.xlu0 %v2246, 3
    %v2275 = vpop.permute.xlu0 %2274
    %2276 = vrot.lane.b32.xlu0 %v2250, 3
    %v2277 = vpop.permute.xlu0 %2276
    %2278 = vrot.lane.b32.xlu0 %v2254, 3
    %v2279 = vpop.permute.xlu0 %2278
    %2280 = vrot.lane.b32.xlu0 %v2243, 3
    %v2281 = vpop.permute.xlu0 %2280
    %2282 = vrot.lane.b32.xlu0 %v2247, 3
    %v2283 = vpop.permute.xlu0 %2282
    %2284 = vrot.lane.b32.xlu0 %v2251, 3
    %v2285 = vpop.permute.xlu0 %2284
    %2286 = vrot.lane.b32.xlu0 %v2255, 3
    %v2287 = vpop.permute.xlu0 %2286
    %v2288 = vsel %vm120, %v2273, %v2281
    %v2289 = vsel %vm120, %v2275, %v2283
    %v2290 = vsel %vm120, %v2277, %v2285
    %v2291 = vsel %vm120, %v2279, %v2287
    %v2292 = vsel %vm120, %v2265, %v2273
    %v2293 = vsel %vm120, %v2267, %v2275
    %v2294 = vsel %vm120, %v2269, %v2277
    %v2295 = vsel %vm120, %v2271, %v2279
    %v2296 = vsel %vm120, %v2257, %v2265
    %v2297 = vsel %vm120, %v2259, %v2267
    %v2298 = vsel %vm120, %v2261, %v2269
    %v2299 = vsel %vm120, %v2263, %v2271
    %v2300 = vsel %vm120, %v2281, %v2257
    %v2301 = vsel %vm120, %v2283, %v2259
    %v2302 = vsel %vm120, %v2285, %v2261
    %v2303 = vsel %vm120, %v2287, %v2263
    %v2304 = vsel %vm967, %v2300, 0.0
    %v2305 = vsel %vm968, %v2296, 0.0
    %v2306 = vsel %vm969, %v2292, 0.0
    %v2307 = vsel %vm970, %v2288, 0.0
    %v2308 = vsel %vm967, %v2301, 0.0
    %v2309 = vsel %vm968, %v2297, 0.0
    %v2310 = vsel %vm969, %v2293, 0.0
    %v2311 = vsel %vm970, %v2289, 0.0
    %v2312 = vsel %vm967, %v2302, 0.0
    %v2313 = vsel %vm968, %v2298, 0.0
    %v2314 = vsel %vm969, %v2294, 0.0
    %v2315 = vsel %vm970, %v2290, 0.0
    %v2316 = vsel %vm967, %v2303, 0.0
    %v2317 = vsel %vm968, %v2299, 0.0
    %v2318 = vsel %vm969, %v2295, 0.0
    %v2319 = vsel %vm970, %v2291, 0.0
    %2320 = vst [vmem:[#allocation2] sm:$0xff] %v2304
    %2321 = vst [vmem:[#allocation2 + $0x8] sm:$0xff] %v2305
    %2322 = vst [vmem:[#allocation2 + $0x10] sm:$0xff] %v2306
    %2323 = vst [vmem:[#allocation2 + $0x18] sm:$0xff] %v2307
    %2324 = vst [vmem:[#allocation2 + $0x20] sm:$0xff] %v2308
    %2325 = vst [vmem:[#allocation2 + $0x28] sm:$0xff] %v2309
    %2326 = vst [vmem:[#allocation2 + $0x30] sm:$0xff] %v2310
    %2327 = vst [vmem:[#allocation2 + $0x38] sm:$0xff] %v2311
    %2328 = vst [vmem:[#allocation2 + $0x40] sm:$0xff] %v2312
    %2329 = vst [vmem:[#allocation2 + $0x48] sm:$0xff] %v2313
    %2330 = vst [vmem:[#allocation2 + $0x50] sm:$0xff] %v2314
    %2331 = vst [vmem:[#allocation2 + $0x58] sm:$0xff] %v2315
    %2332 = vst [vmem:[#allocation2 + $0x60] sm:$0xff] %v2316
    %2333 = vst [vmem:[#allocation2 + $0x68] sm:$0xff] %v2317
    %2334 = vst [vmem:[#allocation2 + $0x70] sm:$0xff] %v2318
    %2335 = vst [vmem:[#allocation2 + $0x78] sm:$0xff] %v2319
    %2336 = vrot.lane.b32.xlu0 %v2240, 2
    %v2337 = vpop.permute.xlu0 %2336
    %2338 = vrot.lane.b32.xlu0 %v2244, 2
    %v2339 = vpop.permute.xlu0 %2338
    %2340 = vrot.lane.b32.xlu0 %v2248, 2
    %v2341 = vpop.permute.xlu0 %2340
    %2342 = vrot.lane.b32.xlu0 %v2252, 2
    %v2343 = vpop.permute.xlu0 %2342
    %2344 = vrot.lane.b32.xlu0 %v2241, 2
    %v2345 = vpop.permute.xlu0 %2344
    %2346 = vrot.lane.b32.xlu0 %v2245, 2
    %v2347 = vpop.permute.xlu0 %2346
    %2348 = vrot.lane.b32.xlu0 %v2249, 2
    %v2349 = vpop.permute.xlu0 %2348
    %2350 = vrot.lane.b32.xlu0 %v2253, 2
    %v2351 = vpop.permute.xlu0 %2350
    %2352 = vrot.lane.b32.xlu0 %v2242, 2
    %v2353 = vpop.permute.xlu0 %2352
    %2354 = vrot.lane.b32.xlu0 %v2246, 2
    %v2355 = vpop.permute.xlu0 %2354
    %2356 = vrot.lane.b32.xlu0 %v2250, 2
    %v2357 = vpop.permute.xlu0 %2356
    %2358 = vrot.lane.b32.xlu0 %v2254, 2
    %v2359 = vpop.permute.xlu0 %2358
    %2360 = vrot.lane.b32.xlu0 %v2243, 2
    %v2361 = vpop.permute.xlu0 %2360
    %2362 = vrot.lane.b32.xlu0 %v2247, 2
    %v2363 = vpop.permute.xlu0 %2362
    %2364 = vrot.lane.b32.xlu0 %v2251, 2
    %v2365 = vpop.permute.xlu0 %2364
    %2366 = vrot.lane.b32.xlu0 %v2255, 2
    %v2367 = vpop.permute.xlu0 %2366
    %v2368 = vsel %vm173, %v2353, %v2361
    %v2369 = vsel %vm173, %v2355, %v2363
    %v2370 = vsel %vm173, %v2357, %v2365
    %v2371 = vsel %vm173, %v2359, %v2367
    %v2372 = vsel %vm173, %v2345, %v2353
    %v2373 = vsel %vm173, %v2347, %v2355
    %v2374 = vsel %vm173, %v2349, %v2357
    %v2375 = vsel %vm173, %v2351, %v2359
    %v2376 = vsel %vm173, %v2337, %v2345
    %v2377 = vsel %vm173, %v2339, %v2347
    %v2378 = vsel %vm173, %v2341, %v2349
    %v2379 = vsel %vm173, %v2343, %v2351
    %v2380 = vsel %vm173, %v2361, %v2337
    %v2381 = vsel %vm173, %v2363, %v2339
    %v2382 = vsel %vm173, %v2365, %v2341
    %v2383 = vsel %vm173, %v2367, %v2343
    %v2384 = vsel %vm1055, %v2380, 0.0
    %v2385 = vsel %vm1056, %v2376, 0.0
    %v2386 = vsel %vm1057, %v2372, 0.0
    %v2387 = vsel %vm1058, %v2368, 0.0
    %v2388 = vsel %vm1055, %v2381, 0.0
    %v2389 = vsel %vm1056, %v2377, 0.0
    %v2390 = vsel %vm1057, %v2373, 0.0
    %v2391 = vsel %vm1058, %v2369, 0.0
    %v2392 = vsel %vm1055, %v2382, 0.0
    %v2393 = vsel %vm1056, %v2378, 0.0
    %v2394 = vsel %vm1057, %v2374, 0.0
    %v2395 = vsel %vm1058, %v2370, 0.0
    %v2396 = vsel %vm1055, %v2383, 0.0
    %v2397 = vsel %vm1056, %v2379, 0.0
    %v2398 = vsel %vm1057, %v2375, 0.0
    %v2399 = vsel %vm1058, %v2371, 0.0
    %2400 = vst [vmem:[#allocation2 + $0x80] sm:$0xff] %v2384
    %2401 = vst [vmem:[#allocation2 + $0x88] sm:$0xff] %v2385
    %2402 = vst [vmem:[#allocation2 + $0x90] sm:$0xff] %v2386
    %2403 = vst [vmem:[#allocation2 + $0x98] sm:$0xff] %v2387
    %2404 = vst [vmem:[#allocation2 + $0xa0] sm:$0xff] %v2388
    %2405 = vst [vmem:[#allocation2 + $0xa8] sm:$0xff] %v2389
    %2406 = vst [vmem:[#allocation2 + $0xb0] sm:$0xff] %v2390
    %2407 = vst [vmem:[#allocation2 + $0xb8] sm:$0xff] %v2391
    %2408 = vst [vmem:[#allocation2 + $0xc0] sm:$0xff] %v2392
    %2409 = vst [vmem:[#allocation2 + $0xc8] sm:$0xff] %v2393
    %2410 = vst [vmem:[#allocation2 + $0xd0] sm:$0xff] %v2394
    %2411 = vst [vmem:[#allocation2 + $0xd8] sm:$0xff] %v2395
    %2412 = vst [vmem:[#allocation2 + $0xe0] sm:$0xff] %v2396
    %2413 = vst [vmem:[#allocation2 + $0xe8] sm:$0xff] %v2397
    %2414 = vst [vmem:[#allocation2 + $0xf0] sm:$0xff] %v2398
    %2415 = vst [vmem:[#allocation2 + $0xf8] sm:$0xff] %v2399
    %2416 = vrot.lane.b32.xlu0 %v2240, 1
    %v2417 = vpop.permute.xlu0 %2416
    %2418 = vrot.lane.b32.xlu0 %v2244, 1
    %v2419 = vpop.permute.xlu0 %2418
    %2420 = vrot.lane.b32.xlu0 %v2248, 1
    %v2421 = vpop.permute.xlu0 %2420
    %2422 = vrot.lane.b32.xlu0 %v2252, 1
    %v2423 = vpop.permute.xlu0 %2422
    %2424 = vrot.lane.b32.xlu0 %v2241, 1
    %v2425 = vpop.permute.xlu0 %2424
    %2426 = vrot.lane.b32.xlu0 %v2245, 1
    %v2427 = vpop.permute.xlu0 %2426
    %2428 = vrot.lane.b32.xlu0 %v2249, 1
    %v2429 = vpop.permute.xlu0 %2428
    %2430 = vrot.lane.b32.xlu0 %v2253, 1
    %v2431 = vpop.permute.xlu0 %2430
    %2432 = vrot.lane.b32.xlu0 %v2242, 1
    %v2433 = vpop.permute.xlu0 %2432
    %2434 = vrot.lane.b32.xlu0 %v2246, 1
    %v2435 = vpop.permute.xlu0 %2434
    %2436 = vrot.lane.b32.xlu0 %v2250, 1
    %v2437 = vpop.permute.xlu0 %2436
    %2438 = vrot.lane.b32.xlu0 %v2254, 1
    %v2439 = vpop.permute.xlu0 %2438
    %2440 = vrot.lane.b32.xlu0 %v2243, 1
    %v2441 = vpop.permute.xlu0 %2440
    %2442 = vrot.lane.b32.xlu0 %v2247, 1
    %v2443 = vpop.permute.xlu0 %2442
    %2444 = vrot.lane.b32.xlu0 %v2251, 1
    %v2445 = vpop.permute.xlu0 %2444
    %2446 = vrot.lane.b32.xlu0 %v2255, 1
    %v2447 = vpop.permute.xlu0 %2446
    %v2448 = vsel %vm220, %v2433, %v2441
    %v2449 = vsel %vm220, %v2435, %v2443
    %v2450 = vsel %vm220, %v2437, %v2445
    %v2451 = vsel %vm220, %v2439, %v2447
    %v2452 = vsel %vm220, %v2425, %v2433
    %v2453 = vsel %vm220, %v2427, %v2435
    %v2454 = vsel %vm220, %v2429, %v2437
    %v2455 = vsel %vm220, %v2431, %v2439
    %v2456 = vsel %vm220, %v2417, %v2425
    %v2457 = vsel %vm220, %v2419, %v2427
    %v2458 = vsel %vm220, %v2421, %v2429
    %v2459 = vsel %vm220, %v2423, %v2431
    %v2460 = vsel %vm220, %v2441, %v2417
    %v2461 = vsel %vm220, %v2443, %v2419
    %v2462 = vsel %vm220, %v2445, %v2421
    %v2463 = vsel %vm220, %v2447, %v2423
    %v2464 = vsel %vm1143, %v2460, 0.0
    %v2465 = vsel %vm1144, %v2456, 0.0
    %v2466 = vsel %vm1145, %v2452, 0.0
    %v2467 = vsel %vm1146, %v2448, 0.0
    %v2468 = vsel %vm1143, %v2461, 0.0
    %v2469 = vsel %vm1144, %v2457, 0.0
    %v2470 = vsel %vm1145, %v2453, 0.0
    %v2471 = vsel %vm1146, %v2449, 0.0
    %v2472 = vsel %vm1143, %v2462, 0.0
    %v2473 = vsel %vm1144, %v2458, 0.0
    %v2474 = vsel %vm1145, %v2454, 0.0
    %v2475 = vsel %vm1146, %v2450, 0.0
    %v2476 = vsel %vm1143, %v2463, 0.0
    %v2477 = vsel %vm1144, %v2459, 0.0
    %v2478 = vsel %vm1145, %v2455, 0.0
    %v2479 = vsel %vm1146, %v2451, 0.0
    %2480 = vst [vmem:[#allocation2 + $0x100] sm:$0xff] %v2464
    %2481 = vst [vmem:[#allocation2 + $0x108] sm:$0xff] %v2465
    %2482 = vst [vmem:[#allocation2 + $0x110] sm:$0xff] %v2466
    %2483 = vst [vmem:[#allocation2 + $0x118] sm:$0xff] %v2467
    %2484 = vst [vmem:[#allocation2 + $0x120] sm:$0xff] %v2468
    %2485 = vst [vmem:[#allocation2 + $0x128] sm:$0xff] %v2469
    %2486 = vst [vmem:[#allocation2 + $0x130] sm:$0xff] %v2470
    %2487 = vst [vmem:[#allocation2 + $0x138] sm:$0xff] %v2471
    %2488 = vst [vmem:[#allocation2 + $0x140] sm:$0xff] %v2472
    %2489 = vst [vmem:[#allocation2 + $0x148] sm:$0xff] %v2473
    %2490 = vst [vmem:[#allocation2 + $0x150] sm:$0xff] %v2474
    %2491 = vst [vmem:[#allocation2 + $0x158] sm:$0xff] %v2475
    %2492 = vst [vmem:[#allocation2 + $0x160] sm:$0xff] %v2476
    %2493 = vst [vmem:[#allocation2 + $0x168] sm:$0xff] %v2477
    %2494 = vst [vmem:[#allocation2 + $0x170] sm:$0xff] %v2478
    %2495 = vst [vmem:[#allocation2 + $0x178] sm:$0xff] %v2479
    %2496 = vst [vmem:[#allocation2 + $0x180] sm:$0xff] %v2240
    %2497 = vst [vmem:[#allocation2 + $0x188] sm:$0xff] %v2241
    %2498 = vst [vmem:[#allocation2 + $0x190] sm:$0xff] %v2242
    %2499 = vst [vmem:[#allocation2 + $0x198] sm:$0xff] %v2243
    %2500 = vst [vmem:[#allocation2 + $0x1a0] sm:$0xff] %v2244
    %2501 = vst [vmem:[#allocation2 + $0x1a8] sm:$0xff] %v2245
    %2502 = vst [vmem:[#allocation2 + $0x1b0] sm:$0xff] %v2246
    %2503 = vst [vmem:[#allocation2 + $0x1b8] sm:$0xff] %v2247
    %2504 = vst [vmem:[#allocation2 + $0x1c0] sm:$0xff] %v2248
    %2505 = vst [vmem:[#allocation2 + $0x1c8] sm:$0xff] %v2249
    %2506 = vst [vmem:[#allocation2 + $0x1d0] sm:$0xff] %v2250
    %2507 = vst [vmem:[#allocation2 + $0x1d8] sm:$0xff] %v2251
    %2508 = vst [vmem:[#allocation2 + $0x1e0] sm:$0xff] %v2252
    %2509 = vst [vmem:[#allocation2 + $0x1e8] sm:$0xff] %v2253
    %2510 = vst [vmem:[#allocation2 + $0x1f0] sm:$0xff] %v2254
    %2511 = vst [vmem:[#allocation2 + $0x1f8] sm:$0xff] %v2255
    %2512 = vrot.lane.b32.xlu0 %v2240, 127
    %v2513 = vpop.permute.xlu0 %2512
    %2514 = vrot.lane.b32.xlu0 %v2244, 127
    %v2515 = vpop.permute.xlu0 %2514
    %2516 = vrot.lane.b32.xlu0 %v2248, 127
    %v2517 = vpop.permute.xlu0 %2516
    %2518 = vrot.lane.b32.xlu0 %v2252, 127
    %v2519 = vpop.permute.xlu0 %2518
    %2520 = vrot.lane.b32.xlu0 %v2241, 127
    %v2521 = vpop.permute.xlu0 %2520
    %2522 = vrot.lane.b32.xlu0 %v2245, 127
    %v2523 = vpop.permute.xlu0 %2522
    %2524 = vrot.lane.b32.xlu0 %v2249, 127
    %v2525 = vpop.permute.xlu0 %2524
    %2526 = vrot.lane.b32.xlu0 %v2253, 127
    %v2527 = vpop.permute.xlu0 %2526
    %2528 = vrot.lane.b32.xlu0 %v2242, 127
    %v2529 = vpop.permute.xlu0 %2528
    %2530 = vrot.lane.b32.xlu0 %v2246, 127
    %v2531 = vpop.permute.xlu0 %2530
    %2532 = vrot.lane.b32.xlu0 %v2250, 127
    %v2533 = vpop.permute.xlu0 %2532
    %2534 = vrot.lane.b32.xlu0 %v2254, 127
    %v2535 = vpop.permute.xlu0 %2534
    %2536 = vrot.lane.b32.xlu0 %v2243, 127
    %v2537 = vpop.permute.xlu0 %2536
    %2538 = vrot.lane.b32.xlu0 %v2247, 127
    %v2539 = vpop.permute.xlu0 %2538
    %2540 = vrot.lane.b32.xlu0 %v2251, 127
    %v2541 = vpop.permute.xlu0 %2540
    %2542 = vrot.lane.b32.xlu0 %v2255, 127
    %v2543 = vpop.permute.xlu0 %2542
    %v2544 = vsel %vm270, %v2529, %v2537
    %v2545 = vsel %vm270, %v2531, %v2539
    %v2546 = vsel %vm270, %v2533, %v2541
    %v2547 = vsel %vm270, %v2535, %v2543
    %v2548 = vsel %vm270, %v2521, %v2529
    %v2549 = vsel %vm270, %v2523, %v2531
    %v2550 = vsel %vm270, %v2525, %v2533
    %v2551 = vsel %vm270, %v2527, %v2535
    %v2552 = vsel %vm270, %v2513, %v2521
    %v2553 = vsel %vm270, %v2515, %v2523
    %v2554 = vsel %vm270, %v2517, %v2525
    %v2555 = vsel %vm270, %v2519, %v2527
    %v2556 = vsel %vm270, %v2537, %v2513
    %v2557 = vsel %vm270, %v2539, %v2515
    %v2558 = vsel %vm270, %v2541, %v2517
    %v2559 = vsel %vm270, %v2543, %v2519
    %v2560 = vsel %vm1247, %v2552, 0.0
    %v2561 = vsel %vm1248, %v2548, 0.0
    %v2562 = vsel %vm1249, %v2544, 0.0
    %v2563 = vsel %vm1250, %v2556, 0.0
    %v2564 = vsel %vm1247, %v2553, 0.0
    %v2565 = vsel %vm1248, %v2549, 0.0
    %v2566 = vsel %vm1249, %v2545, 0.0
    %v2567 = vsel %vm1250, %v2557, 0.0
    %v2568 = vsel %vm1247, %v2554, 0.0
    %v2569 = vsel %vm1248, %v2550, 0.0
    %v2570 = vsel %vm1249, %v2546, 0.0
    %v2571 = vsel %vm1250, %v2558, 0.0
    %v2572 = vsel %vm1247, %v2555, 0.0
    %v2573 = vsel %vm1248, %v2551, 0.0
    %v2574 = vsel %vm1249, %v2547, 0.0
    %v2575 = vsel %vm1250, %v2559, 0.0
    %2576 = vst [vmem:[#allocation2 + $0x200] sm:$0xff] %v2560
    %2577 = vst [vmem:[#allocation2 + $0x208] sm:$0xff] %v2561
    %2578 = vst [vmem:[#allocation2 + $0x210] sm:$0xff] %v2562
    %2579 = vst [vmem:[#allocation2 + $0x218] sm:$0xff] %v2563
    %2580 = vst [vmem:[#allocation2 + $0x220] sm:$0xff] %v2564
    %2581 = vst [vmem:[#allocation2 + $0x228] sm:$0xff] %v2565
    %2582 = vst [vmem:[#allocation2 + $0x230] sm:$0xff] %v2566
    %2583 = vst [vmem:[#allocation2 + $0x238] sm:$0xff] %v2567
    %2584 = vst [vmem:[#allocation2 + $0x240] sm:$0xff] %v2568
    %2585 = vst [vmem:[#allocation2 + $0x248] sm:$0xff] %v2569
    %2586 = vst [vmem:[#allocation2 + $0x250] sm:$0xff] %v2570
    %2587 = vst [vmem:[#allocation2 + $0x258] sm:$0xff] %v2571
    %2588 = vst [vmem:[#allocation2 + $0x260] sm:$0xff] %v2572
    %2589 = vst [vmem:[#allocation2 + $0x268] sm:$0xff] %v2573
    %2590 = vst [vmem:[#allocation2 + $0x270] sm:$0xff] %v2574
    %2591 = vst [vmem:[#allocation2 + $0x278] sm:$0xff] %v2575
    %2592 = vrot.lane.b32.xlu0 %v2240, 126
    %v2593 = vpop.permute.xlu0 %2592
    %2594 = vrot.lane.b32.xlu0 %v2244, 126
    %v2595 = vpop.permute.xlu0 %2594
    %2596 = vrot.lane.b32.xlu0 %v2248, 126
    %v2597 = vpop.permute.xlu0 %2596
    %2598 = vrot.lane.b32.xlu0 %v2252, 126
    %v2599 = vpop.permute.xlu0 %2598
    %2600 = vrot.lane.b32.xlu0 %v2241, 126
    %v2601 = vpop.permute.xlu0 %2600
    %2602 = vrot.lane.b32.xlu0 %v2245, 126
    %v2603 = vpop.permute.xlu0 %2602
    %2604 = vrot.lane.b32.xlu0 %v2249, 126
    %v2605 = vpop.permute.xlu0 %2604
    %2606 = vrot.lane.b32.xlu0 %v2253, 126
    %v2607 = vpop.permute.xlu0 %2606
    %2608 = vrot.lane.b32.xlu0 %v2242, 126
    %v2609 = vpop.permute.xlu0 %2608
    %2610 = vrot.lane.b32.xlu0 %v2246, 126
    %v2611 = vpop.permute.xlu0 %2610
    %2612 = vrot.lane.b32.xlu0 %v2250, 126
    %v2613 = vpop.permute.xlu0 %2612
    %2614 = vrot.lane.b32.xlu0 %v2254, 126
    %v2615 = vpop.permute.xlu0 %2614
    %2616 = vrot.lane.b32.xlu0 %v2243, 126
    %v2617 = vpop.permute.xlu0 %2616
    %2618 = vrot.lane.b32.xlu0 %v2247, 126
    %v2619 = vpop.permute.xlu0 %2618
    %2620 = vrot.lane.b32.xlu0 %v2251, 126
    %v2621 = vpop.permute.xlu0 %2620
    %2622 = vrot.lane.b32.xlu0 %v2255, 126
    %v2623 = vpop.permute.xlu0 %2622
    %v2624 = vsel %vm317, %v2609, %v2617
    %v2625 = vsel %vm317, %v2611, %v2619
    %v2626 = vsel %vm317, %v2613, %v2621
    %v2627 = vsel %vm317, %v2615, %v2623
    %v2628 = vsel %vm317, %v2601, %v2609
    %v2629 = vsel %vm317, %v2603, %v2611
    %v2630 = vsel %vm317, %v2605, %v2613
    %v2631 = vsel %vm317, %v2607, %v2615
    %v2632 = vsel %vm317, %v2593, %v2601
    %v2633 = vsel %vm317, %v2595, %v2603
    %v2634 = vsel %vm317, %v2597, %v2605
    %v2635 = vsel %vm317, %v2599, %v2607
    %v2636 = vsel %vm317, %v2617, %v2593
    %v2637 = vsel %vm317, %v2619, %v2595
    %v2638 = vsel %vm317, %v2621, %v2597
    %v2639 = vsel %vm317, %v2623, %v2599
    %v2640 = vsel %vm1335, %v2632, 0.0
    %v2641 = vsel %vm1336, %v2628, 0.0
    %v2642 = vsel %vm1337, %v2624, 0.0
    %v2643 = vsel %vm1338, %v2636, 0.0
    %v2644 = vsel %vm1335, %v2633, 0.0
    %v2645 = vsel %vm1336, %v2629, 0.0
    %v2646 = vsel %vm1337, %v2625, 0.0
    %v2647 = vsel %vm1338, %v2637, 0.0
    %v2648 = vsel %vm1335, %v2634, 0.0
    %v2649 = vsel %vm1336, %v2630, 0.0
    %v2650 = vsel %vm1337, %v2626, 0.0
    %v2651 = vsel %vm1338, %v2638, 0.0
    %v2652 = vsel %vm1335, %v2635, 0.0
    %v2653 = vsel %vm1336, %v2631, 0.0
    %v2654 = vsel %vm1337, %v2627, 0.0
    %v2655 = vsel %vm1338, %v2639, 0.0
    %2656 = vst [vmem:[#allocation2 + $0x280] sm:$0xff] %v2640
    %2657 = vst [vmem:[#allocation2 + $0x288] sm:$0xff] %v2641
    %2658 = vst [vmem:[#allocation2 + $0x290] sm:$0xff] %v2642
    %2659 = vst [vmem:[#allocation2 + $0x298] sm:$0xff] %v2643
    %2660 = vst [vmem:[#allocation2 + $0x2a0] sm:$0xff] %v2644
    %2661 = vst [vmem:[#allocation2 + $0x2a8] sm:$0xff] %v2645
    %2662 = vst [vmem:[#allocation2 + $0x2b0] sm:$0xff] %v2646
    %2663 = vst [vmem:[#allocation2 + $0x2b8] sm:$0xff] %v2647
    %2664 = vst [vmem:[#allocation2 + $0x2c0] sm:$0xff] %v2648
    %2665 = vst [vmem:[#allocation2 + $0x2c8] sm:$0xff] %v2649
    %2666 = vst [vmem:[#allocation2 + $0x2d0] sm:$0xff] %v2650
    %2667 = vst [vmem:[#allocation2 + $0x2d8] sm:$0xff] %v2651
    %2668 = vst [vmem:[#allocation2 + $0x2e0] sm:$0xff] %v2652
    %2669 = vst [vmem:[#allocation2 + $0x2e8] sm:$0xff] %v2653
    %2670 = vst [vmem:[#allocation2 + $0x2f0] sm:$0xff] %v2654
    %2671 = vst [vmem:[#allocation2 + $0x2f8] sm:$0xff] %v2655
    %2672 = vrot.lane.b32.xlu0 %v2240, 125
    %v2673 = vpop.permute.xlu0 %2672
    %2674 = vrot.lane.b32.xlu0 %v2244, 125
    %v2675 = vpop.permute.xlu0 %2674
    %2676 = vrot.lane.b32.xlu0 %v2248, 125
    %v2677 = vpop.permute.xlu0 %2676
    %2678 = vrot.lane.b32.xlu0 %v2252, 125
    %v2679 = vpop.permute.xlu0 %2678
    %2680 = vrot.lane.b32.xlu0 %v2241, 125
    %v2681 = vpop.permute.xlu0 %2680
    %2682 = vrot.lane.b32.xlu0 %v2245, 125
    %v2683 = vpop.permute.xlu0 %2682
    %2684 = vrot.lane.b32.xlu0 %v2249, 125
    %v2685 = vpop.permute.xlu0 %2684
    %2686 = vrot.lane.b32.xlu0 %v2253, 125
    %v2687 = vpop.permute.xlu0 %2686
    %2688 = vrot.lane.b32.xlu0 %v2242, 125
    %v2689 = vpop.permute.xlu0 %2688
    %2690 = vrot.lane.b32.xlu0 %v2246, 125
    %v2691 = vpop.permute.xlu0 %2690
    %2692 = vrot.lane.b32.xlu0 %v2250, 125
    %v2693 = vpop.permute.xlu0 %2692
    %2694 = vrot.lane.b32.xlu0 %v2254, 125
    %v2695 = vpop.permute.xlu0 %2694
    %2696 = vrot.lane.b32.xlu0 %v2243, 125
    %v2697 = vpop.permute.xlu0 %2696
    %2698 = vrot.lane.b32.xlu0 %v2247, 125
    %v2699 = vpop.permute.xlu0 %2698
    %2700 = vrot.lane.b32.xlu0 %v2251, 125
    %v2701 = vpop.permute.xlu0 %2700
    %2702 = vrot.lane.b32.xlu0 %v2255, 125
    %v2703 = vpop.permute.xlu0 %2702
    %v2704 = vsel %vm364, %v2689, %v2697
    %v2705 = vsel %vm364, %v2691, %v2699
    %v2706 = vsel %vm364, %v2693, %v2701
    %v2707 = vsel %vm364, %v2695, %v2703
    %v2708 = vsel %vm364, %v2681, %v2689
    %v2709 = vsel %vm364, %v2683, %v2691
    %v2710 = vsel %vm364, %v2685, %v2693
    %v2711 = vsel %vm364, %v2687, %v2695
    %v2712 = vsel %vm364, %v2673, %v2681
    %v2713 = vsel %vm364, %v2675, %v2683
    %v2714 = vsel %vm364, %v2677, %v2685
    %v2715 = vsel %vm364, %v2679, %v2687
    %v2716 = vsel %vm364, %v2697, %v2673
    %v2717 = vsel %vm364, %v2699, %v2675
    %v2718 = vsel %vm364, %v2701, %v2677
    %v2719 = vsel %vm364, %v2703, %v2679
    %v2720 = vsel %vm1423, %v2712, 0.0
    %v2721 = vsel %vm1424, %v2708, 0.0
    %v2722 = vsel %vm1425, %v2704, 0.0
    %v2723 = vsel %vm1426, %v2716, 0.0
    %v2724 = vsel %vm1423, %v2713, 0.0
    %v2725 = vsel %vm1424, %v2709, 0.0
    %v2726 = vsel %vm1425, %v2705, 0.0
    %v2727 = vsel %vm1426, %v2717, 0.0
    %v2728 = vsel %vm1423, %v2714, 0.0
    %v2729 = vsel %vm1424, %v2710, 0.0
    %v2730 = vsel %vm1425, %v2706, 0.0
    %v2731 = vsel %vm1426, %v2718, 0.0
    %v2732 = vsel %vm1423, %v2715, 0.0
    %v2733 = vsel %vm1424, %v2711, 0.0
    %v2734 = vsel %vm1425, %v2707, 0.0
    %v2735 = vsel %vm1426, %v2719, 0.0
    %2736 = vst [vmem:[#allocation2 + $0x300] sm:$0xff] %v2720
    %2737 = vst [vmem:[#allocation2 + $0x308] sm:$0xff] %v2721
    %2738 = vst [vmem:[#allocation2 + $0x310] sm:$0xff] %v2722
    %2739 = vst [vmem:[#allocation2 + $0x318] sm:$0xff] %v2723
    %2740 = vst [vmem:[#allocation2 + $0x320] sm:$0xff] %v2724
    %2741 = vst [vmem:[#allocation2 + $0x328] sm:$0xff] %v2725
    %2742 = vst [vmem:[#allocation2 + $0x330] sm:$0xff] %v2726
    %2743 = vst [vmem:[#allocation2 + $0x338] sm:$0xff] %v2727
    %2744 = vst [vmem:[#allocation2 + $0x340] sm:$0xff] %v2728
    %2745 = vst [vmem:[#allocation2 + $0x348] sm:$0xff] %v2729
    %2746 = vst [vmem:[#allocation2 + $0x350] sm:$0xff] %v2730
    %2747 = vst [vmem:[#allocation2 + $0x358] sm:$0xff] %v2731
    %2748 = vst [vmem:[#allocation2 + $0x360] sm:$0xff] %v2732
    %2749 = vst [vmem:[#allocation2 + $0x368] sm:$0xff] %v2733
    %2750 = vst [vmem:[#allocation2 + $0x370] sm:$0xff] %v2734
    %2751 = vst [vmem:[#allocation2 + $0x378] sm:$0xff] %v2735
    %v2752 = vld [vmem:[%s5] sm:$0xff]
    %v2753 = vld [vmem:[%s5 + $0x8] sm:$0xff]
    %v2754 = vld [vmem:[%s5 + $0x10] sm:$0xff]
    %v2755 = vld [vmem:[%s5 + $0x18] sm:$0xff]
    %v2756 = vld [vmem:[%s5 + $0x20] sm:$0xff]
    %v2757 = vld [vmem:[%s5 + $0x28] sm:$0xff]
    %v2758 = vld [vmem:[%s5 + $0x30] sm:$0xff]
    %v2759 = vld [vmem:[%s5 + $0x38] sm:$0xff]
    %v2760 = vld [vmem:[%s5 + $0x40] sm:$0xff]
    %v2761 = vld [vmem:[%s5 + $0x48] sm:$0xff]
    %v2762 = vld [vmem:[%s5 + $0x50] sm:$0xff]
    %v2763 = vld [vmem:[%s5 + $0x58] sm:$0xff]
    %v2764 = vld [vmem:[%s5 + $0x60] sm:$0xff]
    %v2765 = vld [vmem:[%s5 + $0x68] sm:$0xff]
    %v2766 = vld [vmem:[%s5 + $0x70] sm:$0xff]
    %v2767 = vld [vmem:[%s5 + $0x78] sm:$0xff]
    %v2768 = vld [vmem:[%s5 + $0x80] sm:$0xff]
    %v2769 = vld [vmem:[%s5 + $0x88] sm:$0xff]
    %v2770 = vld [vmem:[%s5 + $0x90] sm:$0xff]
    %v2771 = vld [vmem:[%s5 + $0x98] sm:$0xff]
    %v2772 = vld [vmem:[%s5 + $0xa0] sm:$0xff]
    %v2773 = vld [vmem:[%s5 + $0xa8] sm:$0xff]
    %v2774 = vld [vmem:[%s5 + $0xb0] sm:$0xff]
    %v2775 = vld [vmem:[%s5 + $0xb8] sm:$0xff]
    %v2776 = vld [vmem:[#allocation2] sm:$0xff]
    %v2777 = vld [vmem:[#allocation2 + $0x8] sm:$0xff]
    %v2778 = vld [vmem:[#allocation2 + $0x10] sm:$0xff]
    %v2779 = vld [vmem:[#allocation2 + $0x18] sm:$0xff]
    %v2780 = vld [vmem:[#allocation2 + $0x20] sm:$0xff]
    %v2781 = vld [vmem:[#allocation2 + $0x28] sm:$0xff]
    %v2782 = vld [vmem:[#allocation2 + $0x30] sm:$0xff]
    %v2783 = vld [vmem:[#allocation2 + $0x38] sm:$0xff]
    %v2784 = vld [vmem:[#allocation2 + $0x40] sm:$0xff]
    %v2785 = vld [vmem:[#allocation2 + $0x48] sm:$0xff]
    %v2786 = vld [vmem:[#allocation2 + $0x50] sm:$0xff]
    %v2787 = vld [vmem:[#allocation2 + $0x58] sm:$0xff]
    %v2788 = vld [vmem:[#allocation2 + $0x60] sm:$0xff]
    %v2789 = vld [vmem:[#allocation2 + $0x68] sm:$0xff]
    %v2790 = vld [vmem:[#allocation2 + $0x70] sm:$0xff]
    %v2791 = vld [vmem:[#allocation2 + $0x78] sm:$0xff]
    %v2792 = vld [vmem:[#allocation2 + $0x80] sm:$0xff]
    %v2793 = vld [vmem:[#allocation2 + $0x88] sm:$0xff]
    %v2794 = vld [vmem:[#allocation2 + $0x90] sm:$0xff]
    %v2795 = vld [vmem:[#allocation2 + $0x98] sm:$0xff]
    %v2796 = vld [vmem:[#allocation2 + $0xa0] sm:$0xff]
    %v2797 = vld [vmem:[#allocation2 + $0xa8] sm:$0xff]
    %v2798 = vld [vmem:[#allocation2 + $0xb0] sm:$0xff]
    %v2799 = vld [vmem:[#allocation2 + $0xb8] sm:$0xff]
    %v2800 = vld [vmem:[#allocation2 + $0xc0] sm:$0xff]
    %v2801 = vld [vmem:[#allocation2 + $0xc8] sm:$0xff]
    %v2802 = vld [vmem:[#allocation2 + $0xd0] sm:$0xff]
    %v2803 = vld [vmem:[#allocation2 + $0xd8] sm:$0xff]
    %v2804 = vld [vmem:[#allocation2 + $0xe0] sm:$0xff]
    %v2805 = vld [vmem:[#allocation2 + $0xe8] sm:$0xff]
    %v2806 = vld [vmem:[#allocation2 + $0xf0] sm:$0xff]
    %v2807 = vld [vmem:[#allocation2 + $0xf8] sm:$0xff]
    %v2808 = vld [vmem:[#allocation2 + $0x100] sm:$0xff]
    %v2809 = vld [vmem:[#allocation2 + $0x108] sm:$0xff]
    %v2810 = vld [vmem:[#allocation2 + $0x110] sm:$0xff]
    %v2811 = vld [vmem:[#allocation2 + $0x118] sm:$0xff]
    %v2812 = vld [vmem:[#allocation2 + $0x120] sm:$0xff]
    %v2813 = vld [vmem:[#allocation2 + $0x128] sm:$0xff]
    %v2814 = vld [vmem:[#allocation2 + $0x130] sm:$0xff]
    %v2815 = vld [vmem:[#allocation2 + $0x138] sm:$0xff]
    %v2816 = vld [vmem:[#allocation2 + $0x140] sm:$0xff]
    %v2817 = vld [vmem:[#allocation2 + $0x148] sm:$0xff]
    %v2818 = vld [vmem:[#allocation2 + $0x150] sm:$0xff]
    %v2819 = vld [vmem:[#allocation2 + $0x158] sm:$0xff]
    %v2820 = vld [vmem:[#allocation2 + $0x160] sm:$0xff]
    %v2821 = vld [vmem:[#allocation2 + $0x168] sm:$0xff]
    %v2822 = vld [vmem:[#allocation2 + $0x170] sm:$0xff]
    %v2823 = vld [vmem:[#allocation2 + $0x178] sm:$0xff]
    %v2824 = vld [vmem:[#allocation2 + $0x180] sm:$0xff]
    %v2825 = vld [vmem:[#allocation2 + $0x188] sm:$0xff]
    %v2826 = vld [vmem:[#allocation2 + $0x190] sm:$0xff]
    %v2827 = vld [vmem:[#allocation2 + $0x198] sm:$0xff]
    %v2828 = vld [vmem:[#allocation2 + $0x1a0] sm:$0xff]
    %v2829 = vld [vmem:[#allocation2 + $0x1a8] sm:$0xff]
    %v2830 = vld [vmem:[#allocation2 + $0x1b0] sm:$0xff]
    %v2831 = vld [vmem:[#allocation2 + $0x1b8] sm:$0xff]
    %v2832 = vld [vmem:[#allocation2 + $0x1c0] sm:$0xff]
    %v2833 = vld [vmem:[#allocation2 + $0x1c8] sm:$0xff]
    %v2834 = vld [vmem:[#allocation2 + $0x1d0] sm:$0xff]
    %v2835 = vld [vmem:[#allocation2 + $0x1d8] sm:$0xff]
    %v2836 = vld [vmem:[#allocation2 + $0x1e0] sm:$0xff]
    %v2837 = vld [vmem:[#allocation2 + $0x1e8] sm:$0xff]
    %v2838 = vld [vmem:[#allocation2 + $0x1f0] sm:$0xff]
    %v2839 = vld [vmem:[#allocation2 + $0x1f8] sm:$0xff]
    %v2840 = vld [vmem:[#allocation2 + $0x200] sm:$0xff]
    %v2841 = vld [vmem:[#allocation2 + $0x208] sm:$0xff]
    %v2842 = vld [vmem:[#allocation2 + $0x210] sm:$0xff]
    %v2843 = vld [vmem:[#allocation2 + $0x218] sm:$0xff]
    %v2844 = vld [vmem:[#allocation2 + $0x220] sm:$0xff]
    %v2845 = vld [vmem:[#allocation2 + $0x228] sm:$0xff]
    %v2846 = vld [vmem:[#allocation2 + $0x230] sm:$0xff]
    %v2847 = vld [vmem:[#allocation2 + $0x238] sm:$0xff]
    %v2848 = vld [vmem:[#allocation2 + $0x240] sm:$0xff]
    %v2849 = vld [vmem:[#allocation2 + $0x248] sm:$0xff]
    %v2850 = vld [vmem:[#allocation2 + $0x250] sm:$0xff]
    %v2851 = vld [vmem:[#allocation2 + $0x258] sm:$0xff]
    %v2852 = vld [vmem:[#allocation2 + $0x260] sm:$0xff]
    %v2853 = vld [vmem:[#allocation2 + $0x268] sm:$0xff]
    %v2854 = vld [vmem:[#allocation2 + $0x270] sm:$0xff]
    %v2855 = vld [vmem:[#allocation2 + $0x278] sm:$0xff]
    %v2856 = vld [vmem:[#allocation2 + $0x280] sm:$0xff]
    %v2857 = vld [vmem:[#allocation2 + $0x288] sm:$0xff]
    %v2858 = vld [vmem:[#allocation2 + $0x290] sm:$0xff]
    %v2859 = vld [vmem:[#allocation2 + $0x298] sm:$0xff]
    %v2860 = vld [vmem:[#allocation2 + $0x2a0] sm:$0xff]
    %v2861 = vld [vmem:[#allocation2 + $0x2a8] sm:$0xff]
    %v2862 = vld [vmem:[#allocation2 + $0x2b0] sm:$0xff]
    %v2863 = vld [vmem:[#allocation2 + $0x2b8] sm:$0xff]
    %v2864 = vld [vmem:[#allocation2 + $0x2c0] sm:$0xff]
    %v2865 = vld [vmem:[#allocation2 + $0x2c8] sm:$0xff]
    %v2866 = vld [vmem:[#allocation2 + $0x2d0] sm:$0xff]
    %v2867 = vld [vmem:[#allocation2 + $0x2d8] sm:$0xff]
    %v2868 = vld [vmem:[#allocation2 + $0x2e0] sm:$0xff]
    %v2869 = vld [vmem:[#allocation2 + $0x2e8] sm:$0xff]
    %v2870 = vld [vmem:[#allocation2 + $0x2f0] sm:$0xff]
    %v2871 = vld [vmem:[#allocation2 + $0x2f8] sm:$0xff]
    %v2872 = vld [vmem:[#allocation2 + $0x300] sm:$0xff]
    %v2873 = vld [vmem:[#allocation2 + $0x308] sm:$0xff]
    %v2874 = vld [vmem:[#allocation2 + $0x310] sm:$0xff]
    %v2875 = vld [vmem:[#allocation2 + $0x318] sm:$0xff]
    %v2876 = vld [vmem:[#allocation2 + $0x320] sm:$0xff]
    %v2877 = vld [vmem:[#allocation2 + $0x328] sm:$0xff]
    %v2878 = vld [vmem:[#allocation2 + $0x330] sm:$0xff]
    %v2879 = vld [vmem:[#allocation2 + $0x338] sm:$0xff]
    %v2880 = vld [vmem:[#allocation2 + $0x340] sm:$0xff]
    %v2881 = vld [vmem:[#allocation2 + $0x348] sm:$0xff]
    %v2882 = vld [vmem:[#allocation2 + $0x350] sm:$0xff]
    %v2883 = vld [vmem:[#allocation2 + $0x358] sm:$0xff]
    %v2884 = vld [vmem:[#allocation2 + $0x360] sm:$0xff]
    %v2885 = vld [vmem:[#allocation2 + $0x368] sm:$0xff]
    %v2886 = vld [vmem:[#allocation2 + $0x370] sm:$0xff]
    %v2887 = vld [vmem:[#allocation2 + $0x378] sm:$0xff]
    %v2888 = vld [vmem:[%s6] sm:$0xff]
    %v2889 = vld [vmem:[%s6 + $0x8] sm:$0xff]
    %v2890 = vld [vmem:[%s6 + $0x10] sm:$0xff]
    %v2891 = vld [vmem:[%s6 + $0x18] sm:$0xff]
    %v2892 = vld [vmem:[%s6 + $0x20] sm:$0xff]
    %v2893 = vld [vmem:[%s6 + $0x28] sm:$0xff]
    %v2894 = vld [vmem:[%s6 + $0x30] sm:$0xff]
    %v2895 = vld [vmem:[%s6 + $0x38] sm:$0xff]
    %v2896 = vld [vmem:[%s6 + $0x40] sm:$0xff]
    %v2897 = vld [vmem:[%s6 + $0x48] sm:$0xff]
    %v2898 = vld [vmem:[%s6 + $0x50] sm:$0xff]
    %v2899 = vld [vmem:[%s6 + $0x58] sm:$0xff]
    %2901 = vset.pattern.permute.xlu0 0
    %2902 = vperm.xlu0 %2901, %v2888
    %v2903 = vpop.permute.xlu0 %2902
    %2906 = vset.pattern.permute.xlu0 0
    %2907 = vperm.xlu0 %2906, %v2889
    %v2908 = vpop.permute.xlu0 %2907
    %2911 = vset.pattern.permute.xlu0 0
    %2912 = vperm.xlu0 %2911, %v2890
    %v2913 = vpop.permute.xlu0 %2912
    %2916 = vset.pattern.permute.xlu0 0
    %2917 = vperm.xlu0 %2916, %v2891
    %v2918 = vpop.permute.xlu0 %2917
    %2921 = vset.pattern.permute.xlu0 0
    %2922 = vperm.xlu0 %2921, %v2892
    %v2923 = vpop.permute.xlu0 %2922
    %2926 = vset.pattern.permute.xlu0 0
    %2927 = vperm.xlu0 %2926, %v2893
    %v2928 = vpop.permute.xlu0 %2927
    %2931 = vset.pattern.permute.xlu0 0
    %2932 = vperm.xlu0 %2931, %v2894
    %v2933 = vpop.permute.xlu0 %2932
    %2936 = vset.pattern.permute.xlu0 0
    %2937 = vperm.xlu0 %2936, %v2895
    %v2938 = vpop.permute.xlu0 %2937
    %2941 = vset.pattern.permute.xlu0 0
    %2942 = vperm.xlu0 %2941, %v2896
    %v2943 = vpop.permute.xlu0 %2942
    %2946 = vset.pattern.permute.xlu0 0
    %2947 = vperm.xlu0 %2946, %v2897
    %v2948 = vpop.permute.xlu0 %2947
    %2951 = vset.pattern.permute.xlu0 0
    %2952 = vperm.xlu0 %2951, %v2898
    %v2953 = vpop.permute.xlu0 %2952
    %2956 = vset.pattern.permute.xlu0 0
    %2957 = vperm.xlu0 %2956, %v2899
    %v2958 = vpop.permute.xlu0 %2957
    %v2961 = vsel %vm1667, %v2753, 0
    %v2964 = vsel %vm1667, %v2755, 0
    %v2967 = vsel %vm1667, %v2757, 0
    %v2970 = vsel %vm1667, %v2759, 0
    %v2973 = vsel %vm1667, %v2761, 0
    %v2976 = vsel %vm1667, %v2763, 0
    %v2979 = vsel %vm1667, %v2765, 0
    %v2982 = vsel %vm1667, %v2767, 0
    %v2985 = vsel %vm1667, %v2769, 0
    %v2988 = vsel %vm1667, %v2771, 0
    %v2991 = vsel %vm1667, %v2773, 0
    %v2994 = vsel %vm1667, %v2775, 0
    %2996 = vmatpush.msra.mxu0 %v2836
    %2997 = vmatpush.msra.mxu0 %v2832
    %2998 = vmatpush.msra.mxu0 %v2828
    %2999 = vmatpush.msra.mxu0 %v2824
    %3000 = vmatpush.msra.mxu0 %v2820
    %3001 = vmatpush.msra.mxu0 %v2816
    %3002 = vmatpush.msra.mxu0 %v2812
    %3003 = vmatpush.msra.mxu0 %v2808
    %3004 = vmatpush.msra.mxu0 %v2804
    %3005 = vmatpush.msra.mxu0 %v2800
    %3006 = vmatpush.msra.mxu0 %v2796
    %3007 = vmatpush.msra.mxu0 %v2792
    %3008 = vmatpush.msra.mxu0 %v2788
    %3009 = vmatpush.msra.mxu0 %v2784
    %3010 = vmatpush.msra.mxu0 %v2780
    %3011 = vmatpush.msra.mxu0 %v2776
    %3012 = vmatmul.f32.gmra.mxu0 %v2752
    %v3013 = vpop.f32.mrf.mxu0
    %v3014 = vadd.f32 %v2903, %v3013
    %3015 = vmatmul.f32.gmra.mxu0 %v2754
    %v3016 = vpop.f32.mrf.mxu0
    %v3017 = vadd.f32 %v2908, %v3016
    %3018 = vmatmul.f32.gmra.mxu0 %v2756
    %v3019 = vpop.f32.mrf.mxu0
    %v3020 = vadd.f32 %v2913, %v3019
    %3021 = vmatmul.f32.gmra.mxu0 %v2758
    %v3022 = vpop.f32.mrf.mxu0
    %v3023 = vadd.f32 %v2918, %v3022
    %3024 = vmatmul.f32.gmra.mxu0 %v2760
    %v3025 = vpop.f32.mrf.mxu0
    %v3026 = vadd.f32 %v2923, %v3025
    %3027 = vmatmul.f32.gmra.mxu0 %v2762
    %v3028 = vpop.f32.mrf.mxu0
    %v3029 = vadd.f32 %v2928, %v3028
    %3030 = vmatmul.f32.gmra.mxu0 %v2764
    %v3031 = vpop.f32.mrf.mxu0
    %v3032 = vadd.f32 %v2933, %v3031
    %3033 = vmatmul.f32.gmra.mxu0 %v2766
    %v3034 = vpop.f32.mrf.mxu0
    %v3035 = vadd.f32 %v2938, %v3034
    %3036 = vmatmul.f32.gmra.mxu0 %v2768
    %v3037 = vpop.f32.mrf.mxu0
    %v3038 = vadd.f32 %v2943, %v3037
    %3039 = vmatmul.f32.gmra.mxu0 %v2770
    %v3040 = vpop.f32.mrf.mxu0
    %v3041 = vadd.f32 %v2948, %v3040
    %3042 = vmatmul.f32.gmra.mxu0 %v2772
    %v3043 = vpop.f32.mrf.mxu0
    %v3044 = vadd.f32 %v2953, %v3043
    %3045 = vmatmul.f32.gmra.mxu0 %v2774
    %v3046 = vpop.f32.mrf.mxu0
    %v3047 = vadd.f32 %v2958, %v3046
    %3048 = vdwg.mxu0
    %3049 = vmatpush.msra.mxu0 0.0
    %3050 = vmatpush.msra.mxu0 0.0
    %3051 = vmatpush.msra.mxu0 0.0
    %3052 = vmatpush.msra.mxu0 0.0
    %3053 = vmatpush.msra.mxu0 %v2884
    %3054 = vmatpush.msra.mxu0 %v2880
    %3055 = vmatpush.msra.mxu0 %v2876
    %3056 = vmatpush.msra.mxu0 %v2872
    %3057 = vmatpush.msra.mxu0 %v2868
    %3058 = vmatpush.msra.mxu0 %v2864
    %3059 = vmatpush.msra.mxu0 %v2860
    %3060 = vmatpush.msra.mxu0 %v2856
    %3061 = vmatpush.msra.mxu0 %v2852
    %3062 = vmatpush.msra.mxu0 %v2848
    %3063 = vmatpush.msra.mxu0 %v2844
    %3064 = vmatpush.msra.mxu0 %v2840
    %3065 = vmatmul.f32.gmra.mxu0 %v2961
    %v3066 = vpop.f32.mrf.mxu0
    %v3067 = vadd.f32 %v3014, %v3066
    %3068 = vmatmul.f32.gmra.mxu0 %v2964
    %v3069 = vpop.f32.mrf.mxu0
    %v3070 = vadd.f32 %v3017, %v3069
    %3071 = vmatmul.f32.gmra.mxu0 %v2967
    %v3072 = vpop.f32.mrf.mxu0
    %v3073 = vadd.f32 %v3020, %v3072
    %3074 = vmatmul.f32.gmra.mxu0 %v2970
    %v3075 = vpop.f32.mrf.mxu0
    %v3076 = vadd.f32 %v3023, %v3075
    %3077 = vmatmul.f32.gmra.mxu0 %v2973
    %v3078 = vpop.f32.mrf.mxu0
    %v3079 = vadd.f32 %v3026, %v3078
    %3080 = vmatmul.f32.gmra.mxu0 %v2976
    %v3081 = vpop.f32.mrf.mxu0
    %v3082 = vadd.f32 %v3029, %v3081
    %3083 = vmatmul.f32.gmra.mxu0 %v2979
    %v3084 = vpop.f32.mrf.mxu0
    %v3085 = vadd.f32 %v3032, %v3084
    %3086 = vmatmul.f32.gmra.mxu0 %v2982
    %v3087 = vpop.f32.mrf.mxu0
    %v3088 = vadd.f32 %v3035, %v3087
    %3089 = vmatmul.f32.gmra.mxu0 %v2985
    %v3090 = vpop.f32.mrf.mxu0
    %v3091 = vadd.f32 %v3038, %v3090
    %3092 = vmatmul.f32.gmra.mxu0 %v2988
    %v3093 = vpop.f32.mrf.mxu0
    %v3094 = vadd.f32 %v3041, %v3093
    %3095 = vmatmul.f32.gmra.mxu0 %v2991
    %v3096 = vpop.f32.mrf.mxu0
    %v3097 = vadd.f32 %v3044, %v3096
    %3098 = vmatmul.f32.gmra.mxu0 %v2994
    %v3099 = vpop.f32.mrf.mxu0
    %v3100 = vadd.f32 %v3047, %v3099
    %3101 = vdwg.mxu0
    %3102 = vmatpush.msra.mxu0 %v2837
    %3103 = vmatpush.msra.mxu0 %v2833
    %3104 = vmatpush.msra.mxu0 %v2829
    %3105 = vmatpush.msra.mxu0 %v2825
    %3106 = vmatpush.msra.mxu0 %v2821
    %3107 = vmatpush.msra.mxu0 %v2817
    %3108 = vmatpush.msra.mxu0 %v2813
    %3109 = vmatpush.msra.mxu0 %v2809
    %3110 = vmatpush.msra.mxu0 %v2805
    %3111 = vmatpush.msra.mxu0 %v2801
    %3112 = vmatpush.msra.mxu0 %v2797
    %3113 = vmatpush.msra.mxu0 %v2793
    %3114 = vmatpush.msra.mxu0 %v2789
    %3115 = vmatpush.msra.mxu0 %v2785
    %3116 = vmatpush.msra.mxu0 %v2781
    %3117 = vmatpush.msra.mxu0 %v2777
    %3118 = vmatmul.f32.gmra.mxu0 %v2752
    %v3119 = vpop.f32.mrf.mxu0
    %v3120 = vadd.f32 %v2903, %v3119
    %3121 = vmatmul.f32.gmra.mxu0 %v2754
    %v3122 = vpop.f32.mrf.mxu0
    %v3123 = vadd.f32 %v2908, %v3122
    %3124 = vmatmul.f32.gmra.mxu0 %v2756
    %v3125 = vpop.f32.mrf.mxu0
    %v3126 = vadd.f32 %v2913, %v3125
    %3127 = vmatmul.f32.gmra.mxu0 %v2758
    %v3128 = vpop.f32.mrf.mxu0
    %v3129 = vadd.f32 %v2918, %v3128
    %3130 = vmatmul.f32.gmra.mxu0 %v2760
    %v3131 = vpop.f32.mrf.mxu0
    %v3132 = vadd.f32 %v2923, %v3131
    %3133 = vmatmul.f32.gmra.mxu0 %v2762
    %v3134 = vpop.f32.mrf.mxu0
    %v3135 = vadd.f32 %v2928, %v3134
    %3136 = vmatmul.f32.gmra.mxu0 %v2764
    %v3137 = vpop.f32.mrf.mxu0
    %v3138 = vadd.f32 %v2933, %v3137
    %3139 = vmatmul.f32.gmra.mxu0 %v2766
    %v3140 = vpop.f32.mrf.mxu0
    %v3141 = vadd.f32 %v2938, %v3140
    %3142 = vmatmul.f32.gmra.mxu0 %v2768
    %v3143 = vpop.f32.mrf.mxu0
    %v3144 = vadd.f32 %v2943, %v3143
    %3145 = vmatmul.f32.gmra.mxu0 %v2770
    %v3146 = vpop.f32.mrf.mxu0
    %v3147 = vadd.f32 %v2948, %v3146
    %3148 = vmatmul.f32.gmra.mxu0 %v2772
    %v3149 = vpop.f32.mrf.mxu0
    %v3150 = vadd.f32 %v2953, %v3149
    %3151 = vmatmul.f32.gmra.mxu0 %v2774
    %v3152 = vpop.f32.mrf.mxu0
    %v3153 = vadd.f32 %v2958, %v3152
    %3154 = vdwg.mxu0
    %3155 = vmatpush.msra.mxu0 0.0
    %3156 = vmatpush.msra.mxu0 0.0
    %3157 = vmatpush.msra.mxu0 0.0
    %3158 = vmatpush.msra.mxu0 0.0
    %3159 = vmatpush.msra.mxu0 %v2885
    %3160 = vmatpush.msra.mxu0 %v2881
    %3161 = vmatpush.msra.mxu0 %v2877
    %3162 = vmatpush.msra.mxu0 %v2873
    %3163 = vmatpush.msra.mxu0 %v2869
    %3164 = vmatpush.msra.mxu0 %v2865
    %3165 = vmatpush.msra.mxu0 %v2861
    %3166 = vmatpush.msra.mxu0 %v2857
    %3167 = vmatpush.msra.mxu0 %v2853
    %3168 = vmatpush.msra.mxu0 %v2849
    %3169 = vmatpush.msra.mxu0 %v2845
    %3170 = vmatpush.msra.mxu0 %v2841
    %3171 = vmatmul.f32.gmra.mxu0 %v2961
    %v3172 = vpop.f32.mrf.mxu0
    %v3173 = vadd.f32 %v3120, %v3172
    %3174 = vmatmul.f32.gmra.mxu0 %v2964
    %v3175 = vpop.f32.mrf.mxu0
    %v3176 = vadd.f32 %v3123, %v3175
    %3177 = vmatmul.f32.gmra.mxu0 %v2967
    %v3178 = vpop.f32.mrf.mxu0
    %v3179 = vadd.f32 %v3126, %v3178
    %3180 = vmatmul.f32.gmra.mxu0 %v2970
    %v3181 = vpop.f32.mrf.mxu0
    %v3182 = vadd.f32 %v3129, %v3181
    %3183 = vmatmul.f32.gmra.mxu0 %v2973
    %v3184 = vpop.f32.mrf.mxu0
    %v3185 = vadd.f32 %v3132, %v3184
    %3186 = vmatmul.f32.gmra.mxu0 %v2976
    %v3187 = vpop.f32.mrf.mxu0
    %v3188 = vadd.f32 %v3135, %v3187
    %3189 = vmatmul.f32.gmra.mxu0 %v2979
    %v3190 = vpop.f32.mrf.mxu0
    %v3191 = vadd.f32 %v3138, %v3190
    %3192 = vmatmul.f32.gmra.mxu0 %v2982
    %v3193 = vpop.f32.mrf.mxu0
    %v3194 = vadd.f32 %v3141, %v3193
    %3195 = vmatmul.f32.gmra.mxu0 %v2985
    %v3196 = vpop.f32.mrf.mxu0
    %v3197 = vadd.f32 %v3144, %v3196
    %3198 = vmatmul.f32.gmra.mxu0 %v2988
    %v3199 = vpop.f32.mrf.mxu0
    %v3200 = vadd.f32 %v3147, %v3199
    %3201 = vmatmul.f32.gmra.mxu0 %v2991
    %v3202 = vpop.f32.mrf.mxu0
    %v3203 = vadd.f32 %v3150, %v3202
    %3204 = vmatmul.f32.gmra.mxu0 %v2994
    %v3205 = vpop.f32.mrf.mxu0
    %v3206 = vadd.f32 %v3153, %v3205
    %3207 = vdwg.mxu0
    %3208 = vmatpush.msra.mxu0 %v2838
    %3209 = vmatpush.msra.mxu0 %v2834
    %3210 = vmatpush.msra.mxu0 %v2830
    %3211 = vmatpush.msra.mxu0 %v2826
    %3212 = vmatpush.msra.mxu0 %v2822
    %3213 = vmatpush.msra.mxu0 %v2818
    %3214 = vmatpush.msra.mxu0 %v2814
    %3215 = vmatpush.msra.mxu0 %v2810
    %3216 = vmatpush.msra.mxu0 %v2806
    %3217 = vmatpush.msra.mxu0 %v2802
    %3218 = vmatpush.msra.mxu0 %v2798
    %3219 = vmatpush.msra.mxu0 %v2794
    %3220 = vmatpush.msra.mxu0 %v2790
    %3221 = vmatpush.msra.mxu0 %v2786
    %3222 = vmatpush.msra.mxu0 %v2782
    %3223 = vmatpush.msra.mxu0 %v2778
    %3224 = vmatmul.f32.gmra.mxu0 %v2752
    %v3225 = vpop.f32.mrf.mxu0
    %v3226 = vadd.f32 %v2903, %v3225
    %3227 = vmatmul.f32.gmra.mxu0 %v2754
    %v3228 = vpop.f32.mrf.mxu0
    %v3229 = vadd.f32 %v2908, %v3228
    %3230 = vmatmul.f32.gmra.mxu0 %v2756
    %v3231 = vpop.f32.mrf.mxu0
    %v3232 = vadd.f32 %v2913, %v3231
    %3233 = vmatmul.f32.gmra.mxu0 %v2758
    %v3234 = vpop.f32.mrf.mxu0
    %v3235 = vadd.f32 %v2918, %v3234
    %3236 = vmatmul.f32.gmra.mxu0 %v2760
    %v3237 = vpop.f32.mrf.mxu0
    %v3238 = vadd.f32 %v2923, %v3237
    %3239 = vmatmul.f32.gmra.mxu0 %v2762
    %v3240 = vpop.f32.mrf.mxu0
    %v3241 = vadd.f32 %v2928, %v3240
    %3242 = vmatmul.f32.gmra.mxu0 %v2764
    %v3243 = vpop.f32.mrf.mxu0
    %v3244 = vadd.f32 %v2933, %v3243
    %3245 = vmatmul.f32.gmra.mxu0 %v2766
    %v3246 = vpop.f32.mrf.mxu0
    %v3247 = vadd.f32 %v2938, %v3246
    %3248 = vmatmul.f32.gmra.mxu0 %v2768
    %v3249 = vpop.f32.mrf.mxu0
    %v3250 = vadd.f32 %v2943, %v3249
    %3251 = vmatmul.f32.gmra.mxu0 %v2770
    %v3252 = vpop.f32.mrf.mxu0
    %v3253 = vadd.f32 %v2948, %v3252
    %3254 = vmatmul.f32.gmra.mxu0 %v2772
    %v3255 = vpop.f32.mrf.mxu0
    %v3256 = vadd.f32 %v2953, %v3255
    %3257 = vmatmul.f32.gmra.mxu0 %v2774
    %v3258 = vpop.f32.mrf.mxu0
    %v3259 = vadd.f32 %v2958, %v3258
    %3260 = vdwg.mxu0
    %3261 = vmatpush.msra.mxu0 0.0
    %3262 = vmatpush.msra.mxu0 0.0
    %3263 = vmatpush.msra.mxu0 0.0
    %3264 = vmatpush.msra.mxu0 0.0
    %3265 = vmatpush.msra.mxu0 %v2886
    %3266 = vmatpush.msra.mxu0 %v2882
    %3267 = vmatpush.msra.mxu0 %v2878
    %3268 = vmatpush.msra.mxu0 %v2874
    %3269 = vmatpush.msra.mxu0 %v2870
    %3270 = vmatpush.msra.mxu0 %v2866
    %3271 = vmatpush.msra.mxu0 %v2862
    %3272 = vmatpush.msra.mxu0 %v2858
    %3273 = vmatpush.msra.mxu0 %v2854
    %3274 = vmatpush.msra.mxu0 %v2850
    %3275 = vmatpush.msra.mxu0 %v2846
    %3276 = vmatpush.msra.mxu0 %v2842
    %3277 = vmatmul.f32.gmra.mxu0 %v2961
    %v3278 = vpop.f32.mrf.mxu0
    %v3279 = vadd.f32 %v3226, %v3278
    %3280 = vmatmul.f32.gmra.mxu0 %v2964
    %v3281 = vpop.f32.mrf.mxu0
    %v3282 = vadd.f32 %v3229, %v3281
    %3283 = vmatmul.f32.gmra.mxu0 %v2967
    %v3284 = vpop.f32.mrf.mxu0
    %v3285 = vadd.f32 %v3232, %v3284
    %3286 = vmatmul.f32.gmra.mxu0 %v2970
    %v3287 = vpop.f32.mrf.mxu0
    %v3288 = vadd.f32 %v3235, %v3287
    %3289 = vmatmul.f32.gmra.mxu0 %v2973
    %v3290 = vpop.f32.mrf.mxu0
    %v3291 = vadd.f32 %v3238, %v3290
    %3292 = vmatmul.f32.gmra.mxu0 %v2976
    %v3293 = vpop.f32.mrf.mxu0
    %v3294 = vadd.f32 %v3241, %v3293
    %3295 = vmatmul.f32.gmra.mxu0 %v2979
    %v3296 = vpop.f32.mrf.mxu0
    %v3297 = vadd.f32 %v3244, %v3296
    %3298 = vmatmul.f32.gmra.mxu0 %v2982
    %v3299 = vpop.f32.mrf.mxu0
    %v3300 = vadd.f32 %v3247, %v3299
    %3301 = vmatmul.f32.gmra.mxu0 %v2985
    %v3302 = vpop.f32.mrf.mxu0
    %v3303 = vadd.f32 %v3250, %v3302
    %3304 = vmatmul.f32.gmra.mxu0 %v2988
    %v3305 = vpop.f32.mrf.mxu0
    %v3306 = vadd.f32 %v3253, %v3305
    %3307 = vmatmul.f32.gmra.mxu0 %v2991
    %v3308 = vpop.f32.mrf.mxu0
    %v3309 = vadd.f32 %v3256, %v3308
    %3310 = vmatmul.f32.gmra.mxu0 %v2994
    %v3311 = vpop.f32.mrf.mxu0
    %v3312 = vadd.f32 %v3259, %v3311
    %3313 = vdwg.mxu0
    %3314 = vmatpush.msra.mxu0 %v2839
    %3315 = vmatpush.msra.mxu0 %v2835
    %3316 = vmatpush.msra.mxu0 %v2831
    %3317 = vmatpush.msra.mxu0 %v2827
    %3318 = vmatpush.msra.mxu0 %v2823
    %3319 = vmatpush.msra.mxu0 %v2819
    %3320 = vmatpush.msra.mxu0 %v2815
    %3321 = vmatpush.msra.mxu0 %v2811
    %3322 = vmatpush.msra.mxu0 %v2807
    %3323 = vmatpush.msra.mxu0 %v2803
    %3324 = vmatpush.msra.mxu0 %v2799
    %3325 = vmatpush.msra.mxu0 %v2795
    %3326 = vmatpush.msra.mxu0 %v2791
    %3327 = vmatpush.msra.mxu0 %v2787
    %3328 = vmatpush.msra.mxu0 %v2783
    %3329 = vmatpush.msra.mxu0 %v2779
    %3330 = vmatmul.f32.gmra.mxu0 %v2752
    %v3331 = vpop.f32.mrf.mxu0
    %v3332 = vadd.f32 %v2903, %v3331
    %3333 = vmatmul.f32.gmra.mxu0 %v2754
    %v3334 = vpop.f32.mrf.mxu0
    %v3335 = vadd.f32 %v2908, %v3334
    %3336 = vmatmul.f32.gmra.mxu0 %v2756
    %v3337 = vpop.f32.mrf.mxu0
    %v3338 = vadd.f32 %v2913, %v3337
    %3339 = vmatmul.f32.gmra.mxu0 %v2758
    %v3340 = vpop.f32.mrf.mxu0
    %v3341 = vadd.f32 %v2918, %v3340
    %3342 = vmatmul.f32.gmra.mxu0 %v2760
    %v3343 = vpop.f32.mrf.mxu0
    %v3344 = vadd.f32 %v2923, %v3343
    %3345 = vmatmul.f32.gmra.mxu0 %v2762
    %v3346 = vpop.f32.mrf.mxu0
    %v3347 = vadd.f32 %v2928, %v3346
    %3348 = vmatmul.f32.gmra.mxu0 %v2764
    %v3349 = vpop.f32.mrf.mxu0
    %v3350 = vadd.f32 %v2933, %v3349
    %3351 = vmatmul.f32.gmra.mxu0 %v2766
    %v3352 = vpop.f32.mrf.mxu0
    %v3353 = vadd.f32 %v2938, %v3352
    %3354 = vmatmul.f32.gmra.mxu0 %v2768
    %v3355 = vpop.f32.mrf.mxu0
    %v3356 = vadd.f32 %v2943, %v3355
    %3357 = vmatmul.f32.gmra.mxu0 %v2770
    %v3358 = vpop.f32.mrf.mxu0
    %v3359 = vadd.f32 %v2948, %v3358
    %3360 = vmatmul.f32.gmra.mxu0 %v2772
    %v3361 = vpop.f32.mrf.mxu0
    %v3362 = vadd.f32 %v2953, %v3361
    %3363 = vmatmul.f32.gmra.mxu0 %v2774
    %v3364 = vpop.f32.mrf.mxu0
    %v3365 = vadd.f32 %v2958, %v3364
    %3366 = vdwg.mxu0
    %3367 = vmatpush.msra.mxu0 0.0
    %3368 = vmatpush.msra.mxu0 0.0
    %3369 = vmatpush.msra.mxu0 0.0
    %3370 = vmatpush.msra.mxu0 0.0
    %3371 = vmatpush.msra.mxu0 %v2887
    %3372 = vmatpush.msra.mxu0 %v2883
    %3373 = vmatpush.msra.mxu0 %v2879
    %3374 = vmatpush.msra.mxu0 %v2875
    %3375 = vmatpush.msra.mxu0 %v2871
    %3376 = vmatpush.msra.mxu0 %v2867
    %3377 = vmatpush.msra.mxu0 %v2863
    %3378 = vmatpush.msra.mxu0 %v2859
    %3379 = vmatpush.msra.mxu0 %v2855
    %3380 = vmatpush.msra.mxu0 %v2851
    %3381 = vmatpush.msra.mxu0 %v2847
    %3382 = vmatpush.msra.mxu0 %v2843
    %3383 = vmatmul.f32.gmra.mxu0 %v2961
    %v3384 = vpop.f32.mrf.mxu0
    %v3385 = vadd.f32 %v3332, %v3384
    %3386 = vmatmul.f32.gmra.mxu0 %v2964
    %v3387 = vpop.f32.mrf.mxu0
    %v3388 = vadd.f32 %v3335, %v3387
    %3389 = vmatmul.f32.gmra.mxu0 %v2967
    %v3390 = vpop.f32.mrf.mxu0
    %v3391 = vadd.f32 %v3338, %v3390
    %3392 = vmatmul.f32.gmra.mxu0 %v2970
    %v3393 = vpop.f32.mrf.mxu0
    %v3394 = vadd.f32 %v3341, %v3393
    %3395 = vmatmul.f32.gmra.mxu0 %v2973
    %v3396 = vpop.f32.mrf.mxu0
    %v3397 = vadd.f32 %v3344, %v3396
    %3398 = vmatmul.f32.gmra.mxu0 %v2976
    %v3399 = vpop.f32.mrf.mxu0
    %v3400 = vadd.f32 %v3347, %v3399
    %3401 = vmatmul.f32.gmra.mxu0 %v2979
    %v3402 = vpop.f32.mrf.mxu0
    %v3403 = vadd.f32 %v3350, %v3402
    %3404 = vmatmul.f32.gmra.mxu0 %v2982
    %v3405 = vpop.f32.mrf.mxu0
    %v3406 = vadd.f32 %v3353, %v3405
    %3407 = vmatmul.f32.gmra.mxu0 %v2985
    %v3408 = vpop.f32.mrf.mxu0
    %v3409 = vadd.f32 %v3356, %v3408
    %3410 = vmatmul.f32.gmra.mxu0 %v2988
    %v3411 = vpop.f32.mrf.mxu0
    %v3412 = vadd.f32 %v3359, %v3411
    %3413 = vmatmul.f32.gmra.mxu0 %v2991
    %v3414 = vpop.f32.mrf.mxu0
    %v3415 = vadd.f32 %v3362, %v3414
    %3416 = vmatmul.f32.gmra.mxu0 %v2994
    %v3417 = vpop.f32.mrf.mxu0
    %v3418 = vadd.f32 %v3365, %v3417
    %3419 = vdwg.mxu0
    %v3420 = vtanh.pop %v3067
    %v3421 = vtanh.pop %v3173
    %v3422 = vtanh.pop %v3279
    %v3423 = vtanh.pop %v3385
    %v3424 = vtanh.pop %v3070
    %v3425 = vtanh.pop %v3176
    %v3426 = vtanh.pop %v3282
    %v3427 = vtanh.pop %v3388
    %v3428 = vtanh.pop %v3073
    %v3429 = vtanh.pop %v3179
    %v3430 = vtanh.pop %v3285
    %v3431 = vtanh.pop %v3391
    %v3432 = vtanh.pop %v3076
    %v3433 = vtanh.pop %v3182
    %v3434 = vtanh.pop %v3288
    %v3435 = vtanh.pop %v3394
    %v3436 = vtanh.pop %v3079
    %v3437 = vtanh.pop %v3185
    %v3438 = vtanh.pop %v3291
    %v3439 = vtanh.pop %v3397
    %v3440 = vtanh.pop %v3082
    %v3441 = vtanh.pop %v3188
    %v3442 = vtanh.pop %v3294
    %v3443 = vtanh.pop %v3400
    %v3444 = vtanh.pop %v3085
    %v3445 = vtanh.pop %v3191
    %v3446 = vtanh.pop %v3297
    %v3447 = vtanh.pop %v3403
    %v3448 = vtanh.pop %v3088
    %v3449 = vtanh.pop %v3194
    %v3450 = vtanh.pop %v3300
    %v3451 = vtanh.pop %v3406
    %v3452 = vadd.f32 %v3420, %v3436
    %v3453 = vadd.f32 %v3421, %v3437
    %v3454 = vadd.f32 %v3422, %v3438
    %v3455 = vadd.f32 %v3423, %v3439
    %v3456 = vadd.f32 %v3424, %v3440
    %v3457 = vadd.f32 %v3425, %v3441
    %v3458 = vadd.f32 %v3426, %v3442
    %v3459 = vadd.f32 %v3427, %v3443
    %v3460 = vadd.f32 %v3428, %v3444
    %v3461 = vadd.f32 %v3429, %v3445
    %v3462 = vadd.f32 %v3430, %v3446
    %v3463 = vadd.f32 %v3431, %v3447
    %v3464 = vadd.f32 %v3432, %v3448
    %v3465 = vadd.f32 %v3433, %v3449
    %v3466 = vadd.f32 %v3434, %v3450
    %v3467 = vadd.f32 %v3435, %v3451
    %v3468 = vtanh.pop %v3091
    %v3469 = vtanh.pop %v3197
    %v3470 = vtanh.pop %v3303
    %v3471 = vtanh.pop %v3409
    %v3472 = vtanh.pop %v3094
    %v3473 = vtanh.pop %v3200
    %v3474 = vtanh.pop %v3306
    %v3475 = vtanh.pop %v3412
    %v3476 = vtanh.pop %v3097
    %v3477 = vtanh.pop %v3203
    %v3478 = vtanh.pop %v3309
    %v3479 = vtanh.pop %v3415
    %v3480 = vtanh.pop %v3100
    %v3481 = vtanh.pop %v3206
    %v3482 = vtanh.pop %v3312
    %v3483 = vtanh.pop %v3418
    %v3484 = vadd.f32 %v3452, %v3468
    %v3485 = vadd.f32 %v3453, %v3469
    %v3486 = vadd.f32 %v3454, %v3470
    %v3487 = vadd.f32 %v3455, %v3471
    %v3488 = vadd.f32 %v3456, %v3472
    %v3489 = vadd.f32 %v3457, %v3473
    %v3490 = vadd.f32 %v3458, %v3474
    %v3491 = vadd.f32 %v3459, %v3475
    %v3492 = vadd.f32 %v3460, %v3476
    %v3493 = vadd.f32 %v3461, %v3477
    %v3494 = vadd.f32 %v3462, %v3478
    %v3495 = vadd.f32 %v3463, %v3479
    %v3496 = vadd.f32 %v3464, %v3480
    %v3497 = vadd.f32 %v3465, %v3481
    %v3498 = vadd.f32 %v3466, %v3482
    %v3499 = vadd.f32 %v3467, %v3483
    %v3500 = vtanh.pop %v3484
    %v3501 = vtanh.pop %v3485
    %v3502 = vtanh.pop %v3486
    %v3503 = vtanh.pop %v3487
    %v3504 = vtanh.pop %v3488
    %v3505 = vtanh.pop %v3489
    %v3506 = vtanh.pop %v3490
    %v3507 = vtanh.pop %v3491
    %v3508 = vtanh.pop %v3492
    %v3509 = vtanh.pop %v3493
    %v3510 = vtanh.pop %v3494
    %v3511 = vtanh.pop %v3495
    %v3512 = vtanh.pop %v3496
    %v3513 = vtanh.pop %v3497
    %v3514 = vtanh.pop %v3498
    %v3515 = vtanh.pop %v3499
    %3516 = vst [vmem:[#allocation3] sm:$0xff] %v3500
    %3517 = vst [vmem:[#allocation3 + $0x8] sm:$0xff] %v3501
    %3518 = vst [vmem:[#allocation3 + $0x10] sm:$0xff] %v3502
    %3519 = vst [vmem:[#allocation3 + $0x18] sm:$0xff] %v3503
    %3520 = vst [vmem:[#allocation3 + $0x20] sm:$0xff] %v3504
    %3521 = vst [vmem:[#allocation3 + $0x28] sm:$0xff] %v3505
    %3522 = vst [vmem:[#allocation3 + $0x30] sm:$0xff] %v3506
    %3523 = vst [vmem:[#allocation3 + $0x38] sm:$0xff] %v3507
    %3524 = vst [vmem:[#allocation3 + $0x40] sm:$0xff] %v3508
    %3525 = vst [vmem:[#allocation3 + $0x48] sm:$0xff] %v3509
    %3526 = vst [vmem:[#allocation3 + $0x50] sm:$0xff] %v3510
    %3527 = vst [vmem:[#allocation3 + $0x58] sm:$0xff] %v3511
    %3528 = vst [vmem:[#allocation3 + $0x60] sm:$0xff] %v3512
    %3529 = vst [vmem:[#allocation3 + $0x68] sm:$0xff] %v3513
    %3530 = vst [vmem:[#allocation3 + $0x70] sm:$0xff] %v3514
    %3531 = vst [vmem:[#allocation3 + $0x78] sm:$0xff] %v3515
    %v3532 = vld [vmem:[#allocation3] sm:$0xff]
    %v3533 = vld [vmem:[#allocation3 + $0x8] sm:$0xff]
    %v3534 = vld [vmem:[#allocation3 + $0x10] sm:$0xff]
    %v3535 = vld [vmem:[#allocation3 + $0x18] sm:$0xff]
    %v3536 = vld [vmem:[#allocation3 + $0x20] sm:$0xff]
    %v3537 = vld [vmem:[#allocation3 + $0x28] sm:$0xff]
    %v3538 = vld [vmem:[#allocation3 + $0x30] sm:$0xff]
    %v3539 = vld [vmem:[#allocation3 + $0x38] sm:$0xff]
    %v3540 = vld [vmem:[#allocation3 + $0x40] sm:$0xff]
    %v3541 = vld [vmem:[#allocation3 + $0x48] sm:$0xff]
    %v3542 = vld [vmem:[#allocation3 + $0x50] sm:$0xff]
    %v3543 = vld [vmem:[#allocation3 + $0x58] sm:$0xff]
    %v3544 = vld [vmem:[#allocation3 + $0x60] sm:$0xff]
    %v3545 = vld [vmem:[#allocation3 + $0x68] sm:$0xff]
    %v3546 = vld [vmem:[#allocation3 + $0x70] sm:$0xff]
    %v3547 = vld [vmem:[#allocation3 + $0x78] sm:$0xff]
    %3548 = vrot.lane.b32.xlu0 %v3532, 1
    %v3549 = vpop.permute.xlu0 %3548
    %3550 = vrot.lane.b32.xlu0 %v3536, 1
    %v3551 = vpop.permute.xlu0 %3550
    %3552 = vrot.lane.b32.xlu0 %v3540, 1
    %v3553 = vpop.permute.xlu0 %3552
    %3554 = vrot.lane.b32.xlu0 %v3544, 1
    %v3555 = vpop.permute.xlu0 %3554
    %3556 = vrot.lane.b32.xlu0 %v3533, 1
    %v3557 = vpop.permute.xlu0 %3556
    %3558 = vrot.lane.b32.xlu0 %v3537, 1
    %v3559 = vpop.permute.xlu0 %3558
    %3560 = vrot.lane.b32.xlu0 %v3541, 1
    %v3561 = vpop.permute.xlu0 %3560
    %3562 = vrot.lane.b32.xlu0 %v3545, 1
    %v3563 = vpop.permute.xlu0 %3562
    %3564 = vrot.lane.b32.xlu0 %v3534, 1
    %v3565 = vpop.permute.xlu0 %3564
    %3566 = vrot.lane.b32.xlu0 %v3538, 1
    %v3567 = vpop.permute.xlu0 %3566
    %3568 = vrot.lane.b32.xlu0 %v3542, 1
    %v3569 = vpop.permute.xlu0 %3568
    %3570 = vrot.lane.b32.xlu0 %v3546, 1
    %v3571 = vpop.permute.xlu0 %3570
    %3572 = vrot.lane.b32.xlu0 %v3535, 1
    %v3573 = vpop.permute.xlu0 %3572
    %3574 = vrot.lane.b32.xlu0 %v3539, 1
    %v3575 = vpop.permute.xlu0 %3574
    %3576 = vrot.lane.b32.xlu0 %v3543, 1
    %v3577 = vpop.permute.xlu0 %3576
    %3578 = vrot.lane.b32.xlu0 %v3547, 1
    %v3579 = vpop.permute.xlu0 %3578
    %v3580 = vsel %vm220, %v3565, %v3573
    %v3581 = vsel %vm220, %v3567, %v3575
    %v3582 = vsel %vm220, %v3569, %v3577
    %v3583 = vsel %vm220, %v3571, %v3579
    %v3584 = vsel %vm220, %v3557, %v3565
    %v3585 = vsel %vm220, %v3559, %v3567
    %v3586 = vsel %vm220, %v3561, %v3569
    %v3587 = vsel %vm220, %v3563, %v3571
    %v3588 = vsel %vm220, %v3549, %v3557
    %v3589 = vsel %vm220, %v3551, %v3559
    %v3590 = vsel %vm220, %v3553, %v3561
    %v3591 = vsel %vm220, %v3555, %v3563
    %v3592 = vsel %vm220, %v3573, %v3549
    %v3593 = vsel %vm220, %v3575, %v3551
    %v3594 = vsel %vm220, %v3577, %v3553
    %v3595 = vsel %vm220, %v3579, %v3555
    %v3596 = vsel %vm1143, %v3592, 0.0
    %v3597 = vsel %vm1144, %v3588, 0.0
    %v3598 = vsel %vm1145, %v3584, 0.0
    %v3599 = vsel %vm1146, %v3580, 0.0
    %v3600 = vsel %vm1143, %v3593, 0.0
    %v3601 = vsel %vm1144, %v3589, 0.0
    %v3602 = vsel %vm1145, %v3585, 0.0
    %v3603 = vsel %vm1146, %v3581, 0.0
    %v3604 = vsel %vm1143, %v3594, 0.0
    %v3605 = vsel %vm1144, %v3590, 0.0
    %v3606 = vsel %vm1145, %v3586, 0.0
    %v3607 = vsel %vm1146, %v3582, 0.0
    %v3608 = vsel %vm1143, %v3595, 0.0
    %v3609 = vsel %vm1144, %v3591, 0.0
    %v3610 = vsel %vm1145, %v3587, 0.0
    %v3611 = vsel %vm1146, %v3583, 0.0
    %3612 = vst [vmem:[#allocation2] sm:$0xff] %v3596
    %3613 = vst [vmem:[#allocation2 + $0x8] sm:$0xff] %v3597
    %3614 = vst [vmem:[#allocation2 + $0x10] sm:$0xff] %v3598
    %3615 = vst [vmem:[#allocation2 + $0x18] sm:$0xff] %v3599
    %3616 = vst [vmem:[#allocation2 + $0x20] sm:$0xff] %v3600
    %3617 = vst [vmem:[#allocation2 + $0x28] sm:$0xff] %v3601
    %3618 = vst [vmem:[#allocation2 + $0x30] sm:$0xff] %v3602
    %3619 = vst [vmem:[#allocation2 + $0x38] sm:$0xff] %v3603
    %3620 = vst [vmem:[#allocation2 + $0x40] sm:$0xff] %v3604
    %3621 = vst [vmem:[#allocation2 + $0x48] sm:$0xff] %v3605
    %3622 = vst [vmem:[#allocation2 + $0x50] sm:$0xff] %v3606
    %3623 = vst [vmem:[#allocation2 + $0x58] sm:$0xff] %v3607
    %3624 = vst [vmem:[#allocation2 + $0x60] sm:$0xff] %v3608
    %3625 = vst [vmem:[#allocation2 + $0x68] sm:$0xff] %v3609
    %3626 = vst [vmem:[#allocation2 + $0x70] sm:$0xff] %v3610
    %3627 = vst [vmem:[#allocation2 + $0x78] sm:$0xff] %v3611
    %3628 = vst [vmem:[#allocation2 + $0x80] sm:$0xff] %v3532
    %3629 = vst [vmem:[#allocation2 + $0x88] sm:$0xff] %v3533
    %3630 = vst [vmem:[#allocation2 + $0x90] sm:$0xff] %v3534
    %3631 = vst [vmem:[#allocation2 + $0x98] sm:$0xff] %v3535
    %3632 = vst [vmem:[#allocation2 + $0xa0] sm:$0xff] %v3536
    %3633 = vst [vmem:[#allocation2 + $0xa8] sm:$0xff] %v3537
    %3634 = vst [vmem:[#allocation2 + $0xb0] sm:$0xff] %v3538
    %3635 = vst [vmem:[#allocation2 + $0xb8] sm:$0xff] %v3539
    %3636 = vst [vmem:[#allocation2 + $0xc0] sm:$0xff] %v3540
    %3637 = vst [vmem:[#allocation2 + $0xc8] sm:$0xff] %v3541
    %3638 = vst [vmem:[#allocation2 + $0xd0] sm:$0xff] %v3542
    %3639 = vst [vmem:[#allocation2 + $0xd8] sm:$0xff] %v3543
    %3640 = vst [vmem:[#allocation2 + $0xe0] sm:$0xff] %v3544
    %3641 = vst [vmem:[#allocation2 + $0xe8] sm:$0xff] %v3545
    %3642 = vst [vmem:[#allocation2 + $0xf0] sm:$0xff] %v3546
    %3643 = vst [vmem:[#allocation2 + $0xf8] sm:$0xff] %v3547
    %3644 = vrot.lane.b32.xlu0 %v3532, 127
    %v3645 = vpop.permute.xlu0 %3644
    %3646 = vrot.lane.b32.xlu0 %v3536, 127
    %v3647 = vpop.permute.xlu0 %3646
    %3648 = vrot.lane.b32.xlu0 %v3540, 127
    %v3649 = vpop.permute.xlu0 %3648
    %3650 = vrot.lane.b32.xlu0 %v3544, 127
    %v3651 = vpop.permute.xlu0 %3650
    %3652 = vrot.lane.b32.xlu0 %v3533, 127
    %v3653 = vpop.permute.xlu0 %3652
    %3654 = vrot.lane.b32.xlu0 %v3537, 127
    %v3655 = vpop.permute.xlu0 %3654
    %3656 = vrot.lane.b32.xlu0 %v3541, 127
    %v3657 = vpop.permute.xlu0 %3656
    %3658 = vrot.lane.b32.xlu0 %v3545, 127
    %v3659 = vpop.permute.xlu0 %3658
    %3660 = vrot.lane.b32.xlu0 %v3534, 127
    %v3661 = vpop.permute.xlu0 %3660
    %3662 = vrot.lane.b32.xlu0 %v3538, 127
    %v3663 = vpop.permute.xlu0 %3662
    %3664 = vrot.lane.b32.xlu0 %v3542, 127
    %v3665 = vpop.permute.xlu0 %3664
    %3666 = vrot.lane.b32.xlu0 %v3546, 127
    %v3667 = vpop.permute.xlu0 %3666
    %3668 = vrot.lane.b32.xlu0 %v3535, 127
    %v3669 = vpop.permute.xlu0 %3668
    %3670 = vrot.lane.b32.xlu0 %v3539, 127
    %v3671 = vpop.permute.xlu0 %3670
    %3672 = vrot.lane.b32.xlu0 %v3543, 127
    %v3673 = vpop.permute.xlu0 %3672
    %3674 = vrot.lane.b32.xlu0 %v3547, 127
    %v3675 = vpop.permute.xlu0 %3674
    %v3676 = vsel %vm270, %v3661, %v3669
    %v3677 = vsel %vm270, %v3663, %v3671
    %v3678 = vsel %vm270, %v3665, %v3673
    %v3679 = vsel %vm270, %v3667, %v3675
    %v3680 = vsel %vm270, %v3653, %v3661
    %v3681 = vsel %vm270, %v3655, %v3663
    %v3682 = vsel %vm270, %v3657, %v3665
    %v3683 = vsel %vm270, %v3659, %v3667
    %v3684 = vsel %vm270, %v3645, %v3653
    %v3685 = vsel %vm270, %v3647, %v3655
    %v3686 = vsel %vm270, %v3649, %v3657
    %v3687 = vsel %vm270, %v3651, %v3659
    %v3688 = vsel %vm270, %v3669, %v3645
    %v3689 = vsel %vm270, %v3671, %v3647
    %v3690 = vsel %vm270, %v3673, %v3649
    %v3691 = vsel %vm270, %v3675, %v3651
    %v3692 = vsel %vm1247, %v3684, 0.0
    %v3693 = vsel %vm1248, %v3680, 0.0
    %v3694 = vsel %vm1249, %v3676, 0.0
    %v3695 = vsel %vm1250, %v3688, 0.0
    %v3696 = vsel %vm1247, %v3685, 0.0
    %v3697 = vsel %vm1248, %v3681, 0.0
    %v3698 = vsel %vm1249, %v3677, 0.0
    %v3699 = vsel %vm1250, %v3689, 0.0
    %v3700 = vsel %vm1247, %v3686, 0.0
    %v3701 = vsel %vm1248, %v3682, 0.0
    %v3702 = vsel %vm1249, %v3678, 0.0
    %v3703 = vsel %vm1250, %v3690, 0.0
    %v3704 = vsel %vm1247, %v3687, 0.0
    %v3705 = vsel %vm1248, %v3683, 0.0
    %v3706 = vsel %vm1249, %v3679, 0.0
    %v3707 = vsel %vm1250, %v3691, 0.0
    %3708 = vst [vmem:[#allocation2 + $0x100] sm:$0xff] %v3692
    %3709 = vst [vmem:[#allocation2 + $0x108] sm:$0xff] %v3693
    %3710 = vst [vmem:[#allocation2 + $0x110] sm:$0xff] %v3694
    %3711 = vst [vmem:[#allocation2 + $0x118] sm:$0xff] %v3695
    %3712 = vst [vmem:[#allocation2 + $0x120] sm:$0xff] %v3696
    %3713 = vst [vmem:[#allocation2 + $0x128] sm:$0xff] %v3697
    %3714 = vst [vmem:[#allocation2 + $0x130] sm:$0xff] %v3698
    %3715 = vst [vmem:[#allocation2 + $0x138] sm:$0xff] %v3699
    %3716 = vst [vmem:[#allocation2 + $0x140] sm:$0xff] %v3700
    %3717 = vst [vmem:[#allocation2 + $0x148] sm:$0xff] %v3701
    %3718 = vst [vmem:[#allocation2 + $0x150] sm:$0xff] %v3702
    %3719 = vst [vmem:[#allocation2 + $0x158] sm:$0xff] %v3703
    %3720 = vst [vmem:[#allocation2 + $0x160] sm:$0xff] %v3704
    %3721 = vst [vmem:[#allocation2 + $0x168] sm:$0xff] %v3705
    %3722 = vst [vmem:[#allocation2 + $0x170] sm:$0xff] %v3706
    %3723 = vst [vmem:[#allocation2 + $0x178] sm:$0xff] %v3707
    %v3724 = vld [vmem:[%s7] sm:$0xff]
    %v3725 = vld [vmem:[#allocation2] sm:$0xff]
    %v3726 = vld [vmem:[#allocation2 + $0x8] sm:$0xff]
    %v3727 = vld [vmem:[#allocation2 + $0x10] sm:$0xff]
    %v3728 = vld [vmem:[#allocation2 + $0x18] sm:$0xff]
    %v3729 = vld [vmem:[#allocation2 + $0x20] sm:$0xff]
    %v3730 = vld [vmem:[#allocation2 + $0x28] sm:$0xff]
    %v3731 = vld [vmem:[#allocation2 + $0x30] sm:$0xff]
    %v3732 = vld [vmem:[#allocation2 + $0x38] sm:$0xff]
    %v3733 = vld [vmem:[#allocation2 + $0x40] sm:$0xff]
    %v3734 = vld [vmem:[#allocation2 + $0x48] sm:$0xff]
    %v3735 = vld [vmem:[#allocation2 + $0x50] sm:$0xff]
    %v3736 = vld [vmem:[#allocation2 + $0x58] sm:$0xff]
    %v3737 = vld [vmem:[#allocation2 + $0x60] sm:$0xff]
    %v3738 = vld [vmem:[#allocation2 + $0x68] sm:$0xff]
    %v3739 = vld [vmem:[#allocation2 + $0x70] sm:$0xff]
    %v3740 = vld [vmem:[#allocation2 + $0x78] sm:$0xff]
    %v3741 = vld [vmem:[#allocation2 + $0x80] sm:$0xff]
    %v3742 = vld [vmem:[#allocation2 + $0x88] sm:$0xff]
    %v3743 = vld [vmem:[#allocation2 + $0x90] sm:$0xff]
    %v3744 = vld [vmem:[#allocation2 + $0x98] sm:$0xff]
    %v3745 = vld [vmem:[#allocation2 + $0xa0] sm:$0xff]
    %v3746 = vld [vmem:[#allocation2 + $0xa8] sm:$0xff]
    %v3747 = vld [vmem:[#allocation2 + $0xb0] sm:$0xff]
    %v3748 = vld [vmem:[#allocation2 + $0xb8] sm:$0xff]
    %v3749 = vld [vmem:[#allocation2 + $0xc0] sm:$0xff]
    %v3750 = vld [vmem:[#allocation2 + $0xc8] sm:$0xff]
    %v3751 = vld [vmem:[#allocation2 + $0xd0] sm:$0xff]
    %v3752 = vld [vmem:[#allocation2 + $0xd8] sm:$0xff]
    %v3753 = vld [vmem:[#allocation2 + $0xe0] sm:$0xff]
    %v3754 = vld [vmem:[#allocation2 + $0xe8] sm:$0xff]
    %v3755 = vld [vmem:[#allocation2 + $0xf0] sm:$0xff]
    %v3756 = vld [vmem:[#allocation2 + $0xf8] sm:$0xff]
    %v3757 = vld [vmem:[#allocation2 + $0x100] sm:$0xff]
    %v3758 = vld [vmem:[#allocation2 + $0x108] sm:$0xff]
    %v3759 = vld [vmem:[#allocation2 + $0x110] sm:$0xff]
    %v3760 = vld [vmem:[#allocation2 + $0x118] sm:$0xff]
    %v3761 = vld [vmem:[#allocation2 + $0x120] sm:$0xff]
    %v3762 = vld [vmem:[#allocation2 + $0x128] sm:$0xff]
    %v3763 = vld [vmem:[#allocation2 + $0x130] sm:$0xff]
    %v3764 = vld [vmem:[#allocation2 + $0x138] sm:$0xff]
    %v3765 = vld [vmem:[#allocation2 + $0x140] sm:$0xff]
    %v3766 = vld [vmem:[#allocation2 + $0x148] sm:$0xff]
    %v3767 = vld [vmem:[#allocation2 + $0x150] sm:$0xff]
    %v3768 = vld [vmem:[#allocation2 + $0x158] sm:$0xff]
    %v3769 = vld [vmem:[#allocation2 + $0x160] sm:$0xff]
    %v3770 = vld [vmem:[#allocation2 + $0x168] sm:$0xff]
    %v3771 = vld [vmem:[#allocation2 + $0x170] sm:$0xff]
    %v3772 = vld [vmem:[#allocation2 + $0x178] sm:$0xff]
    %v3773 = vld [vmem:[%s8] sm:$0xff]
    %3775 = vset.pattern.permute.xlu0 0
    %3776 = vperm.xlu0 %3775, %v3773
    %v3777 = vpop.permute.xlu0 %3776
    %v3780 = vsel %vm1667, %v3724, 0
    %3782 = vmatpush.msra.mxu0 0.0
    %3783 = vmatpush.msra.mxu0 0.0
    %3784 = vmatpush.msra.mxu0 0.0
    %3785 = vmatpush.msra.mxu0 0.0
    %3786 = vmatpush.msra.mxu0 %v3769
    %3787 = vmatpush.msra.mxu0 %v3765
    %3788 = vmatpush.msra.mxu0 %v3761
    %3789 = vmatpush.msra.mxu0 %v3757
    %3790 = vmatpush.msra.mxu0 %v3753
    %3791 = vmatpush.msra.mxu0 %v3749
    %3792 = vmatpush.msra.mxu0 %v3745
    %3793 = vmatpush.msra.mxu0 %v3741
    %3794 = vmatpush.msra.mxu0 %v3737
    %3795 = vmatpush.msra.mxu0 %v3733
    %3796 = vmatpush.msra.mxu0 %v3729
    %3797 = vmatpush.msra.mxu0 %v3725
    %3798 = vmatmul.f32.gmra.mxu0 %v3780
    %v3799 = vpop.f32.mrf.mxu0
    %v3800 = vadd.f32 %v3777, %v3799
    %3801 = vdwg.mxu0
    %3802 = vmatpush.msra.mxu0 0.0
    %3803 = vmatpush.msra.mxu0 0.0
    %3804 = vmatpush.msra.mxu0 0.0
    %3805 = vmatpush.msra.mxu0 0.0
    %3806 = vmatpush.msra.mxu0 %v3770
    %3807 = vmatpush.msra.mxu0 %v3766
    %3808 = vmatpush.msra.mxu0 %v3762
    %3809 = vmatpush.msra.mxu0 %v3758
    %3810 = vmatpush.msra.mxu0 %v3754
    %3811 = vmatpush.msra.mxu0 %v3750
    %3812 = vmatpush.msra.mxu0 %v3746
    %3813 = vmatpush.msra.mxu0 %v3742
    %3814 = vmatpush.msra.mxu0 %v3738
    %3815 = vmatpush.msra.mxu0 %v3734
    %3816 = vmatpush.msra.mxu0 %v3730
    %3817 = vmatpush.msra.mxu0 %v3726
    %3818 = vmatmul.f32.gmra.mxu0 %v3780
    %v3819 = vpop.f32.mrf.mxu0
    %v3820 = vadd.f32 %v3777, %v3819
    %3821 = vdwg.mxu0
    %3822 = vmatpush.msra.mxu0 0.0
    %3823 = vmatpush.msra.mxu0 0.0
    %3824 = vmatpush.msra.mxu0 0.0
    %3825 = vmatpush.msra.mxu0 0.0
    %3826 = vmatpush.msra.mxu0 %v3771
    %3827 = vmatpush.msra.mxu0 %v3767
    %3828 = vmatpush.msra.mxu0 %v3763
    %3829 = vmatpush.msra.mxu0 %v3759
    %3830 = vmatpush.msra.mxu0 %v3755
    %3831 = vmatpush.msra.mxu0 %v3751
    %3832 = vmatpush.msra.mxu0 %v3747
    %3833 = vmatpush.msra.mxu0 %v3743
    %3834 = vmatpush.msra.mxu0 %v3739
    %3835 = vmatpush.msra.mxu0 %v3735
    %3836 = vmatpush.msra.mxu0 %v3731
    %3837 = vmatpush.msra.mxu0 %v3727
    %3838 = vmatmul.f32.gmra.mxu0 %v3780
    %v3839 = vpop.f32.mrf.mxu0
    %v3840 = vadd.f32 %v3777, %v3839
    %3841 = vdwg.mxu0
    %3842 = vmatpush.msra.mxu0 0.0
    %3843 = vmatpush.msra.mxu0 0.0
    %3844 = vmatpush.msra.mxu0 0.0
    %3845 = vmatpush.msra.mxu0 0.0
    %3846 = vmatpush.msra.mxu0 %v3772
    %3847 = vmatpush.msra.mxu0 %v3768
    %3848 = vmatpush.msra.mxu0 %v3764
    %3849 = vmatpush.msra.mxu0 %v3760
    %3850 = vmatpush.msra.mxu0 %v3756
    %3851 = vmatpush.msra.mxu0 %v3752
    %3852 = vmatpush.msra.mxu0 %v3748
    %3853 = vmatpush.msra.mxu0 %v3744
    %3854 = vmatpush.msra.mxu0 %v3740
    %3855 = vmatpush.msra.mxu0 %v3736
    %3856 = vmatpush.msra.mxu0 %v3732
    %3857 = vmatpush.msra.mxu0 %v3728
    %3858 = vmatmul.f32.gmra.mxu0 %v3780
    %v3859 = vpop.f32.mrf.mxu0
    %v3860 = vadd.f32 %v3777, %v3859
    %3861 = vdwg.mxu0
    %v3862 = vtanh.pop %v3800
    %v3863 = vtanh.pop %v3820
    %v3864 = vtanh.pop %v3840
    %v3865 = vtanh.pop %v3860
    %3866 = vrot.lane.b32.xlu0 %v3862, 1
    %v3867 = vpop.permute.xlu0 %3866
    %3868 = vrot.lane.b32.xlu0 %v3863, 1
    %v3869 = vpop.permute.xlu0 %3868
    %3870 = vrot.lane.b32.xlu0 %v3864, 1
    %v3871 = vpop.permute.xlu0 %3870
    %3872 = vrot.lane.b32.xlu0 %v3865, 1
    %v3873 = vpop.permute.xlu0 %3872
    %v3874 = vsel %vm220, %v3871, %v3873
    %v3875 = vsel %vm220, %v3869, %v3871
    %v3876 = vsel %vm220, %v3867, %v3869
    %v3877 = vsel %vm220, %v3873, %v3867
    %v3878 = vsel %vm1143, %v3877, 0.0
    %v3879 = vsel %vm1144, %v3876, 0.0
    %v3880 = vsel %vm1145, %v3875, 0.0
    %v3881 = vsel %vm1146, %v3874, 0.0
    %3882 = vst [vmem:[#allocation2] sm:$0xff] %v3878
    %3883 = vst [vmem:[#allocation2 + $0x8] sm:$0xff] %v3879
    %3884 = vst [vmem:[#allocation2 + $0x10] sm:$0xff] %v3880
    %3885 = vst [vmem:[#allocation2 + $0x18] sm:$0xff] %v3881
    %3886 = vst [vmem:[#allocation2 + $0x20] sm:$0xff] %v3862
    %3887 = vst [vmem:[#allocation2 + $0x28] sm:$0xff] %v3863
    %3888 = vst [vmem:[#allocation2 + $0x30] sm:$0xff] %v3864
    %3889 = vst [vmem:[#allocation2 + $0x38] sm:$0xff] %v3865
    %3890 = vrot.lane.b32.xlu0 %v3862, 127
    %v3891 = vpop.permute.xlu0 %3890
    %3892 = vrot.lane.b32.xlu0 %v3863, 127
    %v3893 = vpop.permute.xlu0 %3892
    %3894 = vrot.lane.b32.xlu0 %v3864, 127
    %v3895 = vpop.permute.xlu0 %3894
    %3896 = vrot.lane.b32.xlu0 %v3865, 127
    %v3897 = vpop.permute.xlu0 %3896
    %v3898 = vsel %vm270, %v3895, %v3897
    %v3899 = vsel %vm270, %v3893, %v3895
    %v3900 = vsel %vm270, %v3891, %v3893
    %v3901 = vsel %vm270, %v3897, %v3891
    %v3902 = vsel %vm1247, %v3900, 0.0
    %v3903 = vsel %vm1248, %v3899, 0.0
    %v3904 = vsel %vm1249, %v3898, 0.0
    %v3905 = vsel %vm1250, %v3901, 0.0
    %3906 = vst [vmem:[#allocation2 + $0x40] sm:$0xff] %v3902
    %3907 = vst [vmem:[#allocation2 + $0x48] sm:$0xff] %v3903
    %3908 = vst [vmem:[#allocation2 + $0x50] sm:$0xff] %v3904
    %3909 = vst [vmem:[#allocation2 + $0x58] sm:$0xff] %v3905
    %v3910 = vld [vmem:[%s9] sm:$0x1]
    %v3911 = vld [vmem:[#allocation2] sm:$0xff]
    %v3912 = vld [vmem:[#allocation2 + $0x8] sm:$0xff]
    %v3913 = vld [vmem:[#allocation2 + $0x10] sm:$0xff]
    %v3914 = vld [vmem:[#allocation2 + $0x18] sm:$0xff]
    %v3915 = vld [vmem:[#allocation2 + $0x20] sm:$0xff]
    %v3916 = vld [vmem:[#allocation2 + $0x28] sm:$0xff]
    %v3917 = vld [vmem:[#allocation2 + $0x30] sm:$0xff]
    %v3918 = vld [vmem:[#allocation2 + $0x38] sm:$0xff]
    %v3919 = vld [vmem:[#allocation2 + $0x40] sm:$0xff]
    %v3920 = vld [vmem:[#allocation2 + $0x48] sm:$0xff]
    %v3921 = vld [vmem:[#allocation2 + $0x50] sm:$0xff]
    %v3922 = vld [vmem:[#allocation2 + $0x58] sm:$0xff]
    %v3923 = vld [vmem:[#allocation4] sm:$0x1]
    %3925 = vset.pattern.permute.xlu0 0
    %3926 = vperm.xlu0 %3925, %v3923
    %v3927 = vpop.permute.xlu0 %3926
    %v3929 = vperm.slane %v3927, 0
    %vm3930 = vcmask 195584
    %v3932 = vsel %vm3930, %v3910, 0
    %3934 = vmatpush.msra.mxu0 0.0
    %3935 = vmatpush.msra.mxu0 0.0
    %3936 = vmatpush.msra.mxu0 0.0
    %3937 = vmatpush.msra.mxu0 0.0
    %3938 = vmatpush.msra.mxu0 0.0
    %3939 = vmatpush.msra.mxu0 0.0
    %3940 = vmatpush.msra.mxu0 0.0
    %3941 = vmatpush.msra.mxu0 0.0
    %3942 = vmatpush.msra.mxu0 0.0
    %3943 = vmatpush.msra.mxu0 0.0
    %3944 = vmatpush.msra.mxu0 0.0
    %3945 = vmatpush.msra.mxu0 0.0
    %3946 = vmatpush.msra.mxu0 0.0
    %3947 = vmatpush.msra.mxu0 %v3919
    %3948 = vmatpush.msra.mxu0 %v3915
    %3949 = vmatpush.msra.mxu0 %v3911
    %3950 = vmatmul.f32.gmra.mxu0 %v3932
    %v3951 = vpop.f32.mrf.mxu0
    %v3952 = vadd.f32 %v3929, %v3951
    %3953 = vdwg.mxu0
    %3954 = vmatpush.msra.mxu0 0.0
    %3955 = vmatpush.msra.mxu0 0.0
    %3956 = vmatpush.msra.mxu0 0.0
    %3957 = vmatpush.msra.mxu0 0.0
    %3958 = vmatpush.msra.mxu0 0.0
    %3959 = vmatpush.msra.mxu0 0.0
    %3960 = vmatpush.msra.mxu0 0.0
    %3961 = vmatpush.msra.mxu0 0.0
    %3962 = vmatpush.msra.mxu0 0.0
    %3963 = vmatpush.msra.mxu0 0.0
    %3964 = vmatpush.msra.mxu0 0.0
    %3965 = vmatpush.msra.mxu0 0.0
    %3966 = vmatpush.msra.mxu0 0.0
    %3967 = vmatpush.msra.mxu0 %v3920
    %3968 = vmatpush.msra.mxu0 %v3916
    %3969 = vmatpush.msra.mxu0 %v3912
    %3970 = vmatmul.f32.gmra.mxu0 %v3932
    %v3971 = vpop.f32.mrf.mxu0
    %v3972 = vadd.f32 %v3929, %v3971
    %3973 = vdwg.mxu0
    %3974 = vmatpush.msra.mxu0 0.0
    %3975 = vmatpush.msra.mxu0 0.0
    %3976 = vmatpush.msra.mxu0 0.0
    %3977 = vmatpush.msra.mxu0 0.0
    %3978 = vmatpush.msra.mxu0 0.0
    %3979 = vmatpush.msra.mxu0 0.0
    %3980 = vmatpush.msra.mxu0 0.0
    %3981 = vmatpush.msra.mxu0 0.0
    %3982 = vmatpush.msra.mxu0 0.0
    %3983 = vmatpush.msra.mxu0 0.0
    %3984 = vmatpush.msra.mxu0 0.0
    %3985 = vmatpush.msra.mxu0 0.0
    %3986 = vmatpush.msra.mxu0 0.0
    %3987 = vmatpush.msra.mxu0 %v3921
    %3988 = vmatpush.msra.mxu0 %v3917
    %3989 = vmatpush.msra.mxu0 %v3913
    %3990 = vmatmul.f32.gmra.mxu0 %v3932
    %v3991 = vpop.f32.mrf.mxu0
    %v3992 = vadd.f32 %v3929, %v3991
    %3993 = vdwg.mxu0
    %3994 = vmatpush.msra.mxu0 0.0
    %3995 = vmatpush.msra.mxu0 0.0
    %3996 = vmatpush.msra.mxu0 0.0
    %3997 = vmatpush.msra.mxu0 0.0
    %3998 = vmatpush.msra.mxu0 0.0
    %3999 = vmatpush.msra.mxu0 0.0
    %4000 = vmatpush.msra.mxu0 0.0
    %4001 = vmatpush.msra.mxu0 0.0
    %4002 = vmatpush.msra.mxu0 0.0
    %4003 = vmatpush.msra.mxu0 0.0
    %4004 = vmatpush.msra.mxu0 0.0
    %4005 = vmatpush.msra.mxu0 0.0
    %4006 = vmatpush.msra.mxu0 0.0
    %4007 = vmatpush.msra.mxu0 %v3922
    %4008 = vmatpush.msra.mxu0 %v3918
    %4009 = vmatpush.msra.mxu0 %v3914
    %4010 = vmatmul.f32.gmra.mxu0 %v3932
    %v4011 = vpop.f32.mrf.mxu0
    %v4012 = vadd.f32 %v3929, %v4011
    %4013 = vdwg.mxu0
    %v4014 = vtanh.pop %v3952
    %v4015 = vtanh.pop %v3972
    %v4016 = vtanh.pop %v3992
    %v4017 = vtanh.pop %v4012
    %v4018 = vld [vmem:[%s11] sm:$0xff]
    %v4019 = vld [vmem:[%s11 + $0x8] sm:$0xff]
    %v4020 = vld [vmem:[%s11 + $0x10] sm:$0xff]
    %v4021 = vld [vmem:[%s11 + $0x18] sm:$0xff]
    %v4022 = vld [vmem:[%s11 + $0x20] sm:$0xff]
    %v4023 = vld [vmem:[%s11 + $0x28] sm:$0xff]
    %v4024 = vld [vmem:[%s11 + $0x30] sm:$0xff]
    %v4025 = vld [vmem:[%s11 + $0x38] sm:$0xff]
    %v4026 = vld [vmem:[%s11 + $0x40] sm:$0xff]
    %v4027 = vld [vmem:[%s11 + $0x48] sm:$0xff]
    %v4028 = vld [vmem:[%s11 + $0x50] sm:$0xff]
    %v4029 = vld [vmem:[%s11 + $0x58] sm:$0xff]
    %v4030 = vld [vmem:[%s11 + $0x60] sm:$0xff]
    %v4031 = vld [vmem:[%s11 + $0x68] sm:$0xff]
    %v4032 = vld [vmem:[%s11 + $0x70] sm:$0xff]
    %v4033 = vld [vmem:[%s11 + $0x78] sm:$0xff]
    %v4034 = vld [vmem:[%s11 + $0x80] sm:$0xff]
    %v4035 = vld [vmem:[%s11 + $0x88] sm:$0xff]
    %v4036 = vld [vmem:[%s11 + $0x90] sm:$0xff]
    %v4037 = vld [vmem:[%s11 + $0x98] sm:$0xff]
    %v4038 = vld [vmem:[%s11 + $0xa0] sm:$0xff]
    %v4039 = vld [vmem:[%s11 + $0xa8] sm:$0xff]
    %v4040 = vld [vmem:[%s11 + $0xb0] sm:$0xff]
    %v4041 = vld [vmem:[%s11 + $0xb8] sm:$0xff]
    %v4042 = vld [vmem:[%s11 + $0xc0] sm:$0xff]
    %v4043 = vld [vmem:[%s11 + $0xc8] sm:$0xff]
    %v4044 = vld [vmem:[%s11 + $0xd0] sm:$0xff]
    %v4045 = vld [vmem:[%s11 + $0xd8] sm:$0xff]
    %v4046 = vld [vmem:[%s11 + $0xe0] sm:$0xff]
    %v4047 = vld [vmem:[%s11 + $0xe8] sm:$0xff]
    %v4048 = vld [vmem:[%s11 + $0xf0] sm:$0xff]
    %v4049 = vld [vmem:[%s11 + $0xf8] sm:$0xff]
    %v4050 = vld [vmem:[%s11 + $0x100] sm:$0xff]
    %v4051 = vld [vmem:[%s11 + $0x108] sm:$0xff]
    %v4052 = vld [vmem:[%s11 + $0x110] sm:$0xff]
    %v4053 = vld [vmem:[%s11 + $0x118] sm:$0xff]
    %v4054 = vld [vmem:[%s11 + $0x120] sm:$0xff]
    %v4055 = vld [vmem:[%s11 + $0x128] sm:$0xff]
    %v4056 = vld [vmem:[%s11 + $0x130] sm:$0xff]
    %v4057 = vld [vmem:[%s11 + $0x138] sm:$0xff]
    %v4058 = vld [vmem:[%s11 + $0x140] sm:$0xff]
    %v4059 = vld [vmem:[%s11 + $0x148] sm:$0xff]
    %v4060 = vld [vmem:[%s11 + $0x150] sm:$0xff]
    %v4061 = vld [vmem:[%s11 + $0x158] sm:$0xff]
    %v4062 = vld [vmem:[%s11 + $0x160] sm:$0xff]
    %v4063 = vld [vmem:[%s11 + $0x168] sm:$0xff]
    %v4064 = vld [vmem:[%s11 + $0x170] sm:$0xff]
    %v4065 = vld [vmem:[%s11 + $0x178] sm:$0xff]
    %v4066 = vld [vmem:[%s11 + $0x180] sm:$0xff]
    %v4067 = vld [vmem:[%s11 + $0x188] sm:$0xff]
    %v4068 = vld [vmem:[%s11 + $0x190] sm:$0xff]
    %v4069 = vld [vmem:[%s11 + $0x198] sm:$0xff]
    %v4070 = vld [vmem:[%s11 + $0x1a0] sm:$0xff]
    %v4071 = vld [vmem:[%s11 + $0x1a8] sm:$0xff]
    %v4072 = vld [vmem:[%s11 + $0x1b0] sm:$0xff]
    %v4073 = vld [vmem:[%s11 + $0x1b8] sm:$0xff]
    %v4074 = vld [vmem:[%s11 + $0x1c0] sm:$0xff]
    %v4075 = vld [vmem:[%s11 + $0x1c8] sm:$0xff]
    %v4076 = vld [vmem:[%s11 + $0x1d0] sm:$0xff]
    %v4077 = vld [vmem:[%s11 + $0x1d8] sm:$0xff]
    %v4078 = vld [vmem:[%s11 + $0x1e0] sm:$0xff]
    %v4079 = vld [vmem:[%s11 + $0x1e8] sm:$0xff]
    %v4080 = vld [vmem:[%s11 + $0x1f0] sm:$0xff]
    %v4081 = vld [vmem:[%s11 + $0x1f8] sm:$0xff]
    %v4082 = vld [vmem:[#allocation5] sm:$0x1]
    %4084 = vset.pattern.permute.xlu0 0
    %4085 = vperm.xlu0 %4084, %v4082
    %v4086 = vpop.permute.xlu0 %4085
    %v4088 = vperm.slane %v4086, 0
    %4089 = vmatpush.msra.mxu0 %v4033
    %4090 = vmatpush.msra.mxu0 %v4032
    %4091 = vmatpush.msra.mxu0 %v4031
    %4092 = vmatpush.msra.mxu0 %v4030
    %4093 = vmatpush.msra.mxu0 %v4029
    %4094 = vmatpush.msra.mxu0 %v4028
    %4095 = vmatpush.msra.mxu0 %v4027
    %4096 = vmatpush.msra.mxu0 %v4026
    %4097 = vmatpush.msra.mxu0 %v4025
    %4098 = vmatpush.msra.mxu0 %v4024
    %4099 = vmatpush.msra.mxu0 %v4023
    %4100 = vmatpush.msra.mxu0 %v4022
    %4101 = vmatpush.msra.mxu0 %v4021
    %4102 = vmatpush.msra.mxu0 %v4020
    %4103 = vmatpush.msra.mxu0 %v4019
    %4104 = vmatpush.msra.mxu0 %v4018
    %4105 = vmatmul.f32.gmra.mxu0 %v4014
    %v4106 = vpop.f32.mrf.mxu0
    %v4107 = vadd.f32 %v4088, %v4106
    %4108 = vdwg.mxu0
    %4109 = vmatpush.msra.mxu0 %v4049
    %4110 = vmatpush.msra.mxu0 %v4048
    %4111 = vmatpush.msra.mxu0 %v4047
    %4112 = vmatpush.msra.mxu0 %v4046
    %4113 = vmatpush.msra.mxu0 %v4045
    %4114 = vmatpush.msra.mxu0 %v4044
    %4115 = vmatpush.msra.mxu0 %v4043
    %4116 = vmatpush.msra.mxu0 %v4042
    %4117 = vmatpush.msra.mxu0 %v4041
    %4118 = vmatpush.msra.mxu0 %v4040
    %4119 = vmatpush.msra.mxu0 %v4039
    %4120 = vmatpush.msra.mxu0 %v4038
    %4121 = vmatpush.msra.mxu0 %v4037
    %4122 = vmatpush.msra.mxu0 %v4036
    %4123 = vmatpush.msra.mxu0 %v4035
    %4124 = vmatpush.msra.mxu0 %v4034
    %4125 = vmatmul.f32.gmra.mxu0 %v4015
    %v4126 = vpop.f32.mrf.mxu0
    %v4127 = vadd.f32 %v4107, %v4126
    %4128 = vdwg.mxu0
    %4129 = vmatpush.msra.mxu0 %v4065
    %4130 = vmatpush.msra.mxu0 %v4064
    %4131 = vmatpush.msra.mxu0 %v4063
    %4132 = vmatpush.msra.mxu0 %v4062
    %4133 = vmatpush.msra.mxu0 %v4061
    %4134 = vmatpush.msra.mxu0 %v4060
    %4135 = vmatpush.msra.mxu0 %v4059
    %4136 = vmatpush.msra.mxu0 %v4058
    %4137 = vmatpush.msra.mxu0 %v4057
    %4138 = vmatpush.msra.mxu0 %v4056
    %4139 = vmatpush.msra.mxu0 %v4055
    %4140 = vmatpush.msra.mxu0 %v4054
    %4141 = vmatpush.msra.mxu0 %v4053
    %4142 = vmatpush.msra.mxu0 %v4052
    %4143 = vmatpush.msra.mxu0 %v4051
    %4144 = vmatpush.msra.mxu0 %v4050
    %4145 = vmatmul.f32.gmra.mxu0 %v4016
    %v4146 = vpop.f32.mrf.mxu0
    %v4147 = vadd.f32 %v4127, %v4146
    %4148 = vdwg.mxu0
    %4149 = vmatpush.msra.mxu0 %v4081
    %4150 = vmatpush.msra.mxu0 %v4080
    %4151 = vmatpush.msra.mxu0 %v4079
    %4152 = vmatpush.msra.mxu0 %v4078
    %4153 = vmatpush.msra.mxu0 %v4077
    %4154 = vmatpush.msra.mxu0 %v4076
    %4155 = vmatpush.msra.mxu0 %v4075
    %4156 = vmatpush.msra.mxu0 %v4074
    %4157 = vmatpush.msra.mxu0 %v4073
    %4158 = vmatpush.msra.mxu0 %v4072
    %4159 = vmatpush.msra.mxu0 %v4071
    %4160 = vmatpush.msra.mxu0 %v4070
    %4161 = vmatpush.msra.mxu0 %v4069
    %4162 = vmatpush.msra.mxu0 %v4068
    %4163 = vmatpush.msra.mxu0 %v4067
    %4164 = vmatpush.msra.mxu0 %v4066
    %4165 = vmatmul.f32.gmra.mxu0 %v4017
    %v4166 = vpop.f32.mrf.mxu0
    %v4167 = vadd.f32 %v4147, %v4166
    %4168 = vdwg.mxu0
    %vm4169 = vcmask 8192
    %4170 = vst.msk [vmem:[#allocation6] sm:$0x1] %vm4169, %v4167
    // Predicated region
    $region54: #{model_forward.1} parent=1 // pred_check
      _
    $region55: #{model_forward.1} parent=1 // pred_check_branch
      %4172 = sbr.rel (0) target = $region57
    $region56: #{model_forward.1} parent=1 // pred_region
      %4174 = vsyncadd [#allocation7], 0
      %s4176 = sshll.u32 [#allocation6], 4
      %s4177 = int_to_ptr.vmem [resolvable:$true] %s4176
      %s4178 = sshll.u32 %s13, 4
      %s4179 = int_to_ptr.hbm [resolvable:$true] %s4178
      %4181 = dma.vmem_to_hbm [thread:$0]  %s4177, 16, %s4179, [#allocation7]
    $region57: #{model_forward.1} parent=1 // pred_fallthru
      _
    // Predicated region
    $region58: #{model_forward.1} parent=1 // pred_check
      _
    $region59: #{model_forward.1} parent=1 // pred_check_branch
      %4183 = sbr.rel (0) target = $region61
    $region60: #{model_forward.1} parent=1 // pred_region
      %4185 = dma.done [#allocation7], 16
    $region61: #{model_forward.1} parent=1 // pred_fallthru
      _
    %4186 = vsyncpa [#allocation7], 1

</llo_original>
